<compile_context>
chip_gen: v6e
topology: v6e:2x2x1
jax: 0.10.0
libtpu: 0.0.40
codegen_flags: <defaults>
</compile_context>

<pallas_src>
import jax
import jax.numpy as jnp
from jax import lax
from jax.experimental import pallas as pl
from jax.experimental.pallas import tpu as pltpu


# ---------------------------------------------------------------------------
# Model config (PPORGBRLModel defaults, small obs for the test)
# ---------------------------------------------------------------------------
CONV_CHANNELS = [64, 128, 256]     # encoder_hidden_size_list
CONV_KERNELS = [8, 4, 3]
CONV_STRIDES = [4, 2, 1]
EMBED = 512                        # encoder_embedding_size / head hidden size
ACT_DIM = 2                        # action_shape
CIN_PAD = 4                        # pad RGB 3->4 so conv1 GEMM K = 8*8*4 = 256
OUT_LANES = 128                    # lane-dense fused output: [mu | value | zero pad]
COMPUTE_DTYPE = jnp.bfloat16       # MXU operand dtype (accumulation stays f32)


def _conv_out_hw(img_hw):
    """Spatial sizes after each conv layer."""
    h, w = img_hw
    out = []
    for k, s in zip(CONV_KERNELS, CONV_STRIDES):
        h = (h - k) // s + 1
        w = (w - k) // s + 1
        out.append((h, w))
    return out


def _full_spec(shape):
    nd = len(shape)
    return pl.BlockSpec(tuple(shape), lambda i: (0,) * nd)


def _x_parity_order(ow, group):
    """conv1 output-x ordering grouped by (x % group): [0, g, 2g, ..., 1, 1+g, ...].
    With this ordering, conv2's stride-`group` column selection becomes a contiguous
    run of scratch rows."""
    order = []
    for r in range(group):
        order.extend(range(r, ow, group))
    return order


# ---------------------------------------------------------------------------
# Host-side layout plumbing (XLA ops): im2col for conv1, parity-grouped x.
# ---------------------------------------------------------------------------
def im2col_conv1(x_nhwc, kh, kw, stride, x_order):
    """Batch-major im2col.  Rows ordered (b, oy, x_order[p]); cols ordered (ki, kj, c)."""
    B, H, W, C = x_nhwc.shape
    OH = (H - kh) // stride + 1
    OW = (W - kw) // stride + 1
    cols = []
    for i in range(kh):
        for j in range(kw):
            sl = lax.slice(
                x_nhwc, (0, i, j, 0),
                (B, i + (OH - 1) * stride + 1, j + (OW - 1) * stride + 1, C),
                (1, stride, stride, 1))                       # (B, OH, OW, C)
            cols.append(sl)
    p = jnp.stack(cols, axis=3)                               # (B, OH, OW, KK, C)
    p = jnp.take(p, jnp.asarray(x_order, dtype=jnp.int32), axis=2)
    return p.reshape(B * OH * OW, kh * kw * C)


# ---------------------------------------------------------------------------
# The single fused kernel
# ---------------------------------------------------------------------------
def _make_fused_kernel(B, hw_sizes, x_order):
    (OH1, OW1), (OH2, OW2), (OH3, OW3) = hw_sizes
    C1, C2, C3 = CONV_CHANNELS
    K2, S2 = CONV_KERNELS[1], CONV_STRIDES[1]
    K3, S3 = CONV_KERNELS[2], CONV_STRIDES[2]
    # Specialized for obs sizes where conv3 reduces the map to 1x1 (true for 40x40).
    assert OH3 == 1 and OW3 == 1 and S3 == 1 and K3 == OH2 and K3 == OW2, \
        "TODO(synk): generalize conv3 / flatten-order fold for larger obs (e.g. 320x180)"
    xpos = {x: p for p, x in enumerate(x_order)}
    n2 = OH2 * OW2                       # conv2 output positions per batch element

    def kernel(p1_ref, speed_ref, w1_ref, b1_ref, w2_ref, b2_ref, w3_ref, b3_ref,
               midw_ref, mids_ref, midb_ref, hw1_ref, hb1_ref, outw_ref, outb_ref,
               out_ref, x1_s):
        f32 = jnp.float32
        cdt = p1_ref.dtype

        # --- conv1: one im2col GEMM, bias+ReLU fused, result parked in VMEM scratch (f32).
        a1 = jnp.dot(p1_ref[...], w1_ref[...], preferred_element_type=f32)
        x1_s[...] = jnp.maximum(a1 + b1_ref[...], 0.0)        # rows (b, y, parity-grouped x)

        # --- conv2 (offset-major): 16 accumulating (B*n2, C1)x(C1, C2) matmuls.
        # Each operand is built from B*OH2 contiguous scratch slices (no per-position matmuls).
        b2 = b2_ref[...]
        acc2 = jnp.zeros((B * n2, C2), f32)
        for ki in range(K2):
            for kj in range(K2):
                pieces = []
                for b in range(B):
                    for a in range(OH2):
                        r0 = (b * OH1 + a * S2 + ki) * OW1 + xpos[kj]
                        pieces.append(x1_s[pl.ds(r0, OW2), :])          # (OW2, C1)
                xoff = jnp.concatenate(pieces, axis=0).astype(cdt)      # (B*n2, C1), rows (b,y2,x2)
                acc2 = acc2 + jnp.dot(xoff, w2_ref[ki * K2 + kj],
                                      preferred_element_type=f32)
        c2 = jnp.maximum(acc2 + b2, 0.0)                                # (B*n2, C2)

        # --- conv3 (1x1 output): flatten each batch's n2 rows along lanes -> one K=n2*C2 GEMM.
        rows = []
        for b in range(B):
            rows.append(jnp.concatenate(
                [c2[b * n2 + p: b * n2 + p + 1, :] for p in range(n2)], axis=1))
        flat3 = jnp.concatenate(rows, axis=0)                           # (B, n2*C2)
        a3 = jnp.dot(flat3.astype(cdt), w3_ref[...], preferred_element_type=f32)
        a3 = jnp.maximum(a3 + b3_ref[...], 0.0)                         # (B, C3) == NCHW flatten

        # --- encoder mid linear: aligned K=C3 GEMM + rank-1 speed update (VPU) + bias.
        emb = jnp.dot(a3.astype(cdt), midw_ref[...], preferred_element_type=f32)
        emb = emb + speed_ref[...] * mids_ref[...] + midb_ref[...]      # (B, EMBED)

        # --- heads: fused actor|critic hidden (N=2*EMBED), then block-diagonal lane-padded
        # projection -> single lane-dense (B,128) store: cols [0:A)=mu, col A=value.
        h = jnp.dot(emb.astype(cdt), hw1_ref[...], preferred_element_type=f32)
        h = jnp.maximum(h + hb1_ref[...], 0.0)
        out = jnp.dot(h.astype(cdt), outw_ref[...], preferred_element_type=f32)
        out_ref[...] = out + outb_ref[...]

    return kernel


def fused_forward(patches1, speed, kp, B, hw_sizes, x_order):
    kernel = _make_fused_kernel(B, hw_sizes, x_order)
    OH1, OW1 = hw_sizes[0]
    args = [patches1, speed,
            kp["w1"], kp["b1"], kp["w2"], kp["b2"], kp["w3"], kp["b3"],
            kp["midw"], kp["mids"], kp["midb"],
            kp["hw1"], kp["hb1"], kp["outw"], kp["outb"]]
    # TODO(synk): add a "parallel" batch-tile grid axis for v7x (2 TCs) at realistic batches.
    return pl.pallas_call(
        kernel,
        out_shape=jax.ShapeDtypeStruct((B, OUT_LANES), jnp.float32),
        grid=(1,),
        in_specs=[_full_spec(a.shape) for a in args],
        out_specs=_full_spec((B, OUT_LANES)),
        scratch_shapes=[pltpu.VMEM((B * OH1 * OW1, CONV_CHANNELS[0]), jnp.float32)],
        compiler_params=pltpu.CompilerParams(dimension_semantics=("arbitrary",)),
    )(*args)


# ---------------------------------------------------------------------------
# One-time weight repack (torch layouts -> kernel layouts, bf16 MXU operands)
# ---------------------------------------------------------------------------
def pack_params(p, img_hw):
    dt = COMPUTE_DTYPE
    f32 = jnp.float32
    kp = {}

    # conv1 -> im2col GEMM weight (KH*KW*CIN_PAD, 64), Cin padded 3->4.
    w1 = p["conv_w"][0]
    co1, ci1, kh1, kw1 = w1.shape
    if ci1 < CIN_PAD:
        w1 = jnp.pad(w1, ((0, 0), (0, CIN_PAD - ci1), (0, 0), (0, 0)))
    kp["w1"] = jnp.transpose(w1, (2, 3, 1, 0)).reshape(kh1 * kw1 * CIN_PAD, co1).astype(dt)
    kp["b1"] = p["conv_b"][0].reshape(1, co1).astype(f32)

    # conv2 -> per-kernel-offset (cin, cout) weight stack (16, 64, 128).
    w2 = p["conv_w"][1]
    co2, ci2, kh2, kw2 = w2.shape
    kp["w2"] = jnp.transpose(w2, (2, 3, 1, 0)).reshape(kh2 * kw2, ci2, co2).astype(dt)
    kp["b2"] = p["conv_b"][1].reshape(1, co2).astype(f32)

    # conv3 -> single im2col GEMM weight (kh*kw*cin, cout) = (1152, 256).
    w3 = p["conv_w"][2]
    co3, ci3, kh3, kw3 = w3.shape
    kp["w3"] = jnp.transpose(w3, (2, 3, 1, 0)).reshape(kh3 * kw3 * ci3, co3).astype(dt)
    kp["b3"] = p["conv_b"][2].reshape(1, co3).astype(f32)

    # mid linear: split out the speed row so the GEMM K stays at the aligned flat size.
    oh3, ow3 = _conv_out_hw(img_hw)[2]
    flat_dim = co3 * oh3 * ow3            # == co3 at this obs (1x1 spatial -> no reorder fold)
    kp["midw"] = p["mid_w"][:flat_dim].astype(dt)
    kp["mids"] = p["mid_w"][flat_dim:flat_dim + 1].astype(f32)          # speed row (1, EMBED)
    kp["midb"] = p["mid_b"].reshape(1, -1).astype(f32)

    # heads: fused hidden matmul + block-diagonal lane-padded output matmul.
    kp["hw1"] = jnp.concatenate([p["actor_w1"], p["critic_w1"]], axis=1).astype(dt)
    kp["hb1"] = jnp.concatenate([p["actor_b1"], p["critic_b1"]]).reshape(1, -1).astype(f32)
    outw = jnp.zeros((2 * EMBED, OUT_LANES), f32)
    outw = outw.at[:EMBED, :ACT_DIM].set(p["mu_w"])
    outw = outw.at[EMBED:, ACT_DIM:ACT_DIM + 1].set(p["value_w"])
    kp["outw"] = outw.astype(dt)
    outb = jnp.zeros((1, OUT_LANES), f32)
    outb = outb.at[0, :ACT_DIM].set(p["mu_b"]).at[0, ACT_DIM].set(p["value_b"][0])
    kp["outb"] = outb
    kp["log_sigma"] = p["log_sigma"].reshape(1, ACT_DIM).astype(f32)
    return kp


# ---------------------------------------------------------------------------
# Forward (compute_actor_critic)
# ---------------------------------------------------------------------------
@jax.jit
def compute_actor_critic(kp, image_nchw, speed):
    B, C, H, W = image_nchw.shape
    hw_sizes = _conv_out_hw((H, W))
    x = jnp.transpose(image_nchw, (0, 2, 3, 1)).astype(COMPUTE_DTYPE)   # NCHW -> NHWC
    if C < CIN_PAD:
        x = jnp.pad(x, ((0, 0), (0, 0), (0, 0), (0, CIN_PAD - C)))
    x_order = _x_parity_order(hw_sizes[0][1], CONV_STRIDES[1])
    # TODO(synk): at the full 320x180 obs the host-side im2col carries ~4x read amplification;
    # in that regime move it in-kernel (strided row loads) and tile conv1 over a parallel grid.
    patches1 = im2col_conv1(x, CONV_KERNELS[0], CONV_KERNELS[0], CONV_STRIDES[0], x_order)
    out = fused_forward(patches1, speed.reshape(B, 1).astype(jnp.float32),
                        kp, B, hw_sizes, x_order)
    mu = out[:, :ACT_DIM]
    value = out[:, ACT_DIM]
    # sigma = exp(log_sigma) is input-independent: computed here, not in the kernel.
    sigma = jnp.broadcast_to(jnp.exp(kp["log_sigma"]), (B, ACT_DIM))
    return {"logit": [mu, sigma], "value": value}


# ---------------------------------------------------------------------------
# Parameters (deterministic synthetic init — no checkpoint load)
# ---------------------------------------------------------------------------
def init_params(key, in_ch, img_hw):
    keys = jax.random.split(key, 9)
    p = {"conv_w": [], "conv_b": []}
    c_in = in_ch
    h, w = img_hw
    for li, (c_out, k, s) in enumerate(zip(CONV_CHANNELS, CONV_KERNELS, CONV_STRIDES)):
        scale = (2.0 / (c_in * k * k)) ** 0.5
        p["conv_w"].append(scale * jax.random.normal(keys[li], (c_out, c_in, k, k), jnp.float32))
        p["conv_b"].append(jnp.zeros((c_out,), jnp.float32))
        h = (h - k) // s + 1
        w = (w - k) // s + 1
        c_in = c_out
    flat = c_in * h * w
    p["mid_w"] = (2.0 / (flat + 1)) ** 0.5 * jax.random.normal(keys[3], (flat + 1, EMBED), jnp.float32)
    p["mid_b"] = jnp.zeros((EMBED,), jnp.float32)
    p["actor_w1"] = (2.0 / EMBED) ** 0.5 * jax.random.normal(keys[4], (EMBED, EMBED), jnp.float32)
    p["actor_b1"] = jnp.zeros((EMBED,), jnp.float32)
    p["mu_w"] = (1.0 / EMBED) ** 0.5 * jax.random.normal(keys[5], (EMBED, ACT_DIM), jnp.float32)
    p["mu_b"] = jnp.zeros((ACT_DIM,), jnp.float32)
    p["log_sigma"] = jnp.zeros((1, ACT_DIM), jnp.float32)
    p["critic_w1"] = (2.0 / EMBED) ** 0.5 * jax.random.normal(keys[6], (EMBED, EMBED), jnp.float32)
    p["critic_b1"] = jnp.zeros((EMBED,), jnp.float32)
    p["value_w"] = (1.0 / EMBED) ** 0.5 * jax.random.normal(keys[7], (EMBED, 1), jnp.float32)
    p["value_b"] = jnp.zeros((1,), jnp.float32)
    return p


# ---------------------------------------------------------------------------
# Pure-JAX f32 reference (module semantics, correctness check only)
# ---------------------------------------------------------------------------
def reference_forward(p, image_nchw, speed):
    x = image_nchw
    for w, b, s in zip(p["conv_w"], p["conv_b"], CONV_STRIDES):
        x = lax.conv_general_dilated(x, w, (s, s), "VALID",
                                     dimension_numbers=("NCHW", "OIHW", "NCHW"))
        x = jnp.maximum(x + b.reshape(1, -1, 1, 1), 0.0)
    B = x.shape[0]
    flat = x.reshape(B, -1)
    h = jnp.concatenate([flat, speed.reshape(B, 1)], axis=1)
    emb = h @ p["mid_w"] + p["mid_b"]
    ah = jnp.maximum(emb @ p["actor_w1"] + p["actor_b1"], 0.0)
    mu = ah @ p["mu_w"] + p["mu_b"]
    sigma = jnp.exp(p["log_sigma"] + jnp.zeros_like(mu))
    ch = jnp.maximum(emb @ p["critic_w1"] + p["critic_b1"], 0.0)
    value = (ch @ p["value_w"] + p["value_b"]).squeeze(-1)
    return mu, sigma, value


# ---------------------------------------------------------------------------
if __name__ == "__main__":
    key = jax.random.PRNGKey(0)
    k_img, k_speed, k_param = jax.random.split(key, 3)

    B, C, H, W = 2, 3, 40, 40          # small obs consistent with obs_shape=[3, H, W]
    image = jax.random.normal(k_img, (B, C, H, W), jnp.float32)
    speed = jax.random.uniform(k_speed, (B,), jnp.float32)

    params = init_params(k_param, C, (H, W))
    kparams = pack_params(params, (H, W))        # one-time weight repack / bf16 cast

    out = compute_actor_critic(kparams, image, speed)
    jax.block_until_ready(out)

    mu_ref, sigma_ref, value_ref = reference_forward(params, image, speed)
    mu, sigma = out["logit"]
    assert mu.shape == (B, ACT_DIM) and sigma.shape == (B, ACT_DIM)
    assert out["value"].shape == (B,)
    # Kernel uses bf16 MXU operands with f32 accumulation; compare against the
    # pure-f32 reference with a tolerance sized for bf16 operand rounding.
    tol = dict(atol=5e-2, rtol=5e-2)
    assert jnp.allclose(mu, mu_ref, **tol)
    assert jnp.allclose(sigma, sigma_ref, **tol)
    assert jnp.allclose(out["value"], value_ref, **tol)

    print("KERNEL_OK")
</pallas_src>

<mosaic_0001>
module attributes {stable_mosaic.version = 11 : i64} {
  func.func @kernel(%arg0: i32, %arg1: memref<162x256xbf16, #tpu.memory_space<vmem>>, %arg2: memref<2x1xf32, #tpu.memory_space<vmem>>, %arg3: memref<256x64xbf16, #tpu.memory_space<vmem>>, %arg4: memref<1x64xf32, #tpu.memory_space<vmem>>, %arg5: memref<16x64x128xbf16, #tpu.memory_space<vmem>>, %arg6: memref<1x128xf32, #tpu.memory_space<vmem>>, %arg7: memref<1152x256xbf16, #tpu.memory_space<vmem>>, %arg8: memref<1x256xf32, #tpu.memory_space<vmem>>, %arg9: memref<256x512xbf16, #tpu.memory_space<vmem>>, %arg10: memref<1x512xf32, #tpu.memory_space<vmem>>, %arg11: memref<1x512xf32, #tpu.memory_space<vmem>>, %arg12: memref<512x1024xbf16, #tpu.memory_space<vmem>>, %arg13: memref<1x1024xf32, #tpu.memory_space<vmem>>, %arg14: memref<1024x128xbf16, #tpu.memory_space<vmem>>, %arg15: memref<1x128xf32, #tpu.memory_space<vmem>>, %arg16: memref<2x128xf32, #tpu.memory_space<vmem>>, %arg17: memref<162x64xf32, #tpu.memory_space<vmem>>) attributes {dimension_semantics = [#tpu.dimension_semantics<arbitrary>], iteration_bounds = array<i64: 1>, scalar_prefetch = 0 : i64, scratch_operands = 1 : i64, tpu.core_type = #tpu.core_type<tc>, window_params = [{pipeline_mode = #tpu.pipeline_mode<synchronous>, transform_indices = @transform_0, window_bounds = array<i64: 162, 256>}, {pipeline_mode = #tpu.pipeline_mode<synchronous>, transform_indices = @transform_1, window_bounds = array<i64: 2, 1>}, {pipeline_mode = #tpu.pipeline_mode<synchronous>, transform_indices = @transform_2, window_bounds = array<i64: 256, 64>}, {pipeline_mode = #tpu.pipeline_mode<synchronous>, transform_indices = @transform_3, window_bounds = array<i64: 1, 64>}, {pipeline_mode = #tpu.pipeline_mode<synchronous>, transform_indices = @transform_4, window_bounds = array<i64: 16, 64, 128>}, {pipeline_mode = #tpu.pipeline_mode<synchronous>, transform_indices = @transform_5, window_bounds = array<i64: 1, 128>}, {pipeline_mode = #tpu.pipeline_mode<synchronous>, transform_indices = @transform_6, window_bounds = array<i64: 1152, 256>}, {pipeline_mode = #tpu.pipeline_mode<synchronous>, transform_indices = @transform_7, window_bounds = array<i64: 1, 256>}, {pipeline_mode = #tpu.pipeline_mode<synchronous>, transform_indices = @transform_8, window_bounds = array<i64: 256, 512>}, {pipeline_mode = #tpu.pipeline_mode<synchronous>, transform_indices = @transform_9, window_bounds = array<i64: 1, 512>}, {pipeline_mode = #tpu.pipeline_mode<synchronous>, transform_indices = @transform_10, window_bounds = array<i64: 1, 512>}, {pipeline_mode = #tpu.pipeline_mode<synchronous>, transform_indices = @transform_11, window_bounds = array<i64: 512, 1024>}, {pipeline_mode = #tpu.pipeline_mode<synchronous>, transform_indices = @transform_12, window_bounds = array<i64: 1, 1024>}, {pipeline_mode = #tpu.pipeline_mode<synchronous>, transform_indices = @transform_13, window_bounds = array<i64: 1024, 128>}, {pipeline_mode = #tpu.pipeline_mode<synchronous>, transform_indices = @transform_14, window_bounds = array<i64: 1, 128>}, {pipeline_mode = #tpu.pipeline_mode<synchronous>, transform_indices = @transform_15, window_bounds = array<i64: 2, 128>}]} {
    %c0 = arith.constant 0 : index
    %c0_0 = arith.constant 0 : index
    %0 = vector.load %arg1[%c0, %c0_0] : memref<162x256xbf16, #tpu.memory_space<vmem>>, vector<162x256xbf16>
    %c0_1 = arith.constant 0 : index
    %c0_2 = arith.constant 0 : index
    %1 = vector.load %arg3[%c0_1, %c0_2] : memref<256x64xbf16, #tpu.memory_space<vmem>>, vector<256x64xbf16>
    %cst = arith.constant dense<0.000000e+00> : vector<162x64xf32>
    %2 = tpu.matmul %0, %1, %cst {dimension_numbers = #tpu.dot_dimension_numbers<[1], [0], [0], [1], [0, 0, 1, 1], [], []>} : vector<162x256xbf16>, vector<256x64xbf16>, vector<162x64xf32> -> vector<162x64xf32>
    %c0_3 = arith.constant 0 : index
    %c0_4 = arith.constant 0 : index
    %3 = vector.load %arg4[%c0_3, %c0_4] : memref<1x64xf32, #tpu.memory_space<vmem>>, vector<1x64xf32>
    %4 = vector.broadcast %3 : vector<1x64xf32> to vector<162x64xf32>
    %5 = arith.addf %2, %4 : vector<162x64xf32>
    %cst_5 = arith.constant 0.000000e+00 : f32
    %6 = vector.broadcast %cst_5 : f32 to vector<162x64xf32>
    %7 = arith.maximumf %5, %6 : vector<162x64xf32>
    %c0_6 = arith.constant 0 : index
    %c0_7 = arith.constant 0 : index
    %8 = vector.load %arg17[%c0_6, %c0_7] : memref<162x64xf32, #tpu.memory_space<vmem>>, vector<162x64xf32>
    tpu.vector_store %arg17[%c0_6, %c0_7], %7 {strides = array<i32>} : memref<162x64xf32, #tpu.memory_space<vmem>>, vector<162x64xf32>,
    %c0_8 = arith.constant 0 : index
    %c0_9 = arith.constant 0 : index
    %9 = vector.load %arg6[%c0_8, %c0_9] : memref<1x128xf32, #tpu.memory_space<vmem>>, vector<1x128xf32>
    %cst_10 = arith.constant 0.000000e+00 : f32
    %10 = vector.broadcast %cst_10 : f32 to vector<18x128xf32>
    %c0_11 = arith.constant 0 : index
    %c0_12 = arith.constant 0 : index
    %11 = vector.load %arg17[%c0_11, %c0_12] : memref<162x64xf32, #tpu.memory_space<vmem>>, vector<3x64xf32>
    %c18 = arith.constant 18 : index
    %c0_13 = arith.constant 0 : index
    %12 = vector.load %arg17[%c18, %c0_13] : memref<162x64xf32, #tpu.memory_space<vmem>>, vector<3x64xf32>
    %c36 = arith.constant 36 : index
    %c0_14 = arith.constant 0 : index
    %13 = vector.load %arg17[%c36, %c0_14] : memref<162x64xf32, #tpu.memory_space<vmem>>, vector<3x64xf32>
    %c81 = arith.constant 81 : index
    %c0_15 = arith.constant 0 : index
    %14 = vector.load %arg17[%c81, %c0_15] : memref<162x64xf32, #tpu.memory_space<vmem>>, vector<3x64xf32>
    %c99 = arith.constant 99 : index
    %c0_16 = arith.constant 0 : index
    %15 = vector.load %arg17[%c99, %c0_16] : memref<162x64xf32, #tpu.memory_space<vmem>>, vector<3x64xf32>
    %c117 = arith.constant 117 : index
    %c0_17 = arith.constant 0 : index
    %16 = vector.load %arg17[%c117, %c0_17] : memref<162x64xf32, #tpu.memory_space<vmem>>, vector<3x64xf32>
    %17 = tpu.concatenate %11, %12, %13, %14, %15, %16 in 0 : vector<3x64xf32>, vector<3x64xf32>, vector<3x64xf32>, vector<3x64xf32>, vector<3x64xf32>, vector<3x64xf32> -> vector<18x64xf32>
    %18 = arith.truncf %17 : vector<18x64xf32> to vector<18x64xbf16>
    %c0_18 = arith.constant 0 : index
    %c0_19 = arith.constant 0 : index
    %c0_20 = arith.constant 0 : index
    %19 = vector.load %arg5[%c0_18, %c0_19, %c0_20] : memref<16x64x128xbf16, #tpu.memory_space<vmem>>, vector<1x64x128xbf16>
    %20 = vector.shape_cast %19 : vector<1x64x128xbf16> to vector<64x128xbf16>
    %cst_21 = arith.constant dense<0.000000e+00> : vector<18x128xf32>
    %21 = tpu.matmul %18, %20, %cst_21 {dimension_numbers = #tpu.dot_dimension_numbers<[1], [0], [0], [1], [0, 0, 1, 1], [], []>} : vector<18x64xbf16>, vector<64x128xbf16>, vector<18x128xf32> -> vector<18x128xf32>
    %22 = arith.addf %10, %21 : vector<18x128xf32>
    %c5 = arith.constant 5 : index
    %c0_22 = arith.constant 0 : index
    %23 = vector.load %arg17[%c5, %c0_22] : memref<162x64xf32, #tpu.memory_space<vmem>>, vector<3x64xf32>
    %c23 = arith.constant 23 : index
    %c0_23 = arith.constant 0 : index
    %24 = vector.load %arg17[%c23, %c0_23] : memref<162x64xf32, #tpu.memory_space<vmem>>, vector<3x64xf32>
    %c41 = arith.constant 41 : index
    %c0_24 = arith.constant 0 : index
    %25 = vector.load %arg17[%c41, %c0_24] : memref<162x64xf32, #tpu.memory_space<vmem>>, vector<3x64xf32>
    %c86 = arith.constant 86 : index
    %c0_25 = arith.constant 0 : index
    %26 = vector.load %arg17[%c86, %c0_25] : memref<162x64xf32, #tpu.memory_space<vmem>>, vector<3x64xf32>
    %c104 = arith.constant 104 : index
    %c0_26 = arith.constant 0 : index
    %27 = vector.load %arg17[%c104, %c0_26] : memref<162x64xf32, #tpu.memory_space<vmem>>, vector<3x64xf32>
    %c122 = arith.constant 122 : index
    %c0_27 = arith.constant 0 : index
    %28 = vector.load %arg17[%c122, %c0_27] : memref<162x64xf32, #tpu.memory_space<vmem>>, vector<3x64xf32>
    %29 = tpu.concatenate %23, %24, %25, %26, %27, %28 in 0 : vector<3x64xf32>, vector<3x64xf32>, vector<3x64xf32>, vector<3x64xf32>, vector<3x64xf32>, vector<3x64xf32> -> vector<18x64xf32>
    %30 = arith.truncf %29 : vector<18x64xf32> to vector<18x64xbf16>
    %c1 = arith.constant 1 : index
    %c0_28 = arith.constant 0 : index
    %c0_29 = arith.constant 0 : index
    %31 = vector.load %arg5[%c1, %c0_28, %c0_29] : memref<16x64x128xbf16, #tpu.memory_space<vmem>>, vector<1x64x128xbf16>
    %32 = vector.shape_cast %31 : vector<1x64x128xbf16> to vector<64x128xbf16>
    %cst_30 = arith.constant dense<0.000000e+00> : vector<18x128xf32>
    %33 = tpu.matmul %30, %32, %cst_30 {dimension_numbers = #tpu.dot_dimension_numbers<[1], [0], [0], [1], [0, 0, 1, 1], [], []>} : vector<18x64xbf16>, vector<64x128xbf16>, vector<18x128xf32> -> vector<18x128xf32>
    %34 = arith.addf %22, %33 : vector<18x128xf32>
    %c1_31 = arith.constant 1 : index
    %c0_32 = arith.constant 0 : index
    %35 = vector.load %arg17[%c1_31, %c0_32] : memref<162x64xf32, #tpu.memory_space<vmem>>, vector<3x64xf32>
    %c19 = arith.constant 19 : index
    %c0_33 = arith.constant 0 : index
    %36 = vector.load %arg17[%c19, %c0_33] : memref<162x64xf32, #tpu.memory_space<vmem>>, vector<3x64xf32>
    %c37 = arith.constant 37 : index
    %c0_34 = arith.constant 0 : index
    %37 = vector.load %arg17[%c37, %c0_34] : memref<162x64xf32, #tpu.memory_space<vmem>>, vector<3x64xf32>
    %c82 = arith.constant 82 : index
    %c0_35 = arith.constant 0 : index
    %38 = vector.load %arg17[%c82, %c0_35] : memref<162x64xf32, #tpu.memory_space<vmem>>, vector<3x64xf32>
    %c100 = arith.constant 100 : index
    %c0_36 = arith.constant 0 : index
    %39 = vector.load %arg17[%c100, %c0_36] : memref<162x64xf32, #tpu.memory_space<vmem>>, vector<3x64xf32>
    %c118 = arith.constant 118 : index
    %c0_37 = arith.constant 0 : index
    %40 = vector.load %arg17[%c118, %c0_37] : memref<162x64xf32, #tpu.memory_space<vmem>>, vector<3x64xf32>
    %41 = tpu.concatenate %35, %36, %37, %38, %39, %40 in 0 : vector<3x64xf32>, vector<3x64xf32>, vector<3x64xf32>, vector<3x64xf32>, vector<3x64xf32>, vector<3x64xf32> -> vector<18x64xf32>
    %42 = arith.truncf %41 : vector<18x64xf32> to vector<18x64xbf16>
    %c2 = arith.constant 2 : index
    %c0_38 = arith.constant 0 : index
    %c0_39 = arith.constant 0 : index
    %43 = vector.load %arg5[%c2, %c0_38, %c0_39] : memref<16x64x128xbf16, #tpu.memory_space<vmem>>, vector<1x64x128xbf16>
    %44 = vector.shape_cast %43 : vector<1x64x128xbf16> to vector<64x128xbf16>
    %cst_40 = arith.constant dense<0.000000e+00> : vector<18x128xf32>
    %45 = tpu.matmul %42, %44, %cst_40 {dimension_numbers = #tpu.dot_dimension_numbers<[1], [0], [0], [1], [0, 0, 1, 1], [], []>} : vector<18x64xbf16>, vector<64x128xbf16>, vector<18x128xf32> -> vector<18x128xf32>
    %46 = arith.addf %34, %45 : vector<18x128xf32>
    %c6 = arith.constant 6 : index
    %c0_41 = arith.constant 0 : index
    %47 = vector.load %arg17[%c6, %c0_41] : memref<162x64xf32, #tpu.memory_space<vmem>>, vector<3x64xf32>
    %c24 = arith.constant 24 : index
    %c0_42 = arith.constant 0 : index
    %48 = vector.load %arg17[%c24, %c0_42] : memref<162x64xf32, #tpu.memory_space<vmem>>, vector<3x64xf32>
    %c42 = arith.constant 42 : index
    %c0_43 = arith.constant 0 : index
    %49 = vector.load %arg17[%c42, %c0_43] : memref<162x64xf32, #tpu.memory_space<vmem>>, vector<3x64xf32>
    %c87 = arith.constant 87 : index
    %c0_44 = arith.constant 0 : index
    %50 = vector.load %arg17[%c87, %c0_44] : memref<162x64xf32, #tpu.memory_space<vmem>>, vector<3x64xf32>
    %c105 = arith.constant 105 : index
    %c0_45 = arith.constant 0 : index
    %51 = vector.load %arg17[%c105, %c0_45] : memref<162x64xf32, #tpu.memory_space<vmem>>, vector<3x64xf32>
    %c123 = arith.constant 123 : index
    %c0_46 = arith.constant 0 : index
    %52 = vector.load %arg17[%c123, %c0_46] : memref<162x64xf32, #tpu.memory_space<vmem>>, vector<3x64xf32>
    %53 = tpu.concatenate %47, %48, %49, %50, %51, %52 in 0 : vector<3x64xf32>, vector<3x64xf32>, vector<3x64xf32>, vector<3x64xf32>, vector<3x64xf32>, vector<3x64xf32> -> vector<18x64xf32>
    %54 = arith.truncf %53 : vector<18x64xf32> to vector<18x64xbf16>
    %c3 = arith.constant 3 : index
    %c0_47 = arith.constant 0 : index
    %c0_48 = arith.constant 0 : index
    %55 = vector.load %arg5[%c3, %c0_47, %c0_48] : memref<16x64x128xbf16, #tpu.memory_space<vmem>>, vector<1x64x128xbf16>
    %56 = vector.shape_cast %55 : vector<1x64x128xbf16> to vector<64x128xbf16>
    %cst_49 = arith.constant dense<0.000000e+00> : vector<18x128xf32>
    %57 = tpu.matmul %54, %56, %cst_49 {dimension_numbers = #tpu.dot_dimension_numbers<[1], [0], [0], [1], [0, 0, 1, 1], [], []>} : vector<18x64xbf16>, vector<64x128xbf16>, vector<18x128xf32> -> vector<18x128xf32>
    %58 = arith.addf %46, %57 : vector<18x128xf32>
    %c9 = arith.constant 9 : index
    %c0_50 = arith.constant 0 : index
    %59 = vector.load %arg17[%c9, %c0_50] : memref<162x64xf32, #tpu.memory_space<vmem>>, vector<3x64xf32>
    %c27 = arith.constant 27 : index
    %c0_51 = arith.constant 0 : index
    %60 = vector.load %arg17[%c27, %c0_51] : memref<162x64xf32, #tpu.memory_space<vmem>>, vector<3x64xf32>
    %c45 = arith.constant 45 : index
    %c0_52 = arith.constant 0 : index
    %61 = vector.load %arg17[%c45, %c0_52] : memref<162x64xf32, #tpu.memory_space<vmem>>, vector<3x64xf32>
    %c90 = arith.constant 90 : index
    %c0_53 = arith.constant 0 : index
    %62 = vector.load %arg17[%c90, %c0_53] : memref<162x64xf32, #tpu.memory_space<vmem>>, vector<3x64xf32>
    %c108 = arith.constant 108 : index
    %c0_54 = arith.constant 0 : index
    %63 = vector.load %arg17[%c108, %c0_54] : memref<162x64xf32, #tpu.memory_space<vmem>>, vector<3x64xf32>
    %c126 = arith.constant 126 : index
    %c0_55 = arith.constant 0 : index
    %64 = vector.load %arg17[%c126, %c0_55] : memref<162x64xf32, #tpu.memory_space<vmem>>, vector<3x64xf32>
    %65 = tpu.concatenate %59, %60, %61, %62, %63, %64 in 0 : vector<3x64xf32>, vector<3x64xf32>, vector<3x64xf32>, vector<3x64xf32>, vector<3x64xf32>, vector<3x64xf32> -> vector<18x64xf32>
    %66 = arith.truncf %65 : vector<18x64xf32> to vector<18x64xbf16>
    %c4 = arith.constant 4 : index
    %c0_56 = arith.constant 0 : index
    %c0_57 = arith.constant 0 : index
    %67 = vector.load %arg5[%c4, %c0_56, %c0_57] : memref<16x64x128xbf16, #tpu.memory_space<vmem>>, vector<1x64x128xbf16>
    %68 = vector.shape_cast %67 : vector<1x64x128xbf16> to vector<64x128xbf16>
    %cst_58 = arith.constant dense<0.000000e+00> : vector<18x128xf32>
    %69 = tpu.matmul %66, %68, %cst_58 {dimension_numbers = #tpu.dot_dimension_numbers<[1], [0], [0], [1], [0, 0, 1, 1], [], []>} : vector<18x64xbf16>, vector<64x128xbf16>, vector<18x128xf32> -> vector<18x128xf32>
    %70 = arith.addf %58, %69 : vector<18x128xf32>
    %c14 = arith.constant 14 : index
    %c0_59 = arith.constant 0 : index
    %71 = vector.load %arg17[%c14, %c0_59] : memref<162x64xf32, #tpu.memory_space<vmem>>, vector<3x64xf32>
    %c32 = arith.constant 32 : index
    %c0_60 = arith.constant 0 : index
    %72 = vector.load %arg17[%c32, %c0_60] : memref<162x64xf32, #tpu.memory_space<vmem>>, vector<3x64xf32>
    %c50 = arith.constant 50 : index
    %c0_61 = arith.constant 0 : index
    %73 = vector.load %arg17[%c50, %c0_61] : memref<162x64xf32, #tpu.memory_space<vmem>>, vector<3x64xf32>
    %c95 = arith.constant 95 : index
    %c0_62 = arith.constant 0 : index
    %74 = vector.load %arg17[%c95, %c0_62] : memref<162x64xf32, #tpu.memory_space<vmem>>, vector<3x64xf32>
    %c113 = arith.constant 113 : index
    %c0_63 = arith.constant 0 : index
    %75 = vector.load %arg17[%c113, %c0_63] : memref<162x64xf32, #tpu.memory_space<vmem>>, vector<3x64xf32>
    %c131 = arith.constant 131 : index
    %c0_64 = arith.constant 0 : index
    %76 = vector.load %arg17[%c131, %c0_64] : memref<162x64xf32, #tpu.memory_space<vmem>>, vector<3x64xf32>
    %77 = tpu.concatenate %71, %72, %73, %74, %75, %76 in 0 : vector<3x64xf32>, vector<3x64xf32>, vector<3x64xf32>, vector<3x64xf32>, vector<3x64xf32>, vector<3x64xf32> -> vector<18x64xf32>
    %78 = arith.truncf %77 : vector<18x64xf32> to vector<18x64xbf16>
    %c5_65 = arith.constant 5 : index
    %c0_66 = arith.constant 0 : index
    %c0_67 = arith.constant 0 : index
    %79 = vector.load %arg5[%c5_65, %c0_66, %c0_67] : memref<16x64x128xbf16, #tpu.memory_space<vmem>>, vector<1x64x128xbf16>
    %80 = vector.shape_cast %79 : vector<1x64x128xbf16> to vector<64x128xbf16>
    %cst_68 = arith.constant dense<0.000000e+00> : vector<18x128xf32>
    %81 = tpu.matmul %78, %80, %cst_68 {dimension_numbers = #tpu.dot_dimension_numbers<[1], [0], [0], [1], [0, 0, 1, 1], [], []>} : vector<18x64xbf16>, vector<64x128xbf16>, vector<18x128xf32> -> vector<18x128xf32>
    %82 = arith.addf %70, %81 : vector<18x128xf32>
    %c10 = arith.constant 10 : index
    %c0_69 = arith.constant 0 : index
    %83 = vector.load %arg17[%c10, %c0_69] : memref<162x64xf32, #tpu.memory_space<vmem>>, vector<3x64xf32>
    %c28 = arith.constant 28 : index
    %c0_70 = arith.constant 0 : index
    %84 = vector.load %arg17[%c28, %c0_70] : memref<162x64xf32, #tpu.memory_space<vmem>>, vector<3x64xf32>
    %c46 = arith.constant 46 : index
    %c0_71 = arith.constant 0 : index
    %85 = vector.load %arg17[%c46, %c0_71] : memref<162x64xf32, #tpu.memory_space<vmem>>, vector<3x64xf32>
    %c91 = arith.constant 91 : index
    %c0_72 = arith.constant 0 : index
    %86 = vector.load %arg17[%c91, %c0_72] : memref<162x64xf32, #tpu.memory_space<vmem>>, vector<3x64xf32>
    %c109 = arith.constant 109 : index
    %c0_73 = arith.constant 0 : index
    %87 = vector.load %arg17[%c109, %c0_73] : memref<162x64xf32, #tpu.memory_space<vmem>>, vector<3x64xf32>
    %c127 = arith.constant 127 : index
    %c0_74 = arith.constant 0 : index
    %88 = vector.load %arg17[%c127, %c0_74] : memref<162x64xf32, #tpu.memory_space<vmem>>, vector<3x64xf32>
    %89 = tpu.concatenate %83, %84, %85, %86, %87, %88 in 0 : vector<3x64xf32>, vector<3x64xf32>, vector<3x64xf32>, vector<3x64xf32>, vector<3x64xf32>, vector<3x64xf32> -> vector<18x64xf32>
    %90 = arith.truncf %89 : vector<18x64xf32> to vector<18x64xbf16>
    %c6_75 = arith.constant 6 : index
    %c0_76 = arith.constant 0 : index
    %c0_77 = arith.constant 0 : index
    %91 = vector.load %arg5[%c6_75, %c0_76, %c0_77] : memref<16x64x128xbf16, #tpu.memory_space<vmem>>, vector<1x64x128xbf16>
    %92 = vector.shape_cast %91 : vector<1x64x128xbf16> to vector<64x128xbf16>
    %cst_78 = arith.constant dense<0.000000e+00> : vector<18x128xf32>
    %93 = tpu.matmul %90, %92, %cst_78 {dimension_numbers = #tpu.dot_dimension_numbers<[1], [0], [0], [1], [0, 0, 1, 1], [], []>} : vector<18x64xbf16>, vector<64x128xbf16>, vector<18x128xf32> -> vector<18x128xf32>
    %94 = arith.addf %82, %93 : vector<18x128xf32>
    %c15 = arith.constant 15 : index
    %c0_79 = arith.constant 0 : index
    %95 = vector.load %arg17[%c15, %c0_79] : memref<162x64xf32, #tpu.memory_space<vmem>>, vector<3x64xf32>
    %c33 = arith.constant 33 : index
    %c0_80 = arith.constant 0 : index
    %96 = vector.load %arg17[%c33, %c0_80] : memref<162x64xf32, #tpu.memory_space<vmem>>, vector<3x64xf32>
    %c51 = arith.constant 51 : index
    %c0_81 = arith.constant 0 : index
    %97 = vector.load %arg17[%c51, %c0_81] : memref<162x64xf32, #tpu.memory_space<vmem>>, vector<3x64xf32>
    %c96 = arith.constant 96 : index
    %c0_82 = arith.constant 0 : index
    %98 = vector.load %arg17[%c96, %c0_82] : memref<162x64xf32, #tpu.memory_space<vmem>>, vector<3x64xf32>
    %c114 = arith.constant 114 : index
    %c0_83 = arith.constant 0 : index
    %99 = vector.load %arg17[%c114, %c0_83] : memref<162x64xf32, #tpu.memory_space<vmem>>, vector<3x64xf32>
    %c132 = arith.constant 132 : index
    %c0_84 = arith.constant 0 : index
    %100 = vector.load %arg17[%c132, %c0_84] : memref<162x64xf32, #tpu.memory_space<vmem>>, vector<3x64xf32>
    %101 = tpu.concatenate %95, %96, %97, %98, %99, %100 in 0 : vector<3x64xf32>, vector<3x64xf32>, vector<3x64xf32>, vector<3x64xf32>, vector<3x64xf32>, vector<3x64xf32> -> vector<18x64xf32>
    %102 = arith.truncf %101 : vector<18x64xf32> to vector<18x64xbf16>
    %c7 = arith.constant 7 : index
    %c0_85 = arith.constant 0 : index
    %c0_86 = arith.constant 0 : index
    %103 = vector.load %arg5[%c7, %c0_85, %c0_86] : memref<16x64x128xbf16, #tpu.memory_space<vmem>>, vector<1x64x128xbf16>
    %104 = vector.shape_cast %103 : vector<1x64x128xbf16> to vector<64x128xbf16>
    %cst_87 = arith.constant dense<0.000000e+00> : vector<18x128xf32>
    %105 = tpu.matmul %102, %104, %cst_87 {dimension_numbers = #tpu.dot_dimension_numbers<[1], [0], [0], [1], [0, 0, 1, 1], [], []>} : vector<18x64xbf16>, vector<64x128xbf16>, vector<18x128xf32> -> vector<18x128xf32>
    %106 = arith.addf %94, %105 : vector<18x128xf32>
    %c18_88 = arith.constant 18 : index
    %c0_89 = arith.constant 0 : index
    %107 = vector.load %arg17[%c18_88, %c0_89] : memref<162x64xf32, #tpu.memory_space<vmem>>, vector<3x64xf32>
    %c36_90 = arith.constant 36 : index
    %c0_91 = arith.constant 0 : index
    %108 = vector.load %arg17[%c36_90, %c0_91] : memref<162x64xf32, #tpu.memory_space<vmem>>, vector<3x64xf32>
    %c54 = arith.constant 54 : index
    %c0_92 = arith.constant 0 : index
    %109 = vector.load %arg17[%c54, %c0_92] : memref<162x64xf32, #tpu.memory_space<vmem>>, vector<3x64xf32>
    %c99_93 = arith.constant 99 : index
    %c0_94 = arith.constant 0 : index
    %110 = vector.load %arg17[%c99_93, %c0_94] : memref<162x64xf32, #tpu.memory_space<vmem>>, vector<3x64xf32>
    %c117_95 = arith.constant 117 : index
    %c0_96 = arith.constant 0 : index
    %111 = vector.load %arg17[%c117_95, %c0_96] : memref<162x64xf32, #tpu.memory_space<vmem>>, vector<3x64xf32>
    %c135 = arith.constant 135 : index
    %c0_97 = arith.constant 0 : index
    %112 = vector.load %arg17[%c135, %c0_97] : memref<162x64xf32, #tpu.memory_space<vmem>>, vector<3x64xf32>
    %113 = tpu.concatenate %107, %108, %109, %110, %111, %112 in 0 : vector<3x64xf32>, vector<3x64xf32>, vector<3x64xf32>, vector<3x64xf32>, vector<3x64xf32>, vector<3x64xf32> -> vector<18x64xf32>
    %114 = arith.truncf %113 : vector<18x64xf32> to vector<18x64xbf16>
    %c8 = arith.constant 8 : index
    %c0_98 = arith.constant 0 : index
    %c0_99 = arith.constant 0 : index
    %115 = vector.load %arg5[%c8, %c0_98, %c0_99] : memref<16x64x128xbf16, #tpu.memory_space<vmem>>, vector<1x64x128xbf16>
    %116 = vector.shape_cast %115 : vector<1x64x128xbf16> to vector<64x128xbf16>
    %cst_100 = arith.constant dense<0.000000e+00> : vector<18x128xf32>
    %117 = tpu.matmul %114, %116, %cst_100 {dimension_numbers = #tpu.dot_dimension_numbers<[1], [0], [0], [1], [0, 0, 1, 1], [], []>} : vector<18x64xbf16>, vector<64x128xbf16>, vector<18x128xf32> -> vector<18x128xf32>
    %118 = arith.addf %106, %117 : vector<18x128xf32>
    %c23_101 = arith.constant 23 : index
    %c0_102 = arith.constant 0 : index
    %119 = vector.load %arg17[%c23_101, %c0_102] : memref<162x64xf32, #tpu.memory_space<vmem>>, vector<3x64xf32>
    %c41_103 = arith.constant 41 : index
    %c0_104 = arith.constant 0 : index
    %120 = vector.load %arg17[%c41_103, %c0_104] : memref<162x64xf32, #tpu.memory_space<vmem>>, vector<3x64xf32>
    %c59 = arith.constant 59 : index
    %c0_105 = arith.constant 0 : index
    %121 = vector.load %arg17[%c59, %c0_105] : memref<162x64xf32, #tpu.memory_space<vmem>>, vector<3x64xf32>
    %c104_106 = arith.constant 104 : index
    %c0_107 = arith.constant 0 : index
    %122 = vector.load %arg17[%c104_106, %c0_107] : memref<162x64xf32, #tpu.memory_space<vmem>>, vector<3x64xf32>
    %c122_108 = arith.constant 122 : index
    %c0_109 = arith.constant 0 : index
    %123 = vector.load %arg17[%c122_108, %c0_109] : memref<162x64xf32, #tpu.memory_space<vmem>>, vector<3x64xf32>
    %c140 = arith.constant 140 : index
    %c0_110 = arith.constant 0 : index
    %124 = vector.load %arg17[%c140, %c0_110] : memref<162x64xf32, #tpu.memory_space<vmem>>, vector<3x64xf32>
    %125 = tpu.concatenate %119, %120, %121, %122, %123, %124 in 0 : vector<3x64xf32>, vector<3x64xf32>, vector<3x64xf32>, vector<3x64xf32>, vector<3x64xf32>, vector<3x64xf32> -> vector<18x64xf32>
    %126 = arith.truncf %125 : vector<18x64xf32> to vector<18x64xbf16>
    %c9_111 = arith.constant 9 : index
    %c0_112 = arith.constant 0 : index
    %c0_113 = arith.constant 0 : index
    %127 = vector.load %arg5[%c9_111, %c0_112, %c0_113] : memref<16x64x128xbf16, #tpu.memory_space<vmem>>, vector<1x64x128xbf16>
    %128 = vector.shape_cast %127 : vector<1x64x128xbf16> to vector<64x128xbf16>
    %cst_114 = arith.constant dense<0.000000e+00> : vector<18x128xf32>
    %129 = tpu.matmul %126, %128, %cst_114 {dimension_numbers = #tpu.dot_dimension_numbers<[1], [0], [0], [1], [0, 0, 1, 1], [], []>} : vector<18x64xbf16>, vector<64x128xbf16>, vector<18x128xf32> -> vector<18x128xf32>
    %130 = arith.addf %118, %129 : vector<18x128xf32>
    %c19_115 = arith.constant 19 : index
    %c0_116 = arith.constant 0 : index
    %131 = vector.load %arg17[%c19_115, %c0_116] : memref<162x64xf32, #tpu.memory_space<vmem>>, vector<3x64xf32>
    %c37_117 = arith.constant 37 : index
    %c0_118 = arith.constant 0 : index
    %132 = vector.load %arg17[%c37_117, %c0_118] : memref<162x64xf32, #tpu.memory_space<vmem>>, vector<3x64xf32>
    %c55 = arith.constant 55 : index
    %c0_119 = arith.constant 0 : index
    %133 = vector.load %arg17[%c55, %c0_119] : memref<162x64xf32, #tpu.memory_space<vmem>>, vector<3x64xf32>
    %c100_120 = arith.constant 100 : index
    %c0_121 = arith.constant 0 : index
    %134 = vector.load %arg17[%c100_120, %c0_121] : memref<162x64xf32, #tpu.memory_space<vmem>>, vector<3x64xf32>
    %c118_122 = arith.constant 118 : index
    %c0_123 = arith.constant 0 : index
    %135 = vector.load %arg17[%c118_122, %c0_123] : memref<162x64xf32, #tpu.memory_space<vmem>>, vector<3x64xf32>
    %c136 = arith.constant 136 : index
    %c0_124 = arith.constant 0 : index
    %136 = vector.load %arg17[%c136, %c0_124] : memref<162x64xf32, #tpu.memory_space<vmem>>, vector<3x64xf32>
    %137 = tpu.concatenate %131, %132, %133, %134, %135, %136 in 0 : vector<3x64xf32>, vector<3x64xf32>, vector<3x64xf32>, vector<3x64xf32>, vector<3x64xf32>, vector<3x64xf32> -> vector<18x64xf32>
    %138 = arith.truncf %137 : vector<18x64xf32> to vector<18x64xbf16>
    %c10_125 = arith.constant 10 : index
    %c0_126 = arith.constant 0 : index
    %c0_127 = arith.constant 0 : index
    %139 = vector.load %arg5[%c10_125, %c0_126, %c0_127] : memref<16x64x128xbf16, #tpu.memory_space<vmem>>, vector<1x64x128xbf16>
    %140 = vector.shape_cast %139 : vector<1x64x128xbf16> to vector<64x128xbf16>
    %cst_128 = arith.constant dense<0.000000e+00> : vector<18x128xf32>
    %141 = tpu.matmul %138, %140, %cst_128 {dimension_numbers = #tpu.dot_dimension_numbers<[1], [0], [0], [1], [0, 0, 1, 1], [], []>} : vector<18x64xbf16>, vector<64x128xbf16>, vector<18x128xf32> -> vector<18x128xf32>
    %142 = arith.addf %130, %141 : vector<18x128xf32>
    %c24_129 = arith.constant 24 : index
    %c0_130 = arith.constant 0 : index
    %143 = vector.load %arg17[%c24_129, %c0_130] : memref<162x64xf32, #tpu.memory_space<vmem>>, vector<3x64xf32>
    %c42_131 = arith.constant 42 : index
    %c0_132 = arith.constant 0 : index
    %144 = vector.load %arg17[%c42_131, %c0_132] : memref<162x64xf32, #tpu.memory_space<vmem>>, vector<3x64xf32>
    %c60 = arith.constant 60 : index
    %c0_133 = arith.constant 0 : index
    %145 = vector.load %arg17[%c60, %c0_133] : memref<162x64xf32, #tpu.memory_space<vmem>>, vector<3x64xf32>
    %c105_134 = arith.constant 105 : index
    %c0_135 = arith.constant 0 : index
    %146 = vector.load %arg17[%c105_134, %c0_135] : memref<162x64xf32, #tpu.memory_space<vmem>>, vector<3x64xf32>
    %c123_136 = arith.constant 123 : index
    %c0_137 = arith.constant 0 : index
    %147 = vector.load %arg17[%c123_136, %c0_137] : memref<162x64xf32, #tpu.memory_space<vmem>>, vector<3x64xf32>
    %c141 = arith.constant 141 : index
    %c0_138 = arith.constant 0 : index
    %148 = vector.load %arg17[%c141, %c0_138] : memref<162x64xf32, #tpu.memory_space<vmem>>, vector<3x64xf32>
    %149 = tpu.concatenate %143, %144, %145, %146, %147, %148 in 0 : vector<3x64xf32>, vector<3x64xf32>, vector<3x64xf32>, vector<3x64xf32>, vector<3x64xf32>, vector<3x64xf32> -> vector<18x64xf32>
    %150 = arith.truncf %149 : vector<18x64xf32> to vector<18x64xbf16>
    %c11 = arith.constant 11 : index
    %c0_139 = arith.constant 0 : index
    %c0_140 = arith.constant 0 : index
    %151 = vector.load %arg5[%c11, %c0_139, %c0_140] : memref<16x64x128xbf16, #tpu.memory_space<vmem>>, vector<1x64x128xbf16>
    %152 = vector.shape_cast %151 : vector<1x64x128xbf16> to vector<64x128xbf16>
    %cst_141 = arith.constant dense<0.000000e+00> : vector<18x128xf32>
    %153 = tpu.matmul %150, %152, %cst_141 {dimension_numbers = #tpu.dot_dimension_numbers<[1], [0], [0], [1], [0, 0, 1, 1], [], []>} : vector<18x64xbf16>, vector<64x128xbf16>, vector<18x128xf32> -> vector<18x128xf32>
    %154 = arith.addf %142, %153 : vector<18x128xf32>
    %c27_142 = arith.constant 27 : index
    %c0_143 = arith.constant 0 : index
    %155 = vector.load %arg17[%c27_142, %c0_143] : memref<162x64xf32, #tpu.memory_space<vmem>>, vector<3x64xf32>
    %c45_144 = arith.constant 45 : index
    %c0_145 = arith.constant 0 : index
    %156 = vector.load %arg17[%c45_144, %c0_145] : memref<162x64xf32, #tpu.memory_space<vmem>>, vector<3x64xf32>
    %c63 = arith.constant 63 : index
    %c0_146 = arith.constant 0 : index
    %157 = vector.load %arg17[%c63, %c0_146] : memref<162x64xf32, #tpu.memory_space<vmem>>, vector<3x64xf32>
    %c108_147 = arith.constant 108 : index
    %c0_148 = arith.constant 0 : index
    %158 = vector.load %arg17[%c108_147, %c0_148] : memref<162x64xf32, #tpu.memory_space<vmem>>, vector<3x64xf32>
    %c126_149 = arith.constant 126 : index
    %c0_150 = arith.constant 0 : index
    %159 = vector.load %arg17[%c126_149, %c0_150] : memref<162x64xf32, #tpu.memory_space<vmem>>, vector<3x64xf32>
    %c144 = arith.constant 144 : index
    %c0_151 = arith.constant 0 : index
    %160 = vector.load %arg17[%c144, %c0_151] : memref<162x64xf32, #tpu.memory_space<vmem>>, vector<3x64xf32>
    %161 = tpu.concatenate %155, %156, %157, %158, %159, %160 in 0 : vector<3x64xf32>, vector<3x64xf32>, vector<3x64xf32>, vector<3x64xf32>, vector<3x64xf32>, vector<3x64xf32> -> vector<18x64xf32>
    %162 = arith.truncf %161 : vector<18x64xf32> to vector<18x64xbf16>
    %c12 = arith.constant 12 : index
    %c0_152 = arith.constant 0 : index
    %c0_153 = arith.constant 0 : index
    %163 = vector.load %arg5[%c12, %c0_152, %c0_153] : memref<16x64x128xbf16, #tpu.memory_space<vmem>>, vector<1x64x128xbf16>
    %164 = vector.shape_cast %163 : vector<1x64x128xbf16> to vector<64x128xbf16>
    %cst_154 = arith.constant dense<0.000000e+00> : vector<18x128xf32>
    %165 = tpu.matmul %162, %164, %cst_154 {dimension_numbers = #tpu.dot_dimension_numbers<[1], [0], [0], [1], [0, 0, 1, 1], [], []>} : vector<18x64xbf16>, vector<64x128xbf16>, vector<18x128xf32> -> vector<18x128xf32>
    %166 = arith.addf %154, %165 : vector<18x128xf32>
    %c32_155 = arith.constant 32 : index
    %c0_156 = arith.constant 0 : index
    %167 = vector.load %arg17[%c32_155, %c0_156] : memref<162x64xf32, #tpu.memory_space<vmem>>, vector<3x64xf32>
    %c50_157 = arith.constant 50 : index
    %c0_158 = arith.constant 0 : index
    %168 = vector.load %arg17[%c50_157, %c0_158] : memref<162x64xf32, #tpu.memory_space<vmem>>, vector<3x64xf32>
    %c68 = arith.constant 68 : index
    %c0_159 = arith.constant 0 : index
    %169 = vector.load %arg17[%c68, %c0_159] : memref<162x64xf32, #tpu.memory_space<vmem>>, vector<3x64xf32>
    %c113_160 = arith.constant 113 : index
    %c0_161 = arith.constant 0 : index
    %170 = vector.load %arg17[%c113_160, %c0_161] : memref<162x64xf32, #tpu.memory_space<vmem>>, vector<3x64xf32>
    %c131_162 = arith.constant 131 : index
    %c0_163 = arith.constant 0 : index
    %171 = vector.load %arg17[%c131_162, %c0_163] : memref<162x64xf32, #tpu.memory_space<vmem>>, vector<3x64xf32>
    %c149 = arith.constant 149 : index
    %c0_164 = arith.constant 0 : index
    %172 = vector.load %arg17[%c149, %c0_164] : memref<162x64xf32, #tpu.memory_space<vmem>>, vector<3x64xf32>
    %173 = tpu.concatenate %167, %168, %169, %170, %171, %172 in 0 : vector<3x64xf32>, vector<3x64xf32>, vector<3x64xf32>, vector<3x64xf32>, vector<3x64xf32>, vector<3x64xf32> -> vector<18x64xf32>
    %174 = arith.truncf %173 : vector<18x64xf32> to vector<18x64xbf16>
    %c13 = arith.constant 13 : index
    %c0_165 = arith.constant 0 : index
    %c0_166 = arith.constant 0 : index
    %175 = vector.load %arg5[%c13, %c0_165, %c0_166] : memref<16x64x128xbf16, #tpu.memory_space<vmem>>, vector<1x64x128xbf16>
    %176 = vector.shape_cast %175 : vector<1x64x128xbf16> to vector<64x128xbf16>
    %cst_167 = arith.constant dense<0.000000e+00> : vector<18x128xf32>
    %177 = tpu.matmul %174, %176, %cst_167 {dimension_numbers = #tpu.dot_dimension_numbers<[1], [0], [0], [1], [0, 0, 1, 1], [], []>} : vector<18x64xbf16>, vector<64x128xbf16>, vector<18x128xf32> -> vector<18x128xf32>
    %178 = arith.addf %166, %177 : vector<18x128xf32>
    %c28_168 = arith.constant 28 : index
    %c0_169 = arith.constant 0 : index
    %179 = vector.load %arg17[%c28_168, %c0_169] : memref<162x64xf32, #tpu.memory_space<vmem>>, vector<3x64xf32>
    %c46_170 = arith.constant 46 : index
    %c0_171 = arith.constant 0 : index
    %180 = vector.load %arg17[%c46_170, %c0_171] : memref<162x64xf32, #tpu.memory_space<vmem>>, vector<3x64xf32>
    %c64 = arith.constant 64 : index
    %c0_172 = arith.constant 0 : index
    %181 = vector.load %arg17[%c64, %c0_172] : memref<162x64xf32, #tpu.memory_space<vmem>>, vector<3x64xf32>
    %c109_173 = arith.constant 109 : index
    %c0_174 = arith.constant 0 : index
    %182 = vector.load %arg17[%c109_173, %c0_174] : memref<162x64xf32, #tpu.memory_space<vmem>>, vector<3x64xf32>
    %c127_175 = arith.constant 127 : index
    %c0_176 = arith.constant 0 : index
    %183 = vector.load %arg17[%c127_175, %c0_176] : memref<162x64xf32, #tpu.memory_space<vmem>>, vector<3x64xf32>
    %c145 = arith.constant 145 : index
    %c0_177 = arith.constant 0 : index
    %184 = vector.load %arg17[%c145, %c0_177] : memref<162x64xf32, #tpu.memory_space<vmem>>, vector<3x64xf32>
    %185 = tpu.concatenate %179, %180, %181, %182, %183, %184 in 0 : vector<3x64xf32>, vector<3x64xf32>, vector<3x64xf32>, vector<3x64xf32>, vector<3x64xf32>, vector<3x64xf32> -> vector<18x64xf32>
    %186 = arith.truncf %185 : vector<18x64xf32> to vector<18x64xbf16>
    %c14_178 = arith.constant 14 : index
    %c0_179 = arith.constant 0 : index
    %c0_180 = arith.constant 0 : index
    %187 = vector.load %arg5[%c14_178, %c0_179, %c0_180] : memref<16x64x128xbf16, #tpu.memory_space<vmem>>, vector<1x64x128xbf16>
    %188 = vector.shape_cast %187 : vector<1x64x128xbf16> to vector<64x128xbf16>
    %cst_181 = arith.constant dense<0.000000e+00> : vector<18x128xf32>
    %189 = tpu.matmul %186, %188, %cst_181 {dimension_numbers = #tpu.dot_dimension_numbers<[1], [0], [0], [1], [0, 0, 1, 1], [], []>} : vector<18x64xbf16>, vector<64x128xbf16>, vector<18x128xf32> -> vector<18x128xf32>
    %190 = arith.addf %178, %189 : vector<18x128xf32>
    %c33_182 = arith.constant 33 : index
    %c0_183 = arith.constant 0 : index
    %191 = vector.load %arg17[%c33_182, %c0_183] : memref<162x64xf32, #tpu.memory_space<vmem>>, vector<3x64xf32>
    %c51_184 = arith.constant 51 : index
    %c0_185 = arith.constant 0 : index
    %192 = vector.load %arg17[%c51_184, %c0_185] : memref<162x64xf32, #tpu.memory_space<vmem>>, vector<3x64xf32>
    %c69 = arith.constant 69 : index
    %c0_186 = arith.constant 0 : index
    %193 = vector.load %arg17[%c69, %c0_186] : memref<162x64xf32, #tpu.memory_space<vmem>>, vector<3x64xf32>
    %c114_187 = arith.constant 114 : index
    %c0_188 = arith.constant 0 : index
    %194 = vector.load %arg17[%c114_187, %c0_188] : memref<162x64xf32, #tpu.memory_space<vmem>>, vector<3x64xf32>
    %c132_189 = arith.constant 132 : index
    %c0_190 = arith.constant 0 : index
    %195 = vector.load %arg17[%c132_189, %c0_190] : memref<162x64xf32, #tpu.memory_space<vmem>>, vector<3x64xf32>
    %c150 = arith.constant 150 : index
    %c0_191 = arith.constant 0 : index
    %196 = vector.load %arg17[%c150, %c0_191] : memref<162x64xf32, #tpu.memory_space<vmem>>, vector<3x64xf32>
    %197 = tpu.concatenate %191, %192, %193, %194, %195, %196 in 0 : vector<3x64xf32>, vector<3x64xf32>, vector<3x64xf32>, vector<3x64xf32>, vector<3x64xf32>, vector<3x64xf32> -> vector<18x64xf32>
    %198 = arith.truncf %197 : vector<18x64xf32> to vector<18x64xbf16>
    %c15_192 = arith.constant 15 : index
    %c0_193 = arith.constant 0 : index
    %c0_194 = arith.constant 0 : index
    %199 = vector.load %arg5[%c15_192, %c0_193, %c0_194] : memref<16x64x128xbf16, #tpu.memory_space<vmem>>, vector<1x64x128xbf16>
    %200 = vector.shape_cast %199 : vector<1x64x128xbf16> to vector<64x128xbf16>
    %cst_195 = arith.constant dense<0.000000e+00> : vector<18x128xf32>
    %201 = tpu.matmul %198, %200, %cst_195 {dimension_numbers = #tpu.dot_dimension_numbers<[1], [0], [0], [1], [0, 0, 1, 1], [], []>} : vector<18x64xbf16>, vector<64x128xbf16>, vector<18x128xf32> -> vector<18x128xf32>
    %202 = arith.addf %190, %201 : vector<18x128xf32>
    %203 = vector.broadcast %9 : vector<1x128xf32> to vector<18x128xf32>
    %204 = arith.addf %202, %203 : vector<18x128xf32>
    %cst_196 = arith.constant 0.000000e+00 : f32
    %205 = vector.broadcast %cst_196 : f32 to vector<18x128xf32>
    %206 = arith.maximumf %204, %205 : vector<18x128xf32>
    %207 = vector.extract_strided_slice %206 {offsets = [0, 0], sizes = [1, 128], strides = [1, 1]} : vector<18x128xf32> to vector<1x128xf32>
    %208 = vector.extract_strided_slice %206 {offsets = [1, 0], sizes = [1, 128], strides = [1, 1]} : vector<18x128xf32> to vector<1x128xf32>
    %209 = vector.extract_strided_slice %206 {offsets = [2, 0], sizes = [1, 128], strides = [1, 1]} : vector<18x128xf32> to vector<1x128xf32>
    %210 = vector.extract_strided_slice %206 {offsets = [3, 0], sizes = [1, 128], strides = [1, 1]} : vector<18x128xf32> to vector<1x128xf32>
    %211 = vector.extract_strided_slice %206 {offsets = [4, 0], sizes = [1, 128], strides = [1, 1]} : vector<18x128xf32> to vector<1x128xf32>
    %212 = vector.extract_strided_slice %206 {offsets = [5, 0], sizes = [1, 128], strides = [1, 1]} : vector<18x128xf32> to vector<1x128xf32>
    %213 = vector.extract_strided_slice %206 {offsets = [6, 0], sizes = [1, 128], strides = [1, 1]} : vector<18x128xf32> to vector<1x128xf32>
    %214 = vector.extract_strided_slice %206 {offsets = [7, 0], sizes = [1, 128], strides = [1, 1]} : vector<18x128xf32> to vector<1x128xf32>
    %215 = vector.extract_strided_slice %206 {offsets = [8, 0], sizes = [1, 128], strides = [1, 1]} : vector<18x128xf32> to vector<1x128xf32>
    %216 = tpu.concatenate %207, %208, %209, %210, %211, %212, %213, %214, %215 in 1 : vector<1x128xf32>, vector<1x128xf32>, vector<1x128xf32>, vector<1x128xf32>, vector<1x128xf32>, vector<1x128xf32>, vector<1x128xf32>, vector<1x128xf32>, vector<1x128xf32> -> vector<1x1152xf32>
    %217 = vector.extract_strided_slice %206 {offsets = [9, 0], sizes = [1, 128], strides = [1, 1]} : vector<18x128xf32> to vector<1x128xf32>
    %218 = vector.extract_strided_slice %206 {offsets = [10, 0], sizes = [1, 128], strides = [1, 1]} : vector<18x128xf32> to vector<1x128xf32>
    %219 = vector.extract_strided_slice %206 {offsets = [11, 0], sizes = [1, 128], strides = [1, 1]} : vector<18x128xf32> to vector<1x128xf32>
    %220 = vector.extract_strided_slice %206 {offsets = [12, 0], sizes = [1, 128], strides = [1, 1]} : vector<18x128xf32> to vector<1x128xf32>
    %221 = vector.extract_strided_slice %206 {offsets = [13, 0], sizes = [1, 128], strides = [1, 1]} : vector<18x128xf32> to vector<1x128xf32>
    %222 = vector.extract_strided_slice %206 {offsets = [14, 0], sizes = [1, 128], strides = [1, 1]} : vector<18x128xf32> to vector<1x128xf32>
    %223 = vector.extract_strided_slice %206 {offsets = [15, 0], sizes = [1, 128], strides = [1, 1]} : vector<18x128xf32> to vector<1x128xf32>
    %224 = vector.extract_strided_slice %206 {offsets = [16, 0], sizes = [1, 128], strides = [1, 1]} : vector<18x128xf32> to vector<1x128xf32>
    %225 = vector.extract_strided_slice %206 {offsets = [17, 0], sizes = [1, 128], strides = [1, 1]} : vector<18x128xf32> to vector<1x128xf32>
    %226 = tpu.concatenate %217, %218, %219, %220, %221, %222, %223, %224, %225 in 1 : vector<1x128xf32>, vector<1x128xf32>, vector<1x128xf32>, vector<1x128xf32>, vector<1x128xf32>, vector<1x128xf32>, vector<1x128xf32>, vector<1x128xf32>, vector<1x128xf32> -> vector<1x1152xf32>
    %227 = tpu.concatenate %216, %226 in 0 : vector<1x1152xf32>, vector<1x1152xf32> -> vector<2x1152xf32>
    %228 = arith.truncf %227 : vector<2x1152xf32> to vector<2x1152xbf16>
    %c0_197 = arith.constant 0 : index
    %c0_198 = arith.constant 0 : index
    %229 = vector.load %arg7[%c0_197, %c0_198] : memref<1152x256xbf16, #tpu.memory_space<vmem>>, vector<1152x256xbf16>
    %cst_199 = arith.constant dense<0.000000e+00> : vector<2x256xf32>
    %230 = tpu.matmul %228, %229, %cst_199 {dimension_numbers = #tpu.dot_dimension_numbers<[1], [0], [0], [1], [0, 0, 1, 1], [], []>} : vector<2x1152xbf16>, vector<1152x256xbf16>, vector<2x256xf32> -> vector<2x256xf32>
    %c0_200 = arith.constant 0 : index
    %c0_201 = arith.constant 0 : index
    %231 = vector.load %arg8[%c0_200, %c0_201] : memref<1x256xf32, #tpu.memory_space<vmem>>, vector<1x256xf32>
    %232 = vector.broadcast %231 : vector<1x256xf32> to vector<2x256xf32>
    %233 = arith.addf %230, %232 : vector<2x256xf32>
    %cst_202 = arith.constant 0.000000e+00 : f32
    %234 = vector.broadcast %cst_202 : f32 to vector<2x256xf32>
    %235 = arith.maximumf %233, %234 : vector<2x256xf32>
    %236 = arith.truncf %235 : vector<2x256xf32> to vector<2x256xbf16>
    %c0_203 = arith.constant 0 : index
    %c0_204 = arith.constant 0 : index
    %237 = vector.load %arg9[%c0_203, %c0_204] : memref<256x512xbf16, #tpu.memory_space<vmem>>, vector<256x512xbf16>
    %cst_205 = arith.constant dense<0.000000e+00> : vector<2x512xf32>
    %238 = tpu.matmul %236, %237, %cst_205 {dimension_numbers = #tpu.dot_dimension_numbers<[1], [0], [0], [1], [0, 0, 1, 1], [], []>} : vector<2x256xbf16>, vector<256x512xbf16>, vector<2x512xf32> -> vector<2x512xf32>
    %c0_206 = arith.constant 0 : index
    %c0_207 = arith.constant 0 : index
    %239 = vector.load %arg2[%c0_206, %c0_207] : memref<2x1xf32, #tpu.memory_space<vmem>>, vector<2x1xf32>
    %c0_208 = arith.constant 0 : index
    %c0_209 = arith.constant 0 : index
    %240 = vector.load %arg10[%c0_208, %c0_209] : memref<1x512xf32, #tpu.memory_space<vmem>>, vector<1x512xf32>
    %241 = vector.broadcast %239 : vector<2x1xf32> to vector<2x512xf32>
    %242 = vector.broadcast %240 : vector<1x512xf32> to vector<2x512xf32>
    %243 = arith.mulf %241, %242 : vector<2x512xf32>
    %244 = arith.addf %238, %243 : vector<2x512xf32>
    %c0_210 = arith.constant 0 : index
    %c0_211 = arith.constant 0 : index
    %245 = vector.load %arg11[%c0_210, %c0_211] : memref<1x512xf32, #tpu.memory_space<vmem>>, vector<1x512xf32>
    %246 = vector.broadcast %245 : vector<1x512xf32> to vector<2x512xf32>
    %247 = arith.addf %244, %246 : vector<2x512xf32>
    %248 = arith.truncf %247 : vector<2x512xf32> to vector<2x512xbf16>
    %c0_212 = arith.constant 0 : index
    %c0_213 = arith.constant 0 : index
    %249 = vector.load %arg12[%c0_212, %c0_213] : memref<512x1024xbf16, #tpu.memory_space<vmem>>, vector<512x1024xbf16>
    %cst_214 = arith.constant dense<0.000000e+00> : vector<2x1024xf32>
    %250 = tpu.matmul %248, %249, %cst_214 {dimension_numbers = #tpu.dot_dimension_numbers<[1], [0], [0], [1], [0, 0, 1, 1], [], []>} : vector<2x512xbf16>, vector<512x1024xbf16>, vector<2x1024xf32> -> vector<2x1024xf32>
    %c0_215 = arith.constant 0 : index
    %c0_216 = arith.constant 0 : index
    %251 = vector.load %arg13[%c0_215, %c0_216] : memref<1x1024xf32, #tpu.memory_space<vmem>>, vector<1x1024xf32>
    %252 = vector.broadcast %251 : vector<1x1024xf32> to vector<2x1024xf32>
    %253 = arith.addf %250, %252 : vector<2x1024xf32>
    %cst_217 = arith.constant 0.000000e+00 : f32
    %254 = vector.broadcast %cst_217 : f32 to vector<2x1024xf32>
    %255 = arith.maximumf %253, %254 : vector<2x1024xf32>
    %256 = arith.truncf %255 : vector<2x1024xf32> to vector<2x1024xbf16>
    %c0_218 = arith.constant 0 : index
    %c0_219 = arith.constant 0 : index
    %257 = vector.load %arg14[%c0_218, %c0_219] : memref<1024x128xbf16, #tpu.memory_space<vmem>>, vector<1024x128xbf16>
    %cst_220 = arith.constant dense<0.000000e+00> : vector<2x128xf32>
    %258 = tpu.matmul %256, %257, %cst_220 {dimension_numbers = #tpu.dot_dimension_numbers<[1], [0], [0], [1], [0, 0, 1, 1], [], []>} : vector<2x1024xbf16>, vector<1024x128xbf16>, vector<2x128xf32> -> vector<2x128xf32>
    %c0_221 = arith.constant 0 : index
    %c0_222 = arith.constant 0 : index
    %259 = vector.load %arg15[%c0_221, %c0_222] : memref<1x128xf32, #tpu.memory_space<vmem>>, vector<1x128xf32>
    %260 = vector.broadcast %259 : vector<1x128xf32> to vector<2x128xf32>
    %261 = arith.addf %258, %260 : vector<2x128xf32>
    %c0_223 = arith.constant 0 : index
    %c0_224 = arith.constant 0 : index
    %262 = vector.load %arg16[%c0_223, %c0_224] : memref<2x128xf32, #tpu.memory_space<vmem>>, vector<2x128xf32>
    tpu.vector_store %arg16[%c0_223, %c0_224], %261 {strides = array<i32>} : memref<2x128xf32, #tpu.memory_space<vmem>>, vector<2x128xf32>,
    return
  }
  func.func @transform_0(%arg0: i32) -> (i32, i32) {
    %c0_i32 = arith.constant 0 : i32
    %c0_i32_0 = arith.constant 0 : i32
    %c0_i32_1 = arith.constant 0 : i32
    return %c0_i32, %c0_i32_0 : i32, i32
  }
  func.func @transform_1(%arg0: i32) -> (i32, i32) {
    %c0_i32 = arith.constant 0 : i32
    %c0_i32_0 = arith.constant 0 : i32
    %c0_i32_1 = arith.constant 0 : i32
    return %c0_i32, %c0_i32_0 : i32, i32
  }
  func.func @transform_2(%arg0: i32) -> (i32, i32) {
    %c0_i32 = arith.constant 0 : i32
    %c0_i32_0 = arith.constant 0 : i32
    %c0_i32_1 = arith.constant 0 : i32
    return %c0_i32, %c0_i32_0 : i32, i32
  }
  func.func @transform_3(%arg0: i32) -> (i32, i32) {
    %c0_i32 = arith.constant 0 : i32
    %c0_i32_0 = arith.constant 0 : i32
    %c0_i32_1 = arith.constant 0 : i32
    return %c0_i32, %c0_i32_0 : i32, i32
  }
  func.func @transform_4(%arg0: i32) -> (i32, i32, i32) {
    %c0_i32 = arith.constant 0 : i32
    %c0_i32_0 = arith.constant 0 : i32
    %c0_i32_1 = arith.constant 0 : i32
    %c0_i32_2 = arith.constant 0 : i32
    return %c0_i32, %c0_i32_0, %c0_i32_1 : i32, i32, i32
  }
  func.func @transform_5(%arg0: i32) -> (i32, i32) {
    %c0_i32 = arith.constant 0 : i32
    %c0_i32_0 = arith.constant 0 : i32
    %c0_i32_1 = arith.constant 0 : i32
    return %c0_i32, %c0_i32_0 : i32, i32
  }
  func.func @transform_6(%arg0: i32) -> (i32, i32) {
    %c0_i32 = arith.constant 0 : i32
    %c0_i32_0 = arith.constant 0 : i32
    %c0_i32_1 = arith.constant 0 : i32
    return %c0_i32, %c0_i32_0 : i32, i32
  }
  func.func @transform_7(%arg0: i32) -> (i32, i32) {
    %c0_i32 = arith.constant 0 : i32
    %c0_i32_0 = arith.constant 0 : i32
    %c0_i32_1 = arith.constant 0 : i32
    return %c0_i32, %c0_i32_0 : i32, i32
  }
  func.func @transform_8(%arg0: i32) -> (i32, i32) {
    %c0_i32 = arith.constant 0 : i32
    %c0_i32_0 = arith.constant 0 : i32
    %c0_i32_1 = arith.constant 0 : i32
    return %c0_i32, %c0_i32_0 : i32, i32
  }
  func.func @transform_9(%arg0: i32) -> (i32, i32) {
    %c0_i32 = arith.constant 0 : i32
    %c0_i32_0 = arith.constant 0 : i32
    %c0_i32_1 = arith.constant 0 : i32
    return %c0_i32, %c0_i32_0 : i32, i32
  }
  func.func @transform_10(%arg0: i32) -> (i32, i32) {
    %c0_i32 = arith.constant 0 : i32
    %c0_i32_0 = arith.constant 0 : i32
    %c0_i32_1 = arith.constant 0 : i32
    return %c0_i32, %c0_i32_0 : i32, i32
  }
  func.func @transform_11(%arg0: i32) -> (i32, i32) {
    %c0_i32 = arith.constant 0 : i32
    %c0_i32_0 = arith.constant 0 : i32
    %c0_i32_1 = arith.constant 0 : i32
    return %c0_i32, %c0_i32_0 : i32, i32
  }
  func.func @transform_12(%arg0: i32) -> (i32, i32) {
    %c0_i32 = arith.constant 0 : i32
    %c0_i32_0 = arith.constant 0 : i32
    %c0_i32_1 = arith.constant 0 : i32
    return %c0_i32, %c0_i32_0 : i32, i32
  }
  func.func @transform_13(%arg0: i32) -> (i32, i32) {
    %c0_i32 = arith.constant 0 : i32
    %c0_i32_0 = arith.constant 0 : i32
    %c0_i32_1 = arith.constant 0 : i32
    return %c0_i32, %c0_i32_0 : i32, i32
  }
  func.func @transform_14(%arg0: i32) -> (i32, i32) {
    %c0_i32 = arith.constant 0 : i32
    %c0_i32_0 = arith.constant 0 : i32
    %c0_i32_1 = arith.constant 0 : i32
    return %c0_i32, %c0_i32_0 : i32, i32
  }
  func.func @transform_15(%arg0: i32) -> (i32, i32) {
    %c0_i32 = arith.constant 0 : i32
    %c0_i32_0 = arith.constant 0 : i32
    %c0_i32_1 = arith.constant 0 : i32
    return %c0_i32, %c0_i32_0 : i32, i32
  }
}

</mosaic_0001>

<llo_original>
// kernel: compute_actor_critic.1
$region0: #{compute_actor_critic.1}
  #allocation0 [shape = 'u32[]', space=smem, size = 0x4, offset = 0x4, fixed_abs, tag = 'smem constant byte address 0x4 - core index']
  #allocation1 [shape = 'u32[144,128]{1,0:T(1,128)}', space=vmem, size = 0x12000, scoped, tag = 'internal scratch']
  #allocation2 [shape = 'f32[162,64]{1,0:T(8,128)}', space=vmem, size = 0x15000, scoped, tag = 'scratch operand']
  %s0 = inlined_call_operand.vmem [shape: bf16[162,256], index: 0, kind: input, shape index: {}]
  %s1 = inlined_call_operand.vmem [shape: f32[2,1], index: 1, kind: input, shape index: {}]
  %s2 = inlined_call_operand.vmem [shape: bf16[256,64], index: 2, kind: input, shape index: {}]
  %s3 = inlined_call_operand.vmem [shape: f32[1,64], index: 3, kind: input, shape index: {}]
  %s4 = inlined_call_operand.vmem [shape: bf16[16,64,128], index: 4, kind: input, shape index: {}]
  %s5 = inlined_call_operand.vmem [shape: f32[1,128], index: 5, kind: input, shape index: {}]
  %s6 = inlined_call_operand.vmem [shape: bf16[1152,256], index: 6, kind: input, shape index: {}]
  %s7 = inlined_call_operand.vmem [shape: f32[1,256], index: 7, kind: input, shape index: {}]
  %s8 = inlined_call_operand.vmem [shape: bf16[256,512], index: 8, kind: input, shape index: {}]
  %s9 = inlined_call_operand.vmem [shape: f32[1,512], index: 9, kind: input, shape index: {}]
  %s10 = inlined_call_operand.vmem [shape: f32[1,512], index: 10, kind: input, shape index: {}]
  %s11 = inlined_call_operand.vmem [shape: bf16[512,1024], index: 11, kind: input, shape index: {}]
  %s12 = inlined_call_operand.vmem [shape: f32[1,1024], index: 12, kind: input, shape index: {}]
  %s13 = inlined_call_operand.vmem [shape: bf16[1024,128], index: 13, kind: input, shape index: {}]
  %s14 = inlined_call_operand.vmem [shape: f32[1,128], index: 14, kind: input, shape index: {}]
  %s15 = inlined_call_operand.vmem [shape: f32[2,128], index: 15, kind: output, shape index: {}]
  %s16 = sld [smem:[#allocation0]]
  $region70: #{compute_actor_critic.1} parent=0
    _
  %s18 = ssub.s32 1, %s16
  %s19 = scalar_select 0, %s18, %s16
  // Predicated region
  $region2: #{compute_actor_critic.1} parent=0 // pred_check
    _
  $region3: #{compute_actor_critic.1} parent=0 // pred_check_branch
    %21 = sbr.rel (0) target = $region5
  $region4: #{compute_actor_critic.1} parent=0 // pred_region
    _
  $region5: #{compute_actor_critic.1} parent=0 // pred_fallthru
    _
  // Predicated region
  $region6: #{compute_actor_critic.1} parent=0 // pred_check
    _
  $region7: #{compute_actor_critic.1} parent=0 // pred_check_branch
    %23 = sbr.rel (0) target = $region9
  $region8: #{compute_actor_critic.1} parent=0 // pred_region
    _
  $region9: #{compute_actor_critic.1} parent=0 // pred_fallthru
    _
  // Predicated region
  $region10: #{compute_actor_critic.1} parent=0 // pred_check
    _
  $region11: #{compute_actor_critic.1} parent=0 // pred_check_branch
    %25 = sbr.rel (0) target = $region13
  $region12: #{compute_actor_critic.1} parent=0 // pred_region
    _
  $region13: #{compute_actor_critic.1} parent=0 // pred_fallthru
    _
  // Predicated region
  $region14: #{compute_actor_critic.1} parent=0 // pred_check
    _
  $region15: #{compute_actor_critic.1} parent=0 // pred_check_branch
    %27 = sbr.rel (0) target = $region17
  $region16: #{compute_actor_critic.1} parent=0 // pred_region
    _
  $region17: #{compute_actor_critic.1} parent=0 // pred_fallthru
    _
  // Predicated region
  $region18: #{compute_actor_critic.1} parent=0 // pred_check
    _
  $region19: #{compute_actor_critic.1} parent=0 // pred_check_branch
    %29 = sbr.rel (0) target = $region21
  $region20: #{compute_actor_critic.1} parent=0 // pred_region
    _
  $region21: #{compute_actor_critic.1} parent=0 // pred_fallthru
    _
  // Predicated region
  $region22: #{compute_actor_critic.1} parent=0 // pred_check
    _
  $region23: #{compute_actor_critic.1} parent=0 // pred_check_branch
    %31 = sbr.rel (0) target = $region25
  $region24: #{compute_actor_critic.1} parent=0 // pred_region
    _
  $region25: #{compute_actor_critic.1} parent=0 // pred_fallthru
    _
  // Predicated region
  $region26: #{compute_actor_critic.1} parent=0 // pred_check
    _
  $region27: #{compute_actor_critic.1} parent=0 // pred_check_branch
    %33 = sbr.rel (0) target = $region29
  $region28: #{compute_actor_critic.1} parent=0 // pred_region
    _
  $region29: #{compute_actor_critic.1} parent=0 // pred_fallthru
    _
  // Predicated region
  $region30: #{compute_actor_critic.1} parent=0 // pred_check
    _
  $region31: #{compute_actor_critic.1} parent=0 // pred_check_branch
    %35 = sbr.rel (0) target = $region33
  $region32: #{compute_actor_critic.1} parent=0 // pred_region
    _
  $region33: #{compute_actor_critic.1} parent=0 // pred_fallthru
    _
  // Predicated region
  $region34: #{compute_actor_critic.1} parent=0 // pred_check
    _
  $region35: #{compute_actor_critic.1} parent=0 // pred_check_branch
    %37 = sbr.rel (0) target = $region37
  $region36: #{compute_actor_critic.1} parent=0 // pred_region
    _
  $region37: #{compute_actor_critic.1} parent=0 // pred_fallthru
    _
  // Predicated region
  $region38: #{compute_actor_critic.1} parent=0 // pred_check
    _
  $region39: #{compute_actor_critic.1} parent=0 // pred_check_branch
    %39 = sbr.rel (0) target = $region41
  $region40: #{compute_actor_critic.1} parent=0 // pred_region
    _
  $region41: #{compute_actor_critic.1} parent=0 // pred_fallthru
    _
  // Predicated region
  $region42: #{compute_actor_critic.1} parent=0 // pred_check
    _
  $region43: #{compute_actor_critic.1} parent=0 // pred_check_branch
    %41 = sbr.rel (0) target = $region45
  $region44: #{compute_actor_critic.1} parent=0 // pred_region
    _
  $region45: #{compute_actor_critic.1} parent=0 // pred_fallthru
    _
  // Predicated region
  $region46: #{compute_actor_critic.1} parent=0 // pred_check
    _
  $region47: #{compute_actor_critic.1} parent=0 // pred_check_branch
    %43 = sbr.rel (0) target = $region49
  $region48: #{compute_actor_critic.1} parent=0 // pred_region
    _
  $region49: #{compute_actor_critic.1} parent=0 // pred_fallthru
    _
  // Predicated region
  $region50: #{compute_actor_critic.1} parent=0 // pred_check
    _
  $region51: #{compute_actor_critic.1} parent=0 // pred_check_branch
    %45 = sbr.rel (0) target = $region53
  $region52: #{compute_actor_critic.1} parent=0 // pred_region
    _
  $region53: #{compute_actor_critic.1} parent=0 // pred_fallthru
    _
  // Predicated region
  $region54: #{compute_actor_critic.1} parent=0 // pred_check
    _
  $region55: #{compute_actor_critic.1} parent=0 // pred_check_branch
    %47 = sbr.rel (0) target = $region57
  $region56: #{compute_actor_critic.1} parent=0 // pred_region
    _
  $region57: #{compute_actor_critic.1} parent=0 // pred_fallthru
    _
  // Predicated region
  $region58: #{compute_actor_critic.1} parent=0 // pred_check
    _
  $region59: #{compute_actor_critic.1} parent=0 // pred_check_branch
    %49 = sbr.rel (0) target = $region61
  $region60: #{compute_actor_critic.1} parent=0 // pred_region
    _
  $region61: #{compute_actor_critic.1} parent=0 // pred_fallthru
    _
  %v51 = vld [vmem:[%s0] sm:$0xff]
  %v52 = vld [vmem:[%s0 + $0x8] sm:$0xff]
  %v53 = vld [vmem:[%s0 + $0x10] sm:$0xff]
  %v54 = vld [vmem:[%s0 + $0x18] sm:$0xff]
  %v55 = vld [vmem:[%s0 + $0x20] sm:$0xff]
  %v56 = vld [vmem:[%s0 + $0x28] sm:$0xff]
  %v57 = vld [vmem:[%s0 + $0x30] sm:$0xff]
  %v58 = vld [vmem:[%s0 + $0x38] sm:$0xff]
  %v59 = vld [vmem:[%s0 + $0x40] sm:$0xff]
  %v60 = vld [vmem:[%s0 + $0x48] sm:$0xff]
  %v61 = vld [vmem:[%s0 + $0x50] sm:$0xff]
  %v62 = vld [vmem:[%s0 + $0x58] sm:$0xff]
  %v63 = vld [vmem:[%s0 + $0x60] sm:$0xff]
  %v64 = vld [vmem:[%s0 + $0x68] sm:$0xff]
  %v65 = vld [vmem:[%s0 + $0x70] sm:$0xff]
  %v66 = vld [vmem:[%s0 + $0x78] sm:$0xff]
  %v67 = vld [vmem:[%s0 + $0x80] sm:$0xff]
  %v68 = vld [vmem:[%s0 + $0x88] sm:$0xff]
  %v69 = vld [vmem:[%s0 + $0x90] sm:$0xff]
  %v70 = vld [vmem:[%s0 + $0x98] sm:$0xff]
  %v71 = vld [vmem:[%s0 + $0xa0] sm:$0x11]
  %v72 = vld [vmem:[%s2] sm:$0xf]
  %v73 = vld [vmem:[%s2 + $0x4] sm:$0xf]
  %v74 = vld [vmem:[%s2 + $0x8] sm:$0xf]
  %v75 = vld [vmem:[%s2 + $0xc] sm:$0xf]
  %v76 = vld [vmem:[%s2 + $0x10] sm:$0xf]
  %v77 = vld [vmem:[%s2 + $0x14] sm:$0xf]
  %v78 = vld [vmem:[%s2 + $0x18] sm:$0xf]
  %v79 = vld [vmem:[%s2 + $0x1c] sm:$0xf]
  %v80 = vld [vmem:[%s2 + $0x20] sm:$0xf]
  %v81 = vld [vmem:[%s2 + $0x24] sm:$0xf]
  %v82 = vld [vmem:[%s2 + $0x28] sm:$0xf]
  %v83 = vld [vmem:[%s2 + $0x2c] sm:$0xf]
  %v84 = vld [vmem:[%s2 + $0x30] sm:$0xf]
  %v85 = vld [vmem:[%s2 + $0x34] sm:$0xf]
  %v86 = vld [vmem:[%s2 + $0x38] sm:$0xf]
  %v87 = vld [vmem:[%s2 + $0x3c] sm:$0xf]
  %v88 = vld [vmem:[%s2 + $0x40] sm:$0xf]
  %v89 = vld [vmem:[%s2 + $0x44] sm:$0xf]
  %v90 = vld [vmem:[%s2 + $0x48] sm:$0xf]
  %v91 = vld [vmem:[%s2 + $0x4c] sm:$0xf]
  %v92 = vld [vmem:[%s2 + $0x50] sm:$0xf]
  %v93 = vld [vmem:[%s2 + $0x54] sm:$0xf]
  %v94 = vld [vmem:[%s2 + $0x58] sm:$0xf]
  %v95 = vld [vmem:[%s2 + $0x5c] sm:$0xf]
  %v96 = vld [vmem:[%s2 + $0x60] sm:$0xf]
  %v97 = vld [vmem:[%s2 + $0x64] sm:$0xf]
  %v98 = vld [vmem:[%s2 + $0x68] sm:$0xf]
  %v99 = vld [vmem:[%s2 + $0x6c] sm:$0xf]
  %v100 = vld [vmem:[%s2 + $0x70] sm:$0xf]
  %v101 = vld [vmem:[%s2 + $0x74] sm:$0xf]
  %v102 = vld [vmem:[%s2 + $0x78] sm:$0xf]
  %v103 = vld [vmem:[%s2 + $0x7c] sm:$0xf]
  %v104 = vld [vmem:[%s3] sm:$0x1]
  %v106 = vlaneseq
  %v107 = vshrl.u32 %v106, 7
  %v108 = vsub.s32 0, %v107
  %v109 = vrot.slane %v104, %v108
  %v132 = vunpack.c.l.b16 %v51
  %v133 = vunpack.c.h.b16 %v51
  %v134 = vunpack.c.l.b16 %v52
  %v135 = vunpack.c.h.b16 %v52
  %v136 = vunpack.c.l.b16 %v53
  %v137 = vunpack.c.h.b16 %v53
  %v138 = vunpack.c.l.b16 %v54
  %v139 = vunpack.c.h.b16 %v54
  %v140 = vunpack.c.l.b16 %v55
  %v141 = vunpack.c.h.b16 %v55
  %v142 = vunpack.c.l.b16 %v56
  %v143 = vunpack.c.h.b16 %v56
  %v144 = vunpack.c.l.b16 %v57
  %v145 = vunpack.c.h.b16 %v57
  %v146 = vunpack.c.l.b16 %v58
  %v147 = vunpack.c.h.b16 %v58
  %v148 = vunpack.c.l.b16 %v59
  %v149 = vunpack.c.h.b16 %v59
  %v150 = vunpack.c.l.b16 %v60
  %v151 = vunpack.c.h.b16 %v60
  %v152 = vunpack.c.l.b16 %v61
  %v153 = vunpack.c.h.b16 %v61
  %v154 = vunpack.c.l.b16 %v62
  %v155 = vunpack.c.h.b16 %v62
  %v156 = vunpack.c.l.b16 %v63
  %v157 = vunpack.c.h.b16 %v63
  %v158 = vunpack.c.l.b16 %v64
  %v159 = vunpack.c.h.b16 %v64
  %v160 = vunpack.c.l.b16 %v65
  %v161 = vunpack.c.h.b16 %v65
  %v162 = vunpack.c.l.b16 %v66
  %v163 = vunpack.c.h.b16 %v66
  %v164 = vunpack.c.l.b16 %v67
  %v165 = vunpack.c.h.b16 %v67
  %v166 = vunpack.c.l.b16 %v68
  %v167 = vunpack.c.h.b16 %v68
  %v168 = vunpack.c.l.b16 %v69
  %v169 = vunpack.c.h.b16 %v69
  %v170 = vunpack.c.l.b16 %v70
  %v171 = vunpack.c.h.b16 %v70
  %v172 = vunpack.c.l.b16 %v71
  %v173 = vunpack.c.h.b16 %v71
  %v174 = vpack.c.b16 %v134, %v132
  %v175 = vpack.c.b16 %v135, %v133
  %v176 = vpack.c.b16 %v138, %v136
  %v177 = vpack.c.b16 %v139, %v137
  %v178 = vpack.c.b16 %v142, %v140
  %v179 = vpack.c.b16 %v143, %v141
  %v180 = vpack.c.b16 %v146, %v144
  %v181 = vpack.c.b16 %v147, %v145
  %v182 = vpack.c.b16 %v150, %v148
  %v183 = vpack.c.b16 %v151, %v149
  %v184 = vpack.c.b16 %v154, %v152
  %v185 = vpack.c.b16 %v155, %v153
  %v186 = vpack.c.b16 %v158, %v156
  %v187 = vpack.c.b16 %v159, %v157
  %v188 = vpack.c.b16 %v162, %v160
  %v189 = vpack.c.b16 %v163, %v161
  %v190 = vpack.c.b16 %v166, %v164
  %v191 = vpack.c.b16 %v167, %v165
  %v192 = vpack.c.b16 %v170, %v168
  %v193 = vpack.c.b16 %v171, %v169
  %v194 = vpack.c.b16 %v172, %v172
  %v195 = vpack.c.b16 %v173, %v173
  %v250 = vunpack.c.l.b16 %v72
  %v251 = vunpack.c.l.b16 %v73
  %v252 = vunpack.c.l.b16 %v74
  %v253 = vunpack.c.l.b16 %v75
  %v254 = vunpack.c.l.b16 %v76
  %v255 = vunpack.c.l.b16 %v77
  %v256 = vunpack.c.l.b16 %v78
  %v257 = vunpack.c.l.b16 %v79
  %v258 = vunpack.c.l.b16 %v80
  %v259 = vunpack.c.l.b16 %v81
  %v260 = vunpack.c.l.b16 %v82
  %v261 = vunpack.c.l.b16 %v83
  %v262 = vunpack.c.l.b16 %v84
  %v263 = vunpack.c.l.b16 %v85
  %v264 = vunpack.c.l.b16 %v86
  %v265 = vunpack.c.l.b16 %v87
  %v266 = vunpack.c.l.b16 %v88
  %v267 = vunpack.c.l.b16 %v89
  %v268 = vunpack.c.l.b16 %v90
  %v269 = vunpack.c.l.b16 %v91
  %v270 = vunpack.c.l.b16 %v92
  %v271 = vunpack.c.l.b16 %v93
  %v272 = vunpack.c.l.b16 %v94
  %v273 = vunpack.c.l.b16 %v95
  %v274 = vunpack.c.l.b16 %v96
  %v275 = vunpack.c.l.b16 %v97
  %v276 = vunpack.c.l.b16 %v98
  %v277 = vunpack.c.l.b16 %v99
  %v278 = vunpack.c.l.b16 %v100
  %v279 = vunpack.c.l.b16 %v101
  %v280 = vunpack.c.l.b16 %v102
  %v281 = vunpack.c.l.b16 %v103
  %v282 = vpack.c.b16 %v251, %v250
  %v283 = vpack.c.b16 %v253, %v252
  %v284 = vpack.c.b16 %v255, %v254
  %v285 = vpack.c.b16 %v257, %v256
  %v286 = vpack.c.b16 %v259, %v258
  %v287 = vpack.c.b16 %v261, %v260
  %v288 = vpack.c.b16 %v263, %v262
  %v289 = vpack.c.b16 %v265, %v264
  %v290 = vpack.c.b16 %v267, %v266
  %v291 = vpack.c.b16 %v269, %v268
  %v292 = vpack.c.b16 %v271, %v270
  %v293 = vpack.c.b16 %v273, %v272
  %v294 = vpack.c.b16 %v275, %v274
  %v295 = vpack.c.b16 %v277, %v276
  %v296 = vpack.c.b16 %v279, %v278
  %v297 = vpack.c.b16 %v281, %v280
  %314 = vmatprep.subr.bf16.mxu0 0
  %315 = vmatpush1.bf16.msra.mxu0 %v289
  %316 = vmatprep.subr.bf16.mxu0 0
  %317 = vmatpush1.bf16.msra.mxu0 %v288
  %318 = vmatprep.subr.bf16.mxu0 0
  %319 = vmatpush1.bf16.msra.mxu0 %v287
  %320 = vmatprep.subr.bf16.mxu0 0
  %321 = vmatpush1.bf16.msra.mxu0 %v286
  %322 = vmatprep.subr.bf16.mxu0 0
  %323 = vmatpush1.bf16.msra.mxu0 %v285
  %324 = vmatprep.subr.bf16.mxu0 0
  %325 = vmatpush1.bf16.msra.mxu0 %v284
  %326 = vmatprep.subr.bf16.mxu0 0
  %327 = vmatpush1.bf16.msra.mxu0 %v283
  %328 = vmatprep.subr.bf16.mxu0 0
  %329 = vmatpush1.bf16.msra.mxu0 %v282
  %330 = vmatprep.subr.bf16.mxu0 0
  %331 = vmatpush2.bf16.msra.mxu0 %v297
  %332 = vmatprep.subr.bf16.mxu0 0
  %333 = vmatpush2.bf16.msra.mxu0 %v296
  %334 = vmatprep.subr.bf16.mxu0 0
  %335 = vmatpush2.bf16.msra.mxu0 %v295
  %336 = vmatprep.subr.bf16.mxu0 0
  %337 = vmatpush2.bf16.msra.mxu0 %v294
  %338 = vmatprep.subr.bf16.mxu0 0
  %339 = vmatpush2.bf16.msra.mxu0 %v293
  %340 = vmatprep.subr.bf16.mxu0 0
  %341 = vmatpush2.bf16.msra.mxu0 %v292
  %342 = vmatprep.subr.bf16.mxu0 0
  %343 = vmatpush2.bf16.msra.mxu0 %v291
  %344 = vmatprep.subr.bf16.mxu0 0
  %345 = vmatpush2.bf16.msra.mxu0 %v290
  %346 = vmatprep.mubr.bf16.mxu0 %v175
  %347 = vmatmul.mubr.bf16.gmra.mxu0 %v174
  %v348 = vpop.f32.mrf.mxu0
  %v349 = vadd.f32 %v109, %v348
  %v350 = vpop.f32.mrf.mxu0
  %v351 = vpop.f32.mrf.mxu0
  %v352 = vadd.f32 %v109, %v351
  %v353 = vpop.f32.mrf.mxu0
  %354 = vmatprep.mubr.bf16.mxu0 %v177
  %355 = vmatmul.mubr.bf16.gmra.mxu0 %v176
  %v356 = vpop.f32.mrf.mxu0
  %v357 = vadd.f32 %v109, %v356
  %v358 = vpop.f32.mrf.mxu0
  %v359 = vpop.f32.mrf.mxu0
  %v360 = vadd.f32 %v109, %v359
  %v361 = vpop.f32.mrf.mxu0
  %362 = vmatprep.mubr.bf16.mxu0 %v179
  %363 = vmatmul.mubr.bf16.gmra.mxu0 %v178
  %v364 = vpop.f32.mrf.mxu0
  %v365 = vadd.f32 %v109, %v364
  %v366 = vpop.f32.mrf.mxu0
  %v367 = vpop.f32.mrf.mxu0
  %v368 = vadd.f32 %v109, %v367
  %v369 = vpop.f32.mrf.mxu0
  %370 = vmatprep.mubr.bf16.mxu0 %v181
  %371 = vmatmul.mubr.bf16.gmra.mxu0 %v180
  %v372 = vpop.f32.mrf.mxu0
  %v373 = vadd.f32 %v109, %v372
  %v374 = vpop.f32.mrf.mxu0
  %v375 = vpop.f32.mrf.mxu0
  %v376 = vadd.f32 %v109, %v375
  %v377 = vpop.f32.mrf.mxu0
  %378 = vmatprep.mubr.bf16.mxu0 %v183
  %379 = vmatmul.mubr.bf16.gmra.mxu0 %v182
  %v380 = vpop.f32.mrf.mxu0
  %v381 = vadd.f32 %v109, %v380
  %v382 = vpop.f32.mrf.mxu0
  %v383 = vpop.f32.mrf.mxu0
  %v384 = vadd.f32 %v109, %v383
  %v385 = vpop.f32.mrf.mxu0
  %386 = vmatprep.mubr.bf16.mxu0 %v185
  %387 = vmatmul.mubr.bf16.gmra.mxu0 %v184
  %v388 = vpop.f32.mrf.mxu0
  %v389 = vadd.f32 %v109, %v388
  %v390 = vpop.f32.mrf.mxu0
  %v391 = vpop.f32.mrf.mxu0
  %v392 = vadd.f32 %v109, %v391
  %v393 = vpop.f32.mrf.mxu0
  %394 = vmatprep.mubr.bf16.mxu0 %v187
  %395 = vmatmul.mubr.bf16.gmra.mxu0 %v186
  %v396 = vpop.f32.mrf.mxu0
  %v397 = vadd.f32 %v109, %v396
  %v398 = vpop.f32.mrf.mxu0
  %v399 = vpop.f32.mrf.mxu0
  %v400 = vadd.f32 %v109, %v399
  %v401 = vpop.f32.mrf.mxu0
  %402 = vmatprep.mubr.bf16.mxu0 %v189
  %403 = vmatmul.mubr.bf16.gmra.mxu0 %v188
  %v404 = vpop.f32.mrf.mxu0
  %v405 = vadd.f32 %v109, %v404
  %v406 = vpop.f32.mrf.mxu0
  %v407 = vpop.f32.mrf.mxu0
  %v408 = vadd.f32 %v109, %v407
  %v409 = vpop.f32.mrf.mxu0
  %410 = vmatprep.mubr.bf16.mxu0 %v191
  %411 = vmatmul.mubr.bf16.gmra.mxu0 %v190
  %v412 = vpop.f32.mrf.mxu0
  %v413 = vadd.f32 %v109, %v412
  %v414 = vpop.f32.mrf.mxu0
  %v415 = vpop.f32.mrf.mxu0
  %v416 = vadd.f32 %v109, %v415
  %v417 = vpop.f32.mrf.mxu0
  %418 = vmatprep.mubr.bf16.mxu0 %v193
  %419 = vmatmul.mubr.bf16.gmra.mxu0 %v192
  %v420 = vpop.f32.mrf.mxu0
  %v421 = vadd.f32 %v109, %v420
  %v422 = vpop.f32.mrf.mxu0
  %v423 = vpop.f32.mrf.mxu0
  %v424 = vadd.f32 %v109, %v423
  %v425 = vpop.f32.mrf.mxu0
  %426 = vmatprep.mubr.bf16.mxu0 %v195
  %427 = vmatmul.mubr.bf16.gmra.mxu0 %v194
  %v428 = vpop.f32.mrf.mxu0
  %v429 = vadd.f32 %v109, %v428
  %v430 = vpop.f32.mrf.mxu0
  %v431 = vpop.f32.mrf.mxu0
  %v432 = vpop.f32.mrf.mxu0
  %433 = vdwg.mxu0
  %v434 = vmax.f32 %v349, 0.0
  %v435 = vmax.f32 %v352, 0.0
  %v436 = vmax.f32 %v357, 0.0
  %v437 = vmax.f32 %v360, 0.0
  %v438 = vmax.f32 %v365, 0.0
  %v439 = vmax.f32 %v368, 0.0
  %v440 = vmax.f32 %v373, 0.0
  %v441 = vmax.f32 %v376, 0.0
  %v442 = vmax.f32 %v381, 0.0
  %v443 = vmax.f32 %v384, 0.0
  %v444 = vmax.f32 %v389, 0.0
  %v445 = vmax.f32 %v392, 0.0
  %v446 = vmax.f32 %v397, 0.0
  %v447 = vmax.f32 %v400, 0.0
  %v448 = vmax.f32 %v405, 0.0
  %v449 = vmax.f32 %v408, 0.0
  %v450 = vmax.f32 %v413, 0.0
  %v451 = vmax.f32 %v416, 0.0
  %v452 = vmax.f32 %v421, 0.0
  %v453 = vmax.f32 %v424, 0.0
  %v454 = vmax.f32 %v429, 0.0
  %vm455 = vcmask 523264
  %456 = vst.msk [vmem:[#allocation2] sm:$0xff] %vm455, %v434
  %457 = vst.msk [vmem:[#allocation2 + $0x8] sm:$0xff] %vm455, %v435
  %458 = vst.msk [vmem:[#allocation2 + $0x10] sm:$0xff] %vm455, %v436
  %459 = vst.msk [vmem:[#allocation2 + $0x18] sm:$0xff] %vm455, %v437
  %460 = vst.msk [vmem:[#allocation2 + $0x20] sm:$0xff] %vm455, %v438
  %461 = vst.msk [vmem:[#allocation2 + $0x28] sm:$0xff] %vm455, %v439
  %462 = vst.msk [vmem:[#allocation2 + $0x30] sm:$0xff] %vm455, %v440
  %463 = vst.msk [vmem:[#allocation2 + $0x38] sm:$0xff] %vm455, %v441
  %464 = vst.msk [vmem:[#allocation2 + $0x40] sm:$0xff] %vm455, %v442
  %465 = vst.msk [vmem:[#allocation2 + $0x48] sm:$0xff] %vm455, %v443
  %466 = vst.msk [vmem:[#allocation2 + $0x50] sm:$0xff] %vm455, %v444
  %467 = vst.msk [vmem:[#allocation2 + $0x58] sm:$0xff] %vm455, %v445
  %468 = vst.msk [vmem:[#allocation2 + $0x60] sm:$0xff] %vm455, %v446
  %469 = vst.msk [vmem:[#allocation2 + $0x68] sm:$0xff] %vm455, %v447
  %470 = vst.msk [vmem:[#allocation2 + $0x70] sm:$0xff] %vm455, %v448
  %471 = vst.msk [vmem:[#allocation2 + $0x78] sm:$0xff] %vm455, %v449
  %472 = vst.msk [vmem:[#allocation2 + $0x80] sm:$0xff] %vm455, %v450
  %473 = vst.msk [vmem:[#allocation2 + $0x88] sm:$0xff] %vm455, %v451
  %474 = vst.msk [vmem:[#allocation2 + $0x90] sm:$0xff] %vm455, %v452
  %475 = vst.msk [vmem:[#allocation2 + $0x98] sm:$0xff] %vm455, %v453
  %vm476 = vcmask 517120
  %477 = vst.msk [vmem:[#allocation2 + $0xa0] sm:$0x3] %vm476, %v454
  %v478 = vld [vmem:[%s5] sm:$0x1]
  %v479 = vld [vmem:[#allocation2] sm:$0x7]
  %v480 = vld [vmem:[#allocation2 + $0x12] sm:$0x7]
  %v481 = vld [vmem:[#allocation2 + $0x24] sm:$0x7]
  %v482 = vld [vmem:[#allocation2 + $0x51] sm:$0x7]
  %v483 = vld [vmem:[#allocation2 + $0x63] sm:$0x7]
  %v484 = vld [vmem:[#allocation2 + $0x75] sm:$0x7]
  %v486 = vrot.slane %v480, 5
  %v489 = vrot.slane %v481, 2
  %v492 = vrot.slane %v482, 7
  %v495 = vrot.slane %v483, 4
  %v498 = vrot.slane %v484, 1
  %vm500 = vcmask 1042432
  %v501 = vsel %vm500, %v479, %v486
  %vm502 = vcmask 1045504
  %v503 = vsel %vm502, %v501, %v489
  %vm504 = vcmask 1040384
  %v505 = vsel %vm504, %v489, %v492
  %vm506 = vcmask 1043456
  %v507 = vsel %vm506, %v505, %v495
  %vm508 = vcmask 1046528
  %v509 = vsel %vm508, %v507, %v498
  %v510 = vpack.c.bf16 %v509, %v503
  %v511 = vpack.c.bf16 %v498, %v498
  %v512 = vld [vmem:[%s4] sm:$0xf]
  %v513 = vld [vmem:[%s4 + $0x4] sm:$0xf]
  %v514 = vld [vmem:[%s4 + $0x8] sm:$0xf]
  %v515 = vld [vmem:[%s4 + $0xc] sm:$0xf]
  %v516 = vld [vmem:[%s4 + $0x10] sm:$0xf]
  %v517 = vld [vmem:[%s4 + $0x14] sm:$0xf]
  %v518 = vld [vmem:[%s4 + $0x18] sm:$0xf]
  %v519 = vld [vmem:[%s4 + $0x1c] sm:$0xf]
  %v520 = vld [vmem:[#allocation2 + $0x5] sm:$0x7]
  %v521 = vld [vmem:[#allocation2 + $0x17] sm:$0x7]
  %v522 = vld [vmem:[#allocation2 + $0x29] sm:$0x7]
  %v523 = vld [vmem:[#allocation2 + $0x56] sm:$0x7]
  %v524 = vld [vmem:[#allocation2 + $0x68] sm:$0x7]
  %v525 = vld [vmem:[#allocation2 + $0x7a] sm:$0x7]
  %v527 = vrot.slane %v521, 5
  %v530 = vrot.slane %v522, 2
  %v533 = vrot.slane %v523, 7
  %v536 = vrot.slane %v524, 4
  %v539 = vrot.slane %v525, 1
  %v541 = vsel %vm500, %v520, %v527
  %v542 = vsel %vm502, %v541, %v530
  %v543 = vsel %vm504, %v530, %v533
  %v544 = vsel %vm506, %v543, %v536
  %v545 = vsel %vm508, %v544, %v539
  %v546 = vpack.c.bf16 %v545, %v542
  %v547 = vpack.c.bf16 %v539, %v539
  %s548 = scalar_lea.vmem %s4, 32
  %v549 = vld [vmem:[%s548] sm:$0xf]
  %v550 = vld [vmem:[%s548 + $0x4] sm:$0xf]
  %v551 = vld [vmem:[%s548 + $0x8] sm:$0xf]
  %v552 = vld [vmem:[%s548 + $0xc] sm:$0xf]
  %v553 = vld [vmem:[%s548 + $0x10] sm:$0xf]
  %v554 = vld [vmem:[%s548 + $0x14] sm:$0xf]
  %v555 = vld [vmem:[%s548 + $0x18] sm:$0xf]
  %v556 = vld [vmem:[%s548 + $0x1c] sm:$0xf]
  %v565 = vunpack.c.l.b16 %v549
  %v566 = vunpack.c.l.b16 %v550
  %v567 = vunpack.c.l.b16 %v551
  %v568 = vunpack.c.l.b16 %v552
  %v569 = vunpack.c.l.b16 %v553
  %v570 = vunpack.c.l.b16 %v554
  %v571 = vunpack.c.l.b16 %v555
  %v572 = vunpack.c.l.b16 %v556
  %v573 = vpack.c.b16 %v566, %v565
  %v574 = vpack.c.b16 %v568, %v567
  %v575 = vpack.c.b16 %v570, %v569
  %v576 = vpack.c.b16 %v572, %v571
  %v582 = vsel %vm455, %v546, 0
  %v585 = vsel %vm455, %v547, 0
  %587 = vmatprep.subr.bf16.mxu0 0
  %588 = vmatpush1.bf16.msra.mxu0 0
  %589 = vmatprep.subr.bf16.mxu0 0
  %590 = vmatpush1.bf16.msra.mxu0 0
  %591 = vmatprep.subr.bf16.mxu0 0
  %592 = vmatpush1.bf16.msra.mxu0 0
  %593 = vmatprep.subr.bf16.mxu0 0
  %594 = vmatpush1.bf16.msra.mxu0 0
  %595 = vmatprep.subr.bf16.mxu0 0
  %596 = vmatpush1.bf16.msra.mxu0 %v576
  %597 = vmatprep.subr.bf16.mxu0 0
  %598 = vmatpush1.bf16.msra.mxu0 %v575
  %599 = vmatprep.subr.bf16.mxu0 0
  %600 = vmatpush1.bf16.msra.mxu0 %v574
  %601 = vmatprep.subr.bf16.mxu0 0
  %602 = vmatpush1.bf16.msra.mxu0 %v573
  %603 = vmatprep.subr.bf16.mxu0 0
  %604 = vmatpush2.bf16.msra.mxu0 0
  %605 = vmatprep.subr.bf16.mxu0 0
  %606 = vmatpush2.bf16.msra.mxu0 0
  %607 = vmatprep.subr.bf16.mxu0 0
  %608 = vmatpush2.bf16.msra.mxu0 0
  %609 = vmatprep.subr.bf16.mxu0 0
  %610 = vmatpush2.bf16.msra.mxu0 0
  %611 = vmatprep.subr.bf16.mxu0 0
  %612 = vmatpush2.bf16.msra.mxu0 0
  %613 = vmatprep.subr.bf16.mxu0 0
  %614 = vmatpush2.bf16.msra.mxu0 0
  %615 = vmatprep.subr.bf16.mxu0 0
  %616 = vmatpush2.bf16.msra.mxu0 0
  %617 = vmatprep.subr.bf16.mxu0 0
  %618 = vmatpush2.bf16.msra.mxu0 0
  %619 = vmatprep.mubr.bf16.mxu0 0
  %620 = vmatmul.mubr.bf16.gmra.mxu0 %v582
  %v621 = vpop.f32.mrf.mxu0
  %v622 = vadd.f32 0.0, %v621
  %v623 = vpop.f32.mrf.mxu0
  %v624 = vpop.f32.mrf.mxu0
  %v625 = vadd.f32 0.0, %v624
  %v626 = vpop.f32.mrf.mxu0
  %627 = vmatprep.mubr.bf16.mxu0 0
  %628 = vmatmul.mubr.bf16.gmra.mxu0 %v585
  %v629 = vpop.f32.mrf.mxu0
  %v630 = vadd.f32 0.0, %v629
  %v631 = vpop.f32.mrf.mxu0
  %v632 = vpop.f32.mrf.mxu0
  %v633 = vpop.f32.mrf.mxu0
  %634 = vdwg.mxu0
  %v643 = vunpack.c.l.b16 %v512
  %v644 = vunpack.c.l.b16 %v513
  %v645 = vunpack.c.l.b16 %v514
  %v646 = vunpack.c.l.b16 %v515
  %v647 = vunpack.c.l.b16 %v516
  %v648 = vunpack.c.l.b16 %v517
  %v649 = vunpack.c.l.b16 %v518
  %v650 = vunpack.c.l.b16 %v519
  %v651 = vpack.c.b16 %v644, %v643
  %v652 = vpack.c.b16 %v646, %v645
  %v653 = vpack.c.b16 %v648, %v647
  %v654 = vpack.c.b16 %v650, %v649
  %v660 = vsel %vm455, %v510, 0
  %v663 = vsel %vm455, %v511, 0
  %665 = vmatprep.subr.bf16.mxu0 0
  %666 = vmatpush1.bf16.msra.mxu0 0
  %667 = vmatprep.subr.bf16.mxu0 0
  %668 = vmatpush1.bf16.msra.mxu0 0
  %669 = vmatprep.subr.bf16.mxu0 0
  %670 = vmatpush1.bf16.msra.mxu0 0
  %671 = vmatprep.subr.bf16.mxu0 0
  %672 = vmatpush1.bf16.msra.mxu0 0
  %673 = vmatprep.subr.bf16.mxu0 0
  %674 = vmatpush1.bf16.msra.mxu0 %v654
  %675 = vmatprep.subr.bf16.mxu0 0
  %676 = vmatpush1.bf16.msra.mxu0 %v653
  %677 = vmatprep.subr.bf16.mxu0 0
  %678 = vmatpush1.bf16.msra.mxu0 %v652
  %679 = vmatprep.subr.bf16.mxu0 0
  %680 = vmatpush1.bf16.msra.mxu0 %v651
  %681 = vmatprep.subr.bf16.mxu0 0
  %682 = vmatpush2.bf16.msra.mxu0 0
  %683 = vmatprep.subr.bf16.mxu0 0
  %684 = vmatpush2.bf16.msra.mxu0 0
  %685 = vmatprep.subr.bf16.mxu0 0
  %686 = vmatpush2.bf16.msra.mxu0 0
  %687 = vmatprep.subr.bf16.mxu0 0
  %688 = vmatpush2.bf16.msra.mxu0 0
  %689 = vmatprep.subr.bf16.mxu0 0
  %690 = vmatpush2.bf16.msra.mxu0 0
  %691 = vmatprep.subr.bf16.mxu0 0
  %692 = vmatpush2.bf16.msra.mxu0 0
  %693 = vmatprep.subr.bf16.mxu0 0
  %694 = vmatpush2.bf16.msra.mxu0 0
  %695 = vmatprep.subr.bf16.mxu0 0
  %696 = vmatpush2.bf16.msra.mxu0 0
  %697 = vmatprep.mubr.bf16.mxu0 0
  %698 = vmatmul.mubr.bf16.gmra.mxu0 %v660
  %v699 = vpop.f32.mrf.mxu0
  %v700 = vadd.f32 %v622, %v699
  %v701 = vpop.f32.mrf.mxu0
  %v702 = vpop.f32.mrf.mxu0
  %v703 = vadd.f32 %v625, %v702
  %v704 = vpop.f32.mrf.mxu0
  %705 = vmatprep.mubr.bf16.mxu0 0
  %706 = vmatmul.mubr.bf16.gmra.mxu0 %v663
  %v707 = vpop.f32.mrf.mxu0
  %v708 = vadd.f32 %v630, %v707
  %v709 = vpop.f32.mrf.mxu0
  %v710 = vpop.f32.mrf.mxu0
  %v711 = vpop.f32.mrf.mxu0
  %712 = vdwg.mxu0
  %v713 = vld [vmem:[#allocation2 + $0x1] sm:$0x7]
  %v714 = vld [vmem:[#allocation2 + $0x13] sm:$0x7]
  %v715 = vld [vmem:[#allocation2 + $0x25] sm:$0x7]
  %v716 = vld [vmem:[#allocation2 + $0x52] sm:$0x7]
  %v717 = vld [vmem:[#allocation2 + $0x64] sm:$0x7]
  %v718 = vld [vmem:[#allocation2 + $0x76] sm:$0x7]
  %v720 = vrot.slane %v714, 5
  %v723 = vrot.slane %v715, 2
  %v726 = vrot.slane %v716, 7
  %v729 = vrot.slane %v717, 4
  %v732 = vrot.slane %v718, 1
  %v734 = vsel %vm500, %v713, %v720
  %v735 = vsel %vm502, %v734, %v723
  %v736 = vsel %vm504, %v723, %v726
  %v737 = vsel %vm506, %v736, %v729
  %v738 = vsel %vm508, %v737, %v732
  %v739 = vpack.c.bf16 %v738, %v735
  %v740 = vpack.c.bf16 %v732, %v732
  %s741 = scalar_lea.vmem %s4, 64
  %v742 = vld [vmem:[%s741] sm:$0xf]
  %v743 = vld [vmem:[%s741 + $0x4] sm:$0xf]
  %v744 = vld [vmem:[%s741 + $0x8] sm:$0xf]
  %v745 = vld [vmem:[%s741 + $0xc] sm:$0xf]
  %v746 = vld [vmem:[%s741 + $0x10] sm:$0xf]
  %v747 = vld [vmem:[%s741 + $0x14] sm:$0xf]
  %v748 = vld [vmem:[%s741 + $0x18] sm:$0xf]
  %v749 = vld [vmem:[%s741 + $0x1c] sm:$0xf]
  %v758 = vunpack.c.l.b16 %v742
  %v759 = vunpack.c.l.b16 %v743
  %v760 = vunpack.c.l.b16 %v744
  %v761 = vunpack.c.l.b16 %v745
  %v762 = vunpack.c.l.b16 %v746
  %v763 = vunpack.c.l.b16 %v747
  %v764 = vunpack.c.l.b16 %v748
  %v765 = vunpack.c.l.b16 %v749
  %v766 = vpack.c.b16 %v759, %v758
  %v767 = vpack.c.b16 %v761, %v760
  %v768 = vpack.c.b16 %v763, %v762
  %v769 = vpack.c.b16 %v765, %v764
  %v775 = vsel %vm455, %v739, 0
  %v778 = vsel %vm455, %v740, 0
  %780 = vmatprep.subr.bf16.mxu0 0
  %781 = vmatpush1.bf16.msra.mxu0 0
  %782 = vmatprep.subr.bf16.mxu0 0
  %783 = vmatpush1.bf16.msra.mxu0 0
  %784 = vmatprep.subr.bf16.mxu0 0
  %785 = vmatpush1.bf16.msra.mxu0 0
  %786 = vmatprep.subr.bf16.mxu0 0
  %787 = vmatpush1.bf16.msra.mxu0 0
  %788 = vmatprep.subr.bf16.mxu0 0
  %789 = vmatpush1.bf16.msra.mxu0 %v769
  %790 = vmatprep.subr.bf16.mxu0 0
  %791 = vmatpush1.bf16.msra.mxu0 %v768
  %792 = vmatprep.subr.bf16.mxu0 0
  %793 = vmatpush1.bf16.msra.mxu0 %v767
  %794 = vmatprep.subr.bf16.mxu0 0
  %795 = vmatpush1.bf16.msra.mxu0 %v766
  %796 = vmatprep.subr.bf16.mxu0 0
  %797 = vmatpush2.bf16.msra.mxu0 0
  %798 = vmatprep.subr.bf16.mxu0 0
  %799 = vmatpush2.bf16.msra.mxu0 0
  %800 = vmatprep.subr.bf16.mxu0 0
  %801 = vmatpush2.bf16.msra.mxu0 0
  %802 = vmatprep.subr.bf16.mxu0 0
  %803 = vmatpush2.bf16.msra.mxu0 0
  %804 = vmatprep.subr.bf16.mxu0 0
  %805 = vmatpush2.bf16.msra.mxu0 0
  %806 = vmatprep.subr.bf16.mxu0 0
  %807 = vmatpush2.bf16.msra.mxu0 0
  %808 = vmatprep.subr.bf16.mxu0 0
  %809 = vmatpush2.bf16.msra.mxu0 0
  %810 = vmatprep.subr.bf16.mxu0 0
  %811 = vmatpush2.bf16.msra.mxu0 0
  %812 = vmatprep.mubr.bf16.mxu0 0
  %813 = vmatmul.mubr.bf16.gmra.mxu0 %v775
  %v814 = vpop.f32.mrf.mxu0
  %v815 = vadd.f32 0.0, %v814
  %v816 = vpop.f32.mrf.mxu0
  %v817 = vpop.f32.mrf.mxu0
  %v818 = vadd.f32 0.0, %v817
  %v819 = vpop.f32.mrf.mxu0
  %820 = vmatprep.mubr.bf16.mxu0 0
  %821 = vmatmul.mubr.bf16.gmra.mxu0 %v778
  %v822 = vpop.f32.mrf.mxu0
  %v823 = vadd.f32 0.0, %v822
  %v824 = vpop.f32.mrf.mxu0
  %v825 = vpop.f32.mrf.mxu0
  %v826 = vpop.f32.mrf.mxu0
  %827 = vdwg.mxu0
  %v828 = vadd.f32 %v700, %v815
  %v829 = vadd.f32 %v703, %v818
  %v830 = vadd.f32 %v708, %v823
  %v831 = vld [vmem:[#allocation2 + $0x6] sm:$0x7]
  %v832 = vld [vmem:[#allocation2 + $0x18] sm:$0x7]
  %v833 = vld [vmem:[#allocation2 + $0x2a] sm:$0x7]
  %v834 = vld [vmem:[#allocation2 + $0x57] sm:$0x7]
  %v835 = vld [vmem:[#allocation2 + $0x69] sm:$0x7]
  %v836 = vld [vmem:[#allocation2 + $0x7b] sm:$0x7]
  %v838 = vrot.slane %v832, 5
  %v841 = vrot.slane %v833, 2
  %v844 = vrot.slane %v834, 7
  %v847 = vrot.slane %v835, 4
  %v850 = vrot.slane %v836, 1
  %v852 = vsel %vm500, %v831, %v838
  %v853 = vsel %vm502, %v852, %v841
  %v854 = vsel %vm504, %v841, %v844
  %v855 = vsel %vm506, %v854, %v847
  %v856 = vsel %vm508, %v855, %v850
  %v857 = vpack.c.bf16 %v856, %v853
  %v858 = vpack.c.bf16 %v850, %v850
  %s859 = scalar_lea.vmem %s4, 96
  %v860 = vld [vmem:[%s859] sm:$0xf]
  %v861 = vld [vmem:[%s859 + $0x4] sm:$0xf]
  %v862 = vld [vmem:[%s859 + $0x8] sm:$0xf]
  %v863 = vld [vmem:[%s859 + $0xc] sm:$0xf]
  %v864 = vld [vmem:[%s859 + $0x10] sm:$0xf]
  %v865 = vld [vmem:[%s859 + $0x14] sm:$0xf]
  %v866 = vld [vmem:[%s859 + $0x18] sm:$0xf]
  %v867 = vld [vmem:[%s859 + $0x1c] sm:$0xf]
  %v876 = vunpack.c.l.b16 %v860
  %v877 = vunpack.c.l.b16 %v861
  %v878 = vunpack.c.l.b16 %v862
  %v879 = vunpack.c.l.b16 %v863
  %v880 = vunpack.c.l.b16 %v864
  %v881 = vunpack.c.l.b16 %v865
  %v882 = vunpack.c.l.b16 %v866
  %v883 = vunpack.c.l.b16 %v867
  %v884 = vpack.c.b16 %v877, %v876
  %v885 = vpack.c.b16 %v879, %v878
  %v886 = vpack.c.b16 %v881, %v880
  %v887 = vpack.c.b16 %v883, %v882
  %v893 = vsel %vm455, %v857, 0
  %v896 = vsel %vm455, %v858, 0
  %898 = vmatprep.subr.bf16.mxu0 0
  %899 = vmatpush1.bf16.msra.mxu0 0
  %900 = vmatprep.subr.bf16.mxu0 0
  %901 = vmatpush1.bf16.msra.mxu0 0
  %902 = vmatprep.subr.bf16.mxu0 0
  %903 = vmatpush1.bf16.msra.mxu0 0
  %904 = vmatprep.subr.bf16.mxu0 0
  %905 = vmatpush1.bf16.msra.mxu0 0
  %906 = vmatprep.subr.bf16.mxu0 0
  %907 = vmatpush1.bf16.msra.mxu0 %v887
  %908 = vmatprep.subr.bf16.mxu0 0
  %909 = vmatpush1.bf16.msra.mxu0 %v886
  %910 = vmatprep.subr.bf16.mxu0 0
  %911 = vmatpush1.bf16.msra.mxu0 %v885
  %912 = vmatprep.subr.bf16.mxu0 0
  %913 = vmatpush1.bf16.msra.mxu0 %v884
  %914 = vmatprep.subr.bf16.mxu0 0
  %915 = vmatpush2.bf16.msra.mxu0 0
  %916 = vmatprep.subr.bf16.mxu0 0
  %917 = vmatpush2.bf16.msra.mxu0 0
  %918 = vmatprep.subr.bf16.mxu0 0
  %919 = vmatpush2.bf16.msra.mxu0 0
  %920 = vmatprep.subr.bf16.mxu0 0
  %921 = vmatpush2.bf16.msra.mxu0 0
  %922 = vmatprep.subr.bf16.mxu0 0
  %923 = vmatpush2.bf16.msra.mxu0 0
  %924 = vmatprep.subr.bf16.mxu0 0
  %925 = vmatpush2.bf16.msra.mxu0 0
  %926 = vmatprep.subr.bf16.mxu0 0
  %927 = vmatpush2.bf16.msra.mxu0 0
  %928 = vmatprep.subr.bf16.mxu0 0
  %929 = vmatpush2.bf16.msra.mxu0 0
  %930 = vmatprep.mubr.bf16.mxu0 0
  %931 = vmatmul.mubr.bf16.gmra.mxu0 %v893
  %v932 = vpop.f32.mrf.mxu0
  %v933 = vadd.f32 0.0, %v932
  %v934 = vpop.f32.mrf.mxu0
  %v935 = vpop.f32.mrf.mxu0
  %v936 = vadd.f32 0.0, %v935
  %v937 = vpop.f32.mrf.mxu0
  %938 = vmatprep.mubr.bf16.mxu0 0
  %939 = vmatmul.mubr.bf16.gmra.mxu0 %v896
  %v940 = vpop.f32.mrf.mxu0
  %v941 = vadd.f32 0.0, %v940
  %v942 = vpop.f32.mrf.mxu0
  %v943 = vpop.f32.mrf.mxu0
  %v944 = vpop.f32.mrf.mxu0
  %945 = vdwg.mxu0
  %v946 = vadd.f32 %v828, %v933
  %v947 = vadd.f32 %v829, %v936
  %v948 = vadd.f32 %v830, %v941
  %v949 = vld [vmem:[#allocation2 + $0x9] sm:$0x7]
  %v950 = vld [vmem:[#allocation2 + $0x1b] sm:$0x7]
  %v951 = vld [vmem:[#allocation2 + $0x2d] sm:$0x7]
  %v952 = vld [vmem:[#allocation2 + $0x5a] sm:$0x7]
  %v953 = vld [vmem:[#allocation2 + $0x6c] sm:$0x7]
  %v954 = vld [vmem:[#allocation2 + $0x7e] sm:$0x7]
  %v956 = vrot.slane %v950, 5
  %v959 = vrot.slane %v951, 2
  %v962 = vrot.slane %v952, 7
  %v965 = vrot.slane %v953, 4
  %v968 = vrot.slane %v954, 1
  %v970 = vsel %vm500, %v949, %v956
  %v971 = vsel %vm502, %v970, %v959
  %v972 = vsel %vm504, %v959, %v962
  %v973 = vsel %vm506, %v972, %v965
  %v974 = vsel %vm508, %v973, %v968
  %v975 = vpack.c.bf16 %v974, %v971
  %v976 = vpack.c.bf16 %v968, %v968
  %s977 = scalar_lea.vmem %s4, 128
  %v978 = vld [vmem:[%s977] sm:$0xf]
  %v979 = vld [vmem:[%s977 + $0x4] sm:$0xf]
  %v980 = vld [vmem:[%s977 + $0x8] sm:$0xf]
  %v981 = vld [vmem:[%s977 + $0xc] sm:$0xf]
  %v982 = vld [vmem:[%s977 + $0x10] sm:$0xf]
  %v983 = vld [vmem:[%s977 + $0x14] sm:$0xf]
  %v984 = vld [vmem:[%s977 + $0x18] sm:$0xf]
  %v985 = vld [vmem:[%s977 + $0x1c] sm:$0xf]
  %v994 = vunpack.c.l.b16 %v978
  %v995 = vunpack.c.l.b16 %v979
  %v996 = vunpack.c.l.b16 %v980
  %v997 = vunpack.c.l.b16 %v981
  %v998 = vunpack.c.l.b16 %v982
  %v999 = vunpack.c.l.b16 %v983
  %v1000 = vunpack.c.l.b16 %v984
  %v1001 = vunpack.c.l.b16 %v985
  %v1002 = vpack.c.b16 %v995, %v994
  %v1003 = vpack.c.b16 %v997, %v996
  %v1004 = vpack.c.b16 %v999, %v998
  %v1005 = vpack.c.b16 %v1001, %v1000
  %v1011 = vsel %vm455, %v975, 0
  %v1014 = vsel %vm455, %v976, 0
  %1016 = vmatprep.subr.bf16.mxu0 0
  %1017 = vmatpush1.bf16.msra.mxu0 0
  %1018 = vmatprep.subr.bf16.mxu0 0
  %1019 = vmatpush1.bf16.msra.mxu0 0
  %1020 = vmatprep.subr.bf16.mxu0 0
  %1021 = vmatpush1.bf16.msra.mxu0 0
  %1022 = vmatprep.subr.bf16.mxu0 0
  %1023 = vmatpush1.bf16.msra.mxu0 0
  %1024 = vmatprep.subr.bf16.mxu0 0
  %1025 = vmatpush1.bf16.msra.mxu0 %v1005
  %1026 = vmatprep.subr.bf16.mxu0 0
  %1027 = vmatpush1.bf16.msra.mxu0 %v1004
  %1028 = vmatprep.subr.bf16.mxu0 0
  %1029 = vmatpush1.bf16.msra.mxu0 %v1003
  %1030 = vmatprep.subr.bf16.mxu0 0
  %1031 = vmatpush1.bf16.msra.mxu0 %v1002
  %1032 = vmatprep.subr.bf16.mxu0 0
  %1033 = vmatpush2.bf16.msra.mxu0 0
  %1034 = vmatprep.subr.bf16.mxu0 0
  %1035 = vmatpush2.bf16.msra.mxu0 0
  %1036 = vmatprep.subr.bf16.mxu0 0
  %1037 = vmatpush2.bf16.msra.mxu0 0
  %1038 = vmatprep.subr.bf16.mxu0 0
  %1039 = vmatpush2.bf16.msra.mxu0 0
  %1040 = vmatprep.subr.bf16.mxu0 0
  %1041 = vmatpush2.bf16.msra.mxu0 0
  %1042 = vmatprep.subr.bf16.mxu0 0
  %1043 = vmatpush2.bf16.msra.mxu0 0
  %1044 = vmatprep.subr.bf16.mxu0 0
  %1045 = vmatpush2.bf16.msra.mxu0 0
  %1046 = vmatprep.subr.bf16.mxu0 0
  %1047 = vmatpush2.bf16.msra.mxu0 0
  %1048 = vmatprep.mubr.bf16.mxu0 0
  %1049 = vmatmul.mubr.bf16.gmra.mxu0 %v1011
  %v1050 = vpop.f32.mrf.mxu0
  %v1051 = vadd.f32 0.0, %v1050
  %v1052 = vpop.f32.mrf.mxu0
  %v1053 = vpop.f32.mrf.mxu0
  %v1054 = vadd.f32 0.0, %v1053
  %v1055 = vpop.f32.mrf.mxu0
  %1056 = vmatprep.mubr.bf16.mxu0 0
  %1057 = vmatmul.mubr.bf16.gmra.mxu0 %v1014
  %v1058 = vpop.f32.mrf.mxu0
  %v1059 = vadd.f32 0.0, %v1058
  %v1060 = vpop.f32.mrf.mxu0
  %v1061 = vpop.f32.mrf.mxu0
  %v1062 = vpop.f32.mrf.mxu0
  %1063 = vdwg.mxu0
  %v1064 = vadd.f32 %v946, %v1051
  %v1065 = vadd.f32 %v947, %v1054
  %v1066 = vadd.f32 %v948, %v1059
  %v1067 = vld [vmem:[#allocation2 + $0xe] sm:$0x7]
  %v1068 = vld [vmem:[#allocation2 + $0x20] sm:$0x7]
  %v1069 = vld [vmem:[#allocation2 + $0x32] sm:$0x7]
  %v1070 = vld [vmem:[#allocation2 + $0x5f] sm:$0x7]
  %v1071 = vld [vmem:[#allocation2 + $0x71] sm:$0x7]
  %v1072 = vld [vmem:[#allocation2 + $0x83] sm:$0x7]
  %v1074 = vrot.slane %v1068, 5
  %v1077 = vrot.slane %v1069, 2
  %v1080 = vrot.slane %v1070, 7
  %v1083 = vrot.slane %v1071, 4
  %v1086 = vrot.slane %v1072, 1
  %v1088 = vsel %vm500, %v1067, %v1074
  %v1089 = vsel %vm502, %v1088, %v1077
  %v1090 = vsel %vm504, %v1077, %v1080
  %v1091 = vsel %vm506, %v1090, %v1083
  %v1092 = vsel %vm508, %v1091, %v1086
  %v1093 = vpack.c.bf16 %v1092, %v1089
  %v1094 = vpack.c.bf16 %v1086, %v1086
  %s1095 = scalar_lea.vmem %s4, 160
  %v1096 = vld [vmem:[%s1095] sm:$0xf]
  %v1097 = vld [vmem:[%s1095 + $0x4] sm:$0xf]
  %v1098 = vld [vmem:[%s1095 + $0x8] sm:$0xf]
  %v1099 = vld [vmem:[%s1095 + $0xc] sm:$0xf]
  %v1100 = vld [vmem:[%s1095 + $0x10] sm:$0xf]
  %v1101 = vld [vmem:[%s1095 + $0x14] sm:$0xf]
  %v1102 = vld [vmem:[%s1095 + $0x18] sm:$0xf]
  %v1103 = vld [vmem:[%s1095 + $0x1c] sm:$0xf]
  %v1112 = vunpack.c.l.b16 %v1096
  %v1113 = vunpack.c.l.b16 %v1097
  %v1114 = vunpack.c.l.b16 %v1098
  %v1115 = vunpack.c.l.b16 %v1099
  %v1116 = vunpack.c.l.b16 %v1100
  %v1117 = vunpack.c.l.b16 %v1101
  %v1118 = vunpack.c.l.b16 %v1102
  %v1119 = vunpack.c.l.b16 %v1103
  %v1120 = vpack.c.b16 %v1113, %v1112
  %v1121 = vpack.c.b16 %v1115, %v1114
  %v1122 = vpack.c.b16 %v1117, %v1116
  %v1123 = vpack.c.b16 %v1119, %v1118
  %v1129 = vsel %vm455, %v1093, 0
  %v1132 = vsel %vm455, %v1094, 0
  %1134 = vmatprep.subr.bf16.mxu0 0
  %1135 = vmatpush1.bf16.msra.mxu0 0
  %1136 = vmatprep.subr.bf16.mxu0 0
  %1137 = vmatpush1.bf16.msra.mxu0 0
  %1138 = vmatprep.subr.bf16.mxu0 0
  %1139 = vmatpush1.bf16.msra.mxu0 0
  %1140 = vmatprep.subr.bf16.mxu0 0
  %1141 = vmatpush1.bf16.msra.mxu0 0
  %1142 = vmatprep.subr.bf16.mxu0 0
  %1143 = vmatpush1.bf16.msra.mxu0 %v1123
  %1144 = vmatprep.subr.bf16.mxu0 0
  %1145 = vmatpush1.bf16.msra.mxu0 %v1122
  %1146 = vmatprep.subr.bf16.mxu0 0
  %1147 = vmatpush1.bf16.msra.mxu0 %v1121
  %1148 = vmatprep.subr.bf16.mxu0 0
  %1149 = vmatpush1.bf16.msra.mxu0 %v1120
  %1150 = vmatprep.subr.bf16.mxu0 0
  %1151 = vmatpush2.bf16.msra.mxu0 0
  %1152 = vmatprep.subr.bf16.mxu0 0
  %1153 = vmatpush2.bf16.msra.mxu0 0
  %1154 = vmatprep.subr.bf16.mxu0 0
  %1155 = vmatpush2.bf16.msra.mxu0 0
  %1156 = vmatprep.subr.bf16.mxu0 0
  %1157 = vmatpush2.bf16.msra.mxu0 0
  %1158 = vmatprep.subr.bf16.mxu0 0
  %1159 = vmatpush2.bf16.msra.mxu0 0
  %1160 = vmatprep.subr.bf16.mxu0 0
  %1161 = vmatpush2.bf16.msra.mxu0 0
  %1162 = vmatprep.subr.bf16.mxu0 0
  %1163 = vmatpush2.bf16.msra.mxu0 0
  %1164 = vmatprep.subr.bf16.mxu0 0
  %1165 = vmatpush2.bf16.msra.mxu0 0
  %1166 = vmatprep.mubr.bf16.mxu0 0
  %1167 = vmatmul.mubr.bf16.gmra.mxu0 %v1129
  %v1168 = vpop.f32.mrf.mxu0
  %v1169 = vadd.f32 0.0, %v1168
  %v1170 = vpop.f32.mrf.mxu0
  %v1171 = vpop.f32.mrf.mxu0
  %v1172 = vadd.f32 0.0, %v1171
  %v1173 = vpop.f32.mrf.mxu0
  %1174 = vmatprep.mubr.bf16.mxu0 0
  %1175 = vmatmul.mubr.bf16.gmra.mxu0 %v1132
  %v1176 = vpop.f32.mrf.mxu0
  %v1177 = vadd.f32 0.0, %v1176
  %v1178 = vpop.f32.mrf.mxu0
  %v1179 = vpop.f32.mrf.mxu0
  %v1180 = vpop.f32.mrf.mxu0
  %1181 = vdwg.mxu0
  %v1182 = vadd.f32 %v1064, %v1169
  %v1183 = vadd.f32 %v1065, %v1172
  %v1184 = vadd.f32 %v1066, %v1177
  %v1185 = vld [vmem:[#allocation2 + $0xa] sm:$0x7]
  %v1186 = vld [vmem:[#allocation2 + $0x1c] sm:$0x7]
  %v1187 = vld [vmem:[#allocation2 + $0x2e] sm:$0x7]
  %v1188 = vld [vmem:[#allocation2 + $0x5b] sm:$0x7]
  %v1189 = vld [vmem:[#allocation2 + $0x6d] sm:$0x7]
  %v1190 = vld [vmem:[#allocation2 + $0x7f] sm:$0x7]
  %v1192 = vrot.slane %v1186, 5
  %v1195 = vrot.slane %v1187, 2
  %v1198 = vrot.slane %v1188, 7
  %v1201 = vrot.slane %v1189, 4
  %v1204 = vrot.slane %v1190, 1
  %v1206 = vsel %vm500, %v1185, %v1192
  %v1207 = vsel %vm502, %v1206, %v1195
  %v1208 = vsel %vm504, %v1195, %v1198
  %v1209 = vsel %vm506, %v1208, %v1201
  %v1210 = vsel %vm508, %v1209, %v1204
  %v1211 = vpack.c.bf16 %v1210, %v1207
  %v1212 = vpack.c.bf16 %v1204, %v1204
  %s1213 = scalar_lea.vmem %s4, 192
  %v1214 = vld [vmem:[%s1213] sm:$0xf]
  %v1215 = vld [vmem:[%s1213 + $0x4] sm:$0xf]
  %v1216 = vld [vmem:[%s1213 + $0x8] sm:$0xf]
  %v1217 = vld [vmem:[%s1213 + $0xc] sm:$0xf]
  %v1218 = vld [vmem:[%s1213 + $0x10] sm:$0xf]
  %v1219 = vld [vmem:[%s1213 + $0x14] sm:$0xf]
  %v1220 = vld [vmem:[%s1213 + $0x18] sm:$0xf]
  %v1221 = vld [vmem:[%s1213 + $0x1c] sm:$0xf]
  %v1230 = vunpack.c.l.b16 %v1214
  %v1231 = vunpack.c.l.b16 %v1215
  %v1232 = vunpack.c.l.b16 %v1216
  %v1233 = vunpack.c.l.b16 %v1217
  %v1234 = vunpack.c.l.b16 %v1218
  %v1235 = vunpack.c.l.b16 %v1219
  %v1236 = vunpack.c.l.b16 %v1220
  %v1237 = vunpack.c.l.b16 %v1221
  %v1238 = vpack.c.b16 %v1231, %v1230
  %v1239 = vpack.c.b16 %v1233, %v1232
  %v1240 = vpack.c.b16 %v1235, %v1234
  %v1241 = vpack.c.b16 %v1237, %v1236
  %v1247 = vsel %vm455, %v1211, 0
  %v1250 = vsel %vm455, %v1212, 0
  %1252 = vmatprep.subr.bf16.mxu0 0
  %1253 = vmatpush1.bf16.msra.mxu0 0
  %1254 = vmatprep.subr.bf16.mxu0 0
  %1255 = vmatpush1.bf16.msra.mxu0 0
  %1256 = vmatprep.subr.bf16.mxu0 0
  %1257 = vmatpush1.bf16.msra.mxu0 0
  %1258 = vmatprep.subr.bf16.mxu0 0
  %1259 = vmatpush1.bf16.msra.mxu0 0
  %1260 = vmatprep.subr.bf16.mxu0 0
  %1261 = vmatpush1.bf16.msra.mxu0 %v1241
  %1262 = vmatprep.subr.bf16.mxu0 0
  %1263 = vmatpush1.bf16.msra.mxu0 %v1240
  %1264 = vmatprep.subr.bf16.mxu0 0
  %1265 = vmatpush1.bf16.msra.mxu0 %v1239
  %1266 = vmatprep.subr.bf16.mxu0 0
  %1267 = vmatpush1.bf16.msra.mxu0 %v1238
  %1268 = vmatprep.subr.bf16.mxu0 0
  %1269 = vmatpush2.bf16.msra.mxu0 0
  %1270 = vmatprep.subr.bf16.mxu0 0
  %1271 = vmatpush2.bf16.msra.mxu0 0
  %1272 = vmatprep.subr.bf16.mxu0 0
  %1273 = vmatpush2.bf16.msra.mxu0 0
  %1274 = vmatprep.subr.bf16.mxu0 0
  %1275 = vmatpush2.bf16.msra.mxu0 0
  %1276 = vmatprep.subr.bf16.mxu0 0
  %1277 = vmatpush2.bf16.msra.mxu0 0
  %1278 = vmatprep.subr.bf16.mxu0 0
  %1279 = vmatpush2.bf16.msra.mxu0 0
  %1280 = vmatprep.subr.bf16.mxu0 0
  %1281 = vmatpush2.bf16.msra.mxu0 0
  %1282 = vmatprep.subr.bf16.mxu0 0
  %1283 = vmatpush2.bf16.msra.mxu0 0
  %1284 = vmatprep.mubr.bf16.mxu0 0
  %1285 = vmatmul.mubr.bf16.gmra.mxu0 %v1247
  %v1286 = vpop.f32.mrf.mxu0
  %v1287 = vadd.f32 0.0, %v1286
  %v1288 = vpop.f32.mrf.mxu0
  %v1289 = vpop.f32.mrf.mxu0
  %v1290 = vadd.f32 0.0, %v1289
  %v1291 = vpop.f32.mrf.mxu0
  %1292 = vmatprep.mubr.bf16.mxu0 0
  %1293 = vmatmul.mubr.bf16.gmra.mxu0 %v1250
  %v1294 = vpop.f32.mrf.mxu0
  %v1295 = vadd.f32 0.0, %v1294
  %v1296 = vpop.f32.mrf.mxu0
  %v1297 = vpop.f32.mrf.mxu0
  %v1298 = vpop.f32.mrf.mxu0
  %1299 = vdwg.mxu0
  %v1300 = vadd.f32 %v1182, %v1287
  %v1301 = vadd.f32 %v1183, %v1290
  %v1302 = vadd.f32 %v1184, %v1295
  %v1303 = vld [vmem:[#allocation2 + $0xf] sm:$0x7]
  %v1304 = vld [vmem:[#allocation2 + $0x21] sm:$0x7]
  %v1305 = vld [vmem:[#allocation2 + $0x33] sm:$0x7]
  %v1306 = vld [vmem:[#allocation2 + $0x60] sm:$0x7]
  %v1307 = vld [vmem:[#allocation2 + $0x72] sm:$0x7]
  %v1308 = vld [vmem:[#allocation2 + $0x84] sm:$0x7]
  %v1310 = vrot.slane %v1304, 5
  %v1313 = vrot.slane %v1305, 2
  %v1316 = vrot.slane %v1306, 7
  %v1319 = vrot.slane %v1307, 4
  %v1322 = vrot.slane %v1308, 1
  %v1324 = vsel %vm500, %v1303, %v1310
  %v1325 = vsel %vm502, %v1324, %v1313
  %v1326 = vsel %vm504, %v1313, %v1316
  %v1327 = vsel %vm506, %v1326, %v1319
  %v1328 = vsel %vm508, %v1327, %v1322
  %v1329 = vpack.c.bf16 %v1328, %v1325
  %v1330 = vpack.c.bf16 %v1322, %v1322
  %s1331 = scalar_lea.vmem %s4, 224
  %v1332 = vld [vmem:[%s1331] sm:$0xf]
  %v1333 = vld [vmem:[%s1331 + $0x4] sm:$0xf]
  %v1334 = vld [vmem:[%s1331 + $0x8] sm:$0xf]
  %v1335 = vld [vmem:[%s1331 + $0xc] sm:$0xf]
  %v1336 = vld [vmem:[%s1331 + $0x10] sm:$0xf]
  %v1337 = vld [vmem:[%s1331 + $0x14] sm:$0xf]
  %v1338 = vld [vmem:[%s1331 + $0x18] sm:$0xf]
  %v1339 = vld [vmem:[%s1331 + $0x1c] sm:$0xf]
  %v1348 = vunpack.c.l.b16 %v1332
  %v1349 = vunpack.c.l.b16 %v1333
  %v1350 = vunpack.c.l.b16 %v1334
  %v1351 = vunpack.c.l.b16 %v1335
  %v1352 = vunpack.c.l.b16 %v1336
  %v1353 = vunpack.c.l.b16 %v1337
  %v1354 = vunpack.c.l.b16 %v1338
  %v1355 = vunpack.c.l.b16 %v1339
  %v1356 = vpack.c.b16 %v1349, %v1348
  %v1357 = vpack.c.b16 %v1351, %v1350
  %v1358 = vpack.c.b16 %v1353, %v1352
  %v1359 = vpack.c.b16 %v1355, %v1354
  %v1365 = vsel %vm455, %v1329, 0
  %v1368 = vsel %vm455, %v1330, 0
  %1370 = vmatprep.subr.bf16.mxu0 0
  %1371 = vmatpush1.bf16.msra.mxu0 0
  %1372 = vmatprep.subr.bf16.mxu0 0
  %1373 = vmatpush1.bf16.msra.mxu0 0
  %1374 = vmatprep.subr.bf16.mxu0 0
  %1375 = vmatpush1.bf16.msra.mxu0 0
  %1376 = vmatprep.subr.bf16.mxu0 0
  %1377 = vmatpush1.bf16.msra.mxu0 0
  %1378 = vmatprep.subr.bf16.mxu0 0
  %1379 = vmatpush1.bf16.msra.mxu0 %v1359
  %1380 = vmatprep.subr.bf16.mxu0 0
  %1381 = vmatpush1.bf16.msra.mxu0 %v1358
  %1382 = vmatprep.subr.bf16.mxu0 0
  %1383 = vmatpush1.bf16.msra.mxu0 %v1357
  %1384 = vmatprep.subr.bf16.mxu0 0
  %1385 = vmatpush1.bf16.msra.mxu0 %v1356
  %1386 = vmatprep.subr.bf16.mxu0 0
  %1387 = vmatpush2.bf16.msra.mxu0 0
  %1388 = vmatprep.subr.bf16.mxu0 0
  %1389 = vmatpush2.bf16.msra.mxu0 0
  %1390 = vmatprep.subr.bf16.mxu0 0
  %1391 = vmatpush2.bf16.msra.mxu0 0
  %1392 = vmatprep.subr.bf16.mxu0 0
  %1393 = vmatpush2.bf16.msra.mxu0 0
  %1394 = vmatprep.subr.bf16.mxu0 0
  %1395 = vmatpush2.bf16.msra.mxu0 0
  %1396 = vmatprep.subr.bf16.mxu0 0
  %1397 = vmatpush2.bf16.msra.mxu0 0
  %1398 = vmatprep.subr.bf16.mxu0 0
  %1399 = vmatpush2.bf16.msra.mxu0 0
  %1400 = vmatprep.subr.bf16.mxu0 0
  %1401 = vmatpush2.bf16.msra.mxu0 0
  %1402 = vmatprep.mubr.bf16.mxu0 0
  %1403 = vmatmul.mubr.bf16.gmra.mxu0 %v1365
  %v1404 = vpop.f32.mrf.mxu0
  %v1405 = vadd.f32 0.0, %v1404
  %v1406 = vpop.f32.mrf.mxu0
  %v1407 = vpop.f32.mrf.mxu0
  %v1408 = vadd.f32 0.0, %v1407
  %v1409 = vpop.f32.mrf.mxu0
  %1410 = vmatprep.mubr.bf16.mxu0 0
  %1411 = vmatmul.mubr.bf16.gmra.mxu0 %v1368
  %v1412 = vpop.f32.mrf.mxu0
  %v1413 = vadd.f32 0.0, %v1412
  %v1414 = vpop.f32.mrf.mxu0
  %v1415 = vpop.f32.mrf.mxu0
  %v1416 = vpop.f32.mrf.mxu0
  %1417 = vdwg.mxu0
  %v1418 = vadd.f32 %v1300, %v1405
  %v1419 = vadd.f32 %v1301, %v1408
  %v1420 = vadd.f32 %v1302, %v1413
  %v1421 = vld [vmem:[#allocation2 + $0x36] sm:$0x7]
  %v1422 = vld [vmem:[#allocation2 + $0x87] sm:$0x7]
  %v1423 = vrot.slane %v481, 5
  %v1426 = vrot.slane %v1421, 2
  %v1428 = vrot.slane %v483, 7
  %v1430 = vrot.slane %v484, 4
  %v1433 = vrot.slane %v1422, 1
  %v1435 = vsel %vm500, %v480, %v1423
  %v1436 = vsel %vm502, %v1435, %v1426
  %v1437 = vsel %vm504, %v1426, %v1428
  %v1438 = vsel %vm506, %v1437, %v1430
  %v1439 = vsel %vm508, %v1438, %v1433
  %v1440 = vpack.c.bf16 %v1439, %v1436
  %v1441 = vpack.c.bf16 %v1433, %v1433
  %s1442 = scalar_lea.vmem %s4, 256
  %v1443 = vld [vmem:[%s1442] sm:$0xf]
  %v1444 = vld [vmem:[%s1442 + $0x4] sm:$0xf]
  %v1445 = vld [vmem:[%s1442 + $0x8] sm:$0xf]
  %v1446 = vld [vmem:[%s1442 + $0xc] sm:$0xf]
  %v1447 = vld [vmem:[%s1442 + $0x10] sm:$0xf]
  %v1448 = vld [vmem:[%s1442 + $0x14] sm:$0xf]
  %v1449 = vld [vmem:[%s1442 + $0x18] sm:$0xf]
  %v1450 = vld [vmem:[%s1442 + $0x1c] sm:$0xf]
  %v1459 = vunpack.c.l.b16 %v1443
  %v1460 = vunpack.c.l.b16 %v1444
  %v1461 = vunpack.c.l.b16 %v1445
  %v1462 = vunpack.c.l.b16 %v1446
  %v1463 = vunpack.c.l.b16 %v1447
  %v1464 = vunpack.c.l.b16 %v1448
  %v1465 = vunpack.c.l.b16 %v1449
  %v1466 = vunpack.c.l.b16 %v1450
  %v1467 = vpack.c.b16 %v1460, %v1459
  %v1468 = vpack.c.b16 %v1462, %v1461
  %v1469 = vpack.c.b16 %v1464, %v1463
  %v1470 = vpack.c.b16 %v1466, %v1465
  %v1476 = vsel %vm455, %v1440, 0
  %v1479 = vsel %vm455, %v1441, 0
  %1481 = vmatprep.subr.bf16.mxu0 0
  %1482 = vmatpush1.bf16.msra.mxu0 0
  %1483 = vmatprep.subr.bf16.mxu0 0
  %1484 = vmatpush1.bf16.msra.mxu0 0
  %1485 = vmatprep.subr.bf16.mxu0 0
  %1486 = vmatpush1.bf16.msra.mxu0 0
  %1487 = vmatprep.subr.bf16.mxu0 0
  %1488 = vmatpush1.bf16.msra.mxu0 0
  %1489 = vmatprep.subr.bf16.mxu0 0
  %1490 = vmatpush1.bf16.msra.mxu0 %v1470
  %1491 = vmatprep.subr.bf16.mxu0 0
  %1492 = vmatpush1.bf16.msra.mxu0 %v1469
  %1493 = vmatprep.subr.bf16.mxu0 0
  %1494 = vmatpush1.bf16.msra.mxu0 %v1468
  %1495 = vmatprep.subr.bf16.mxu0 0
  %1496 = vmatpush1.bf16.msra.mxu0 %v1467
  %1497 = vmatprep.subr.bf16.mxu0 0
  %1498 = vmatpush2.bf16.msra.mxu0 0
  %1499 = vmatprep.subr.bf16.mxu0 0
  %1500 = vmatpush2.bf16.msra.mxu0 0
  %1501 = vmatprep.subr.bf16.mxu0 0
  %1502 = vmatpush2.bf16.msra.mxu0 0
  %1503 = vmatprep.subr.bf16.mxu0 0
  %1504 = vmatpush2.bf16.msra.mxu0 0
  %1505 = vmatprep.subr.bf16.mxu0 0
  %1506 = vmatpush2.bf16.msra.mxu0 0
  %1507 = vmatprep.subr.bf16.mxu0 0
  %1508 = vmatpush2.bf16.msra.mxu0 0
  %1509 = vmatprep.subr.bf16.mxu0 0
  %1510 = vmatpush2.bf16.msra.mxu0 0
  %1511 = vmatprep.subr.bf16.mxu0 0
  %1512 = vmatpush2.bf16.msra.mxu0 0
  %1513 = vmatprep.mubr.bf16.mxu0 0
  %1514 = vmatmul.mubr.bf16.gmra.mxu0 %v1476
  %v1515 = vpop.f32.mrf.mxu0
  %v1516 = vadd.f32 0.0, %v1515
  %v1517 = vpop.f32.mrf.mxu0
  %v1518 = vpop.f32.mrf.mxu0
  %v1519 = vadd.f32 0.0, %v1518
  %v1520 = vpop.f32.mrf.mxu0
  %1521 = vmatprep.mubr.bf16.mxu0 0
  %1522 = vmatmul.mubr.bf16.gmra.mxu0 %v1479
  %v1523 = vpop.f32.mrf.mxu0
  %v1524 = vadd.f32 0.0, %v1523
  %v1525 = vpop.f32.mrf.mxu0
  %v1526 = vpop.f32.mrf.mxu0
  %v1527 = vpop.f32.mrf.mxu0
  %1528 = vdwg.mxu0
  %v1529 = vadd.f32 %v1418, %v1516
  %v1530 = vadd.f32 %v1419, %v1519
  %v1531 = vadd.f32 %v1420, %v1524
  %v1532 = vld [vmem:[#allocation2 + $0x3b] sm:$0x7]
  %v1533 = vld [vmem:[#allocation2 + $0x8c] sm:$0x7]
  %v1534 = vrot.slane %v522, 5
  %v1537 = vrot.slane %v1532, 2
  %v1539 = vrot.slane %v524, 7
  %v1541 = vrot.slane %v525, 4
  %v1544 = vrot.slane %v1533, 1
  %v1546 = vsel %vm500, %v521, %v1534
  %v1547 = vsel %vm502, %v1546, %v1537
  %v1548 = vsel %vm504, %v1537, %v1539
  %v1549 = vsel %vm506, %v1548, %v1541
  %v1550 = vsel %vm508, %v1549, %v1544
  %v1551 = vpack.c.bf16 %v1550, %v1547
  %v1552 = vpack.c.bf16 %v1544, %v1544
  %s1553 = scalar_lea.vmem %s4, 288
  %v1554 = vld [vmem:[%s1553] sm:$0xf]
  %v1555 = vld [vmem:[%s1553 + $0x4] sm:$0xf]
  %v1556 = vld [vmem:[%s1553 + $0x8] sm:$0xf]
  %v1557 = vld [vmem:[%s1553 + $0xc] sm:$0xf]
  %v1558 = vld [vmem:[%s1553 + $0x10] sm:$0xf]
  %v1559 = vld [vmem:[%s1553 + $0x14] sm:$0xf]
  %v1560 = vld [vmem:[%s1553 + $0x18] sm:$0xf]
  %v1561 = vld [vmem:[%s1553 + $0x1c] sm:$0xf]
  %v1570 = vunpack.c.l.b16 %v1554
  %v1571 = vunpack.c.l.b16 %v1555
  %v1572 = vunpack.c.l.b16 %v1556
  %v1573 = vunpack.c.l.b16 %v1557
  %v1574 = vunpack.c.l.b16 %v1558
  %v1575 = vunpack.c.l.b16 %v1559
  %v1576 = vunpack.c.l.b16 %v1560
  %v1577 = vunpack.c.l.b16 %v1561
  %v1578 = vpack.c.b16 %v1571, %v1570
  %v1579 = vpack.c.b16 %v1573, %v1572
  %v1580 = vpack.c.b16 %v1575, %v1574
  %v1581 = vpack.c.b16 %v1577, %v1576
  %v1587 = vsel %vm455, %v1551, 0
  %v1590 = vsel %vm455, %v1552, 0
  %1592 = vmatprep.subr.bf16.mxu0 0
  %1593 = vmatpush1.bf16.msra.mxu0 0
  %1594 = vmatprep.subr.bf16.mxu0 0
  %1595 = vmatpush1.bf16.msra.mxu0 0
  %1596 = vmatprep.subr.bf16.mxu0 0
  %1597 = vmatpush1.bf16.msra.mxu0 0
  %1598 = vmatprep.subr.bf16.mxu0 0
  %1599 = vmatpush1.bf16.msra.mxu0 0
  %1600 = vmatprep.subr.bf16.mxu0 0
  %1601 = vmatpush1.bf16.msra.mxu0 %v1581
  %1602 = vmatprep.subr.bf16.mxu0 0
  %1603 = vmatpush1.bf16.msra.mxu0 %v1580
  %1604 = vmatprep.subr.bf16.mxu0 0
  %1605 = vmatpush1.bf16.msra.mxu0 %v1579
  %1606 = vmatprep.subr.bf16.mxu0 0
  %1607 = vmatpush1.bf16.msra.mxu0 %v1578
  %1608 = vmatprep.subr.bf16.mxu0 0
  %1609 = vmatpush2.bf16.msra.mxu0 0
  %1610 = vmatprep.subr.bf16.mxu0 0
  %1611 = vmatpush2.bf16.msra.mxu0 0
  %1612 = vmatprep.subr.bf16.mxu0 0
  %1613 = vmatpush2.bf16.msra.mxu0 0
  %1614 = vmatprep.subr.bf16.mxu0 0
  %1615 = vmatpush2.bf16.msra.mxu0 0
  %1616 = vmatprep.subr.bf16.mxu0 0
  %1617 = vmatpush2.bf16.msra.mxu0 0
  %1618 = vmatprep.subr.bf16.mxu0 0
  %1619 = vmatpush2.bf16.msra.mxu0 0
  %1620 = vmatprep.subr.bf16.mxu0 0
  %1621 = vmatpush2.bf16.msra.mxu0 0
  %1622 = vmatprep.subr.bf16.mxu0 0
  %1623 = vmatpush2.bf16.msra.mxu0 0
  %1624 = vmatprep.mubr.bf16.mxu0 0
  %1625 = vmatmul.mubr.bf16.gmra.mxu0 %v1587
  %v1626 = vpop.f32.mrf.mxu0
  %v1627 = vadd.f32 0.0, %v1626
  %v1628 = vpop.f32.mrf.mxu0
  %v1629 = vpop.f32.mrf.mxu0
  %v1630 = vadd.f32 0.0, %v1629
  %v1631 = vpop.f32.mrf.mxu0
  %1632 = vmatprep.mubr.bf16.mxu0 0
  %1633 = vmatmul.mubr.bf16.gmra.mxu0 %v1590
  %v1634 = vpop.f32.mrf.mxu0
  %v1635 = vadd.f32 0.0, %v1634
  %v1636 = vpop.f32.mrf.mxu0
  %v1637 = vpop.f32.mrf.mxu0
  %v1638 = vpop.f32.mrf.mxu0
  %1639 = vdwg.mxu0
  %v1640 = vadd.f32 %v1529, %v1627
  %v1641 = vadd.f32 %v1530, %v1630
  %v1642 = vadd.f32 %v1531, %v1635
  %v1643 = vld [vmem:[#allocation2 + $0x37] sm:$0x7]
  %v1644 = vld [vmem:[#allocation2 + $0x88] sm:$0x7]
  %v1645 = vrot.slane %v715, 5
  %v1648 = vrot.slane %v1643, 2
  %v1650 = vrot.slane %v717, 7
  %v1652 = vrot.slane %v718, 4
  %v1655 = vrot.slane %v1644, 1
  %v1657 = vsel %vm500, %v714, %v1645
  %v1658 = vsel %vm502, %v1657, %v1648
  %v1659 = vsel %vm504, %v1648, %v1650
  %v1660 = vsel %vm506, %v1659, %v1652
  %v1661 = vsel %vm508, %v1660, %v1655
  %v1662 = vpack.c.bf16 %v1661, %v1658
  %v1663 = vpack.c.bf16 %v1655, %v1655
  %s1664 = scalar_lea.vmem %s4, 320
  %v1665 = vld [vmem:[%s1664] sm:$0xf]
  %v1666 = vld [vmem:[%s1664 + $0x4] sm:$0xf]
  %v1667 = vld [vmem:[%s1664 + $0x8] sm:$0xf]
  %v1668 = vld [vmem:[%s1664 + $0xc] sm:$0xf]
  %v1669 = vld [vmem:[%s1664 + $0x10] sm:$0xf]
  %v1670 = vld [vmem:[%s1664 + $0x14] sm:$0xf]
  %v1671 = vld [vmem:[%s1664 + $0x18] sm:$0xf]
  %v1672 = vld [vmem:[%s1664 + $0x1c] sm:$0xf]
  %v1681 = vunpack.c.l.b16 %v1665
  %v1682 = vunpack.c.l.b16 %v1666
  %v1683 = vunpack.c.l.b16 %v1667
  %v1684 = vunpack.c.l.b16 %v1668
  %v1685 = vunpack.c.l.b16 %v1669
  %v1686 = vunpack.c.l.b16 %v1670
  %v1687 = vunpack.c.l.b16 %v1671
  %v1688 = vunpack.c.l.b16 %v1672
  %v1689 = vpack.c.b16 %v1682, %v1681
  %v1690 = vpack.c.b16 %v1684, %v1683
  %v1691 = vpack.c.b16 %v1686, %v1685
  %v1692 = vpack.c.b16 %v1688, %v1687
  %v1698 = vsel %vm455, %v1662, 0
  %v1701 = vsel %vm455, %v1663, 0
  %1703 = vmatprep.subr.bf16.mxu0 0
  %1704 = vmatpush1.bf16.msra.mxu0 0
  %1705 = vmatprep.subr.bf16.mxu0 0
  %1706 = vmatpush1.bf16.msra.mxu0 0
  %1707 = vmatprep.subr.bf16.mxu0 0
  %1708 = vmatpush1.bf16.msra.mxu0 0
  %1709 = vmatprep.subr.bf16.mxu0 0
  %1710 = vmatpush1.bf16.msra.mxu0 0
  %1711 = vmatprep.subr.bf16.mxu0 0
  %1712 = vmatpush1.bf16.msra.mxu0 %v1692
  %1713 = vmatprep.subr.bf16.mxu0 0
  %1714 = vmatpush1.bf16.msra.mxu0 %v1691
  %1715 = vmatprep.subr.bf16.mxu0 0
  %1716 = vmatpush1.bf16.msra.mxu0 %v1690
  %1717 = vmatprep.subr.bf16.mxu0 0
  %1718 = vmatpush1.bf16.msra.mxu0 %v1689
  %1719 = vmatprep.subr.bf16.mxu0 0
  %1720 = vmatpush2.bf16.msra.mxu0 0
  %1721 = vmatprep.subr.bf16.mxu0 0
  %1722 = vmatpush2.bf16.msra.mxu0 0
  %1723 = vmatprep.subr.bf16.mxu0 0
  %1724 = vmatpush2.bf16.msra.mxu0 0
  %1725 = vmatprep.subr.bf16.mxu0 0
  %1726 = vmatpush2.bf16.msra.mxu0 0
  %1727 = vmatprep.subr.bf16.mxu0 0
  %1728 = vmatpush2.bf16.msra.mxu0 0
  %1729 = vmatprep.subr.bf16.mxu0 0
  %1730 = vmatpush2.bf16.msra.mxu0 0
  %1731 = vmatprep.subr.bf16.mxu0 0
  %1732 = vmatpush2.bf16.msra.mxu0 0
  %1733 = vmatprep.subr.bf16.mxu0 0
  %1734 = vmatpush2.bf16.msra.mxu0 0
  %1735 = vmatprep.mubr.bf16.mxu0 0
  %1736 = vmatmul.mubr.bf16.gmra.mxu0 %v1698
  %v1737 = vpop.f32.mrf.mxu0
  %v1738 = vadd.f32 0.0, %v1737
  %v1739 = vpop.f32.mrf.mxu0
  %v1740 = vpop.f32.mrf.mxu0
  %v1741 = vadd.f32 0.0, %v1740
  %v1742 = vpop.f32.mrf.mxu0
  %1743 = vmatprep.mubr.bf16.mxu0 0
  %1744 = vmatmul.mubr.bf16.gmra.mxu0 %v1701
  %v1745 = vpop.f32.mrf.mxu0
  %v1746 = vadd.f32 0.0, %v1745
  %v1747 = vpop.f32.mrf.mxu0
  %v1748 = vpop.f32.mrf.mxu0
  %v1749 = vpop.f32.mrf.mxu0
  %1750 = vdwg.mxu0
  %v1751 = vadd.f32 %v1640, %v1738
  %v1752 = vadd.f32 %v1641, %v1741
  %v1753 = vadd.f32 %v1642, %v1746
  %v1754 = vld [vmem:[#allocation2 + $0x3c] sm:$0x7]
  %v1755 = vld [vmem:[#allocation2 + $0x8d] sm:$0x7]
  %v1756 = vrot.slane %v833, 5
  %v1759 = vrot.slane %v1754, 2
  %v1761 = vrot.slane %v835, 7
  %v1763 = vrot.slane %v836, 4
  %v1766 = vrot.slane %v1755, 1
  %v1768 = vsel %vm500, %v832, %v1756
  %v1769 = vsel %vm502, %v1768, %v1759
  %v1770 = vsel %vm504, %v1759, %v1761
  %v1771 = vsel %vm506, %v1770, %v1763
  %v1772 = vsel %vm508, %v1771, %v1766
  %v1773 = vpack.c.bf16 %v1772, %v1769
  %v1774 = vpack.c.bf16 %v1766, %v1766
  %s1775 = scalar_lea.vmem %s4, 352
  %v1776 = vld [vmem:[%s1775] sm:$0xf]
  %v1777 = vld [vmem:[%s1775 + $0x4] sm:$0xf]
  %v1778 = vld [vmem:[%s1775 + $0x8] sm:$0xf]
  %v1779 = vld [vmem:[%s1775 + $0xc] sm:$0xf]
  %v1780 = vld [vmem:[%s1775 + $0x10] sm:$0xf]
  %v1781 = vld [vmem:[%s1775 + $0x14] sm:$0xf]
  %v1782 = vld [vmem:[%s1775 + $0x18] sm:$0xf]
  %v1783 = vld [vmem:[%s1775 + $0x1c] sm:$0xf]
  %v1792 = vunpack.c.l.b16 %v1776
  %v1793 = vunpack.c.l.b16 %v1777
  %v1794 = vunpack.c.l.b16 %v1778
  %v1795 = vunpack.c.l.b16 %v1779
  %v1796 = vunpack.c.l.b16 %v1780
  %v1797 = vunpack.c.l.b16 %v1781
  %v1798 = vunpack.c.l.b16 %v1782
  %v1799 = vunpack.c.l.b16 %v1783
  %v1800 = vpack.c.b16 %v1793, %v1792
  %v1801 = vpack.c.b16 %v1795, %v1794
  %v1802 = vpack.c.b16 %v1797, %v1796
  %v1803 = vpack.c.b16 %v1799, %v1798
  %v1809 = vsel %vm455, %v1773, 0
  %v1812 = vsel %vm455, %v1774, 0
  %1814 = vmatprep.subr.bf16.mxu0 0
  %1815 = vmatpush1.bf16.msra.mxu0 0
  %1816 = vmatprep.subr.bf16.mxu0 0
  %1817 = vmatpush1.bf16.msra.mxu0 0
  %1818 = vmatprep.subr.bf16.mxu0 0
  %1819 = vmatpush1.bf16.msra.mxu0 0
  %1820 = vmatprep.subr.bf16.mxu0 0
  %1821 = vmatpush1.bf16.msra.mxu0 0
  %1822 = vmatprep.subr.bf16.mxu0 0
  %1823 = vmatpush1.bf16.msra.mxu0 %v1803
  %1824 = vmatprep.subr.bf16.mxu0 0
  %1825 = vmatpush1.bf16.msra.mxu0 %v1802
  %1826 = vmatprep.subr.bf16.mxu0 0
  %1827 = vmatpush1.bf16.msra.mxu0 %v1801
  %1828 = vmatprep.subr.bf16.mxu0 0
  %1829 = vmatpush1.bf16.msra.mxu0 %v1800
  %1830 = vmatprep.subr.bf16.mxu0 0
  %1831 = vmatpush2.bf16.msra.mxu0 0
  %1832 = vmatprep.subr.bf16.mxu0 0
  %1833 = vmatpush2.bf16.msra.mxu0 0
  %1834 = vmatprep.subr.bf16.mxu0 0
  %1835 = vmatpush2.bf16.msra.mxu0 0
  %1836 = vmatprep.subr.bf16.mxu0 0
  %1837 = vmatpush2.bf16.msra.mxu0 0
  %1838 = vmatprep.subr.bf16.mxu0 0
  %1839 = vmatpush2.bf16.msra.mxu0 0
  %1840 = vmatprep.subr.bf16.mxu0 0
  %1841 = vmatpush2.bf16.msra.mxu0 0
  %1842 = vmatprep.subr.bf16.mxu0 0
  %1843 = vmatpush2.bf16.msra.mxu0 0
  %1844 = vmatprep.subr.bf16.mxu0 0
  %1845 = vmatpush2.bf16.msra.mxu0 0
  %1846 = vmatprep.mubr.bf16.mxu0 0
  %1847 = vmatmul.mubr.bf16.gmra.mxu0 %v1809
  %v1848 = vpop.f32.mrf.mxu0
  %v1849 = vadd.f32 0.0, %v1848
  %v1850 = vpop.f32.mrf.mxu0
  %v1851 = vpop.f32.mrf.mxu0
  %v1852 = vadd.f32 0.0, %v1851
  %v1853 = vpop.f32.mrf.mxu0
  %1854 = vmatprep.mubr.bf16.mxu0 0
  %1855 = vmatmul.mubr.bf16.gmra.mxu0 %v1812
  %v1856 = vpop.f32.mrf.mxu0
  %v1857 = vadd.f32 0.0, %v1856
  %v1858 = vpop.f32.mrf.mxu0
  %v1859 = vpop.f32.mrf.mxu0
  %v1860 = vpop.f32.mrf.mxu0
  %1861 = vdwg.mxu0
  %v1862 = vadd.f32 %v1751, %v1849
  %v1863 = vadd.f32 %v1752, %v1852
  %v1864 = vadd.f32 %v1753, %v1857
  %v1865 = vld [vmem:[#allocation2 + $0x3f] sm:$0x7]
  %v1866 = vld [vmem:[#allocation2 + $0x90] sm:$0x7]
  %v1867 = vrot.slane %v951, 5
  %v1870 = vrot.slane %v1865, 2
  %v1872 = vrot.slane %v953, 7
  %v1874 = vrot.slane %v954, 4
  %v1877 = vrot.slane %v1866, 1
  %v1879 = vsel %vm500, %v950, %v1867
  %v1880 = vsel %vm502, %v1879, %v1870
  %v1881 = vsel %vm504, %v1870, %v1872
  %v1882 = vsel %vm506, %v1881, %v1874
  %v1883 = vsel %vm508, %v1882, %v1877
  %v1884 = vpack.c.bf16 %v1883, %v1880
  %v1885 = vpack.c.bf16 %v1877, %v1877
  %s1886 = scalar_lea.vmem %s4, 384
  %v1887 = vld [vmem:[%s1886] sm:$0xf]
  %v1888 = vld [vmem:[%s1886 + $0x4] sm:$0xf]
  %v1889 = vld [vmem:[%s1886 + $0x8] sm:$0xf]
  %v1890 = vld [vmem:[%s1886 + $0xc] sm:$0xf]
  %v1891 = vld [vmem:[%s1886 + $0x10] sm:$0xf]
  %v1892 = vld [vmem:[%s1886 + $0x14] sm:$0xf]
  %v1893 = vld [vmem:[%s1886 + $0x18] sm:$0xf]
  %v1894 = vld [vmem:[%s1886 + $0x1c] sm:$0xf]
  %v1903 = vunpack.c.l.b16 %v1887
  %v1904 = vunpack.c.l.b16 %v1888
  %v1905 = vunpack.c.l.b16 %v1889
  %v1906 = vunpack.c.l.b16 %v1890
  %v1907 = vunpack.c.l.b16 %v1891
  %v1908 = vunpack.c.l.b16 %v1892
  %v1909 = vunpack.c.l.b16 %v1893
  %v1910 = vunpack.c.l.b16 %v1894
  %v1911 = vpack.c.b16 %v1904, %v1903
  %v1912 = vpack.c.b16 %v1906, %v1905
  %v1913 = vpack.c.b16 %v1908, %v1907
  %v1914 = vpack.c.b16 %v1910, %v1909
  %v1920 = vsel %vm455, %v1884, 0
  %v1923 = vsel %vm455, %v1885, 0
  %1925 = vmatprep.subr.bf16.mxu0 0
  %1926 = vmatpush1.bf16.msra.mxu0 0
  %1927 = vmatprep.subr.bf16.mxu0 0
  %1928 = vmatpush1.bf16.msra.mxu0 0
  %1929 = vmatprep.subr.bf16.mxu0 0
  %1930 = vmatpush1.bf16.msra.mxu0 0
  %1931 = vmatprep.subr.bf16.mxu0 0
  %1932 = vmatpush1.bf16.msra.mxu0 0
  %1933 = vmatprep.subr.bf16.mxu0 0
  %1934 = vmatpush1.bf16.msra.mxu0 %v1914
  %1935 = vmatprep.subr.bf16.mxu0 0
  %1936 = vmatpush1.bf16.msra.mxu0 %v1913
  %1937 = vmatprep.subr.bf16.mxu0 0
  %1938 = vmatpush1.bf16.msra.mxu0 %v1912
  %1939 = vmatprep.subr.bf16.mxu0 0
  %1940 = vmatpush1.bf16.msra.mxu0 %v1911
  %1941 = vmatprep.subr.bf16.mxu0 0
  %1942 = vmatpush2.bf16.msra.mxu0 0
  %1943 = vmatprep.subr.bf16.mxu0 0
  %1944 = vmatpush2.bf16.msra.mxu0 0
  %1945 = vmatprep.subr.bf16.mxu0 0
  %1946 = vmatpush2.bf16.msra.mxu0 0
  %1947 = vmatprep.subr.bf16.mxu0 0
  %1948 = vmatpush2.bf16.msra.mxu0 0
  %1949 = vmatprep.subr.bf16.mxu0 0
  %1950 = vmatpush2.bf16.msra.mxu0 0
  %1951 = vmatprep.subr.bf16.mxu0 0
  %1952 = vmatpush2.bf16.msra.mxu0 0
  %1953 = vmatprep.subr.bf16.mxu0 0
  %1954 = vmatpush2.bf16.msra.mxu0 0
  %1955 = vmatprep.subr.bf16.mxu0 0
  %1956 = vmatpush2.bf16.msra.mxu0 0
  %1957 = vmatprep.mubr.bf16.mxu0 0
  %1958 = vmatmul.mubr.bf16.gmra.mxu0 %v1920
  %v1959 = vpop.f32.mrf.mxu0
  %v1960 = vadd.f32 0.0, %v1959
  %v1961 = vpop.f32.mrf.mxu0
  %v1962 = vpop.f32.mrf.mxu0
  %v1963 = vadd.f32 0.0, %v1962
  %v1964 = vpop.f32.mrf.mxu0
  %1965 = vmatprep.mubr.bf16.mxu0 0
  %1966 = vmatmul.mubr.bf16.gmra.mxu0 %v1923
  %v1967 = vpop.f32.mrf.mxu0
  %v1968 = vadd.f32 0.0, %v1967
  %v1969 = vpop.f32.mrf.mxu0
  %v1970 = vpop.f32.mrf.mxu0
  %v1971 = vpop.f32.mrf.mxu0
  %1972 = vdwg.mxu0
  %v1973 = vadd.f32 %v1862, %v1960
  %v1974 = vadd.f32 %v1863, %v1963
  %v1975 = vadd.f32 %v1864, %v1968
  %v1976 = vld [vmem:[#allocation2 + $0x44] sm:$0x7]
  %v1977 = vld [vmem:[#allocation2 + $0x95] sm:$0x7]
  %v1978 = vrot.slane %v1069, 5
  %v1981 = vrot.slane %v1976, 2
  %v1983 = vrot.slane %v1071, 7
  %v1985 = vrot.slane %v1072, 4
  %v1988 = vrot.slane %v1977, 1
  %v1990 = vsel %vm500, %v1068, %v1978
  %v1991 = vsel %vm502, %v1990, %v1981
  %v1992 = vsel %vm504, %v1981, %v1983
  %v1993 = vsel %vm506, %v1992, %v1985
  %v1994 = vsel %vm508, %v1993, %v1988
  %v1995 = vpack.c.bf16 %v1994, %v1991
  %v1996 = vpack.c.bf16 %v1988, %v1988
  %s1997 = scalar_lea.vmem %s4, 416
  %v1998 = vld [vmem:[%s1997] sm:$0xf]
  %v1999 = vld [vmem:[%s1997 + $0x4] sm:$0xf]
  %v2000 = vld [vmem:[%s1997 + $0x8] sm:$0xf]
  %v2001 = vld [vmem:[%s1997 + $0xc] sm:$0xf]
  %v2002 = vld [vmem:[%s1997 + $0x10] sm:$0xf]
  %v2003 = vld [vmem:[%s1997 + $0x14] sm:$0xf]
  %v2004 = vld [vmem:[%s1997 + $0x18] sm:$0xf]
  %v2005 = vld [vmem:[%s1997 + $0x1c] sm:$0xf]
  %v2014 = vunpack.c.l.b16 %v1998
  %v2015 = vunpack.c.l.b16 %v1999
  %v2016 = vunpack.c.l.b16 %v2000
  %v2017 = vunpack.c.l.b16 %v2001
  %v2018 = vunpack.c.l.b16 %v2002
  %v2019 = vunpack.c.l.b16 %v2003
  %v2020 = vunpack.c.l.b16 %v2004
  %v2021 = vunpack.c.l.b16 %v2005
  %v2022 = vpack.c.b16 %v2015, %v2014
  %v2023 = vpack.c.b16 %v2017, %v2016
  %v2024 = vpack.c.b16 %v2019, %v2018
  %v2025 = vpack.c.b16 %v2021, %v2020
  %v2031 = vsel %vm455, %v1995, 0
  %v2034 = vsel %vm455, %v1996, 0
  %2036 = vmatprep.subr.bf16.mxu0 0
  %2037 = vmatpush1.bf16.msra.mxu0 0
  %2038 = vmatprep.subr.bf16.mxu0 0
  %2039 = vmatpush1.bf16.msra.mxu0 0
  %2040 = vmatprep.subr.bf16.mxu0 0
  %2041 = vmatpush1.bf16.msra.mxu0 0
  %2042 = vmatprep.subr.bf16.mxu0 0
  %2043 = vmatpush1.bf16.msra.mxu0 0
  %2044 = vmatprep.subr.bf16.mxu0 0
  %2045 = vmatpush1.bf16.msra.mxu0 %v2025
  %2046 = vmatprep.subr.bf16.mxu0 0
  %2047 = vmatpush1.bf16.msra.mxu0 %v2024
  %2048 = vmatprep.subr.bf16.mxu0 0
  %2049 = vmatpush1.bf16.msra.mxu0 %v2023
  %2050 = vmatprep.subr.bf16.mxu0 0
  %2051 = vmatpush1.bf16.msra.mxu0 %v2022
  %2052 = vmatprep.subr.bf16.mxu0 0
  %2053 = vmatpush2.bf16.msra.mxu0 0
  %2054 = vmatprep.subr.bf16.mxu0 0
  %2055 = vmatpush2.bf16.msra.mxu0 0
  %2056 = vmatprep.subr.bf16.mxu0 0
  %2057 = vmatpush2.bf16.msra.mxu0 0
  %2058 = vmatprep.subr.bf16.mxu0 0
  %2059 = vmatpush2.bf16.msra.mxu0 0
  %2060 = vmatprep.subr.bf16.mxu0 0
  %2061 = vmatpush2.bf16.msra.mxu0 0
  %2062 = vmatprep.subr.bf16.mxu0 0
  %2063 = vmatpush2.bf16.msra.mxu0 0
  %2064 = vmatprep.subr.bf16.mxu0 0
  %2065 = vmatpush2.bf16.msra.mxu0 0
  %2066 = vmatprep.subr.bf16.mxu0 0
  %2067 = vmatpush2.bf16.msra.mxu0 0
  %2068 = vmatprep.mubr.bf16.mxu0 0
  %2069 = vmatmul.mubr.bf16.gmra.mxu0 %v2031
  %v2070 = vpop.f32.mrf.mxu0
  %v2071 = vadd.f32 0.0, %v2070
  %v2072 = vpop.f32.mrf.mxu0
  %v2073 = vpop.f32.mrf.mxu0
  %v2074 = vadd.f32 0.0, %v2073
  %v2075 = vpop.f32.mrf.mxu0
  %2076 = vmatprep.mubr.bf16.mxu0 0
  %2077 = vmatmul.mubr.bf16.gmra.mxu0 %v2034
  %v2078 = vpop.f32.mrf.mxu0
  %v2079 = vadd.f32 0.0, %v2078
  %v2080 = vpop.f32.mrf.mxu0
  %v2081 = vpop.f32.mrf.mxu0
  %v2082 = vpop.f32.mrf.mxu0
  %2083 = vdwg.mxu0
  %v2084 = vadd.f32 %v1973, %v2071
  %v2085 = vadd.f32 %v1974, %v2074
  %v2086 = vadd.f32 %v1975, %v2079
  %v2087 = vld [vmem:[#allocation2 + $0x40] sm:$0x7]
  %v2088 = vld [vmem:[#allocation2 + $0x91] sm:$0x7]
  %v2089 = vrot.slane %v1187, 5
  %v2092 = vrot.slane %v2087, 2
  %v2094 = vrot.slane %v1189, 7
  %v2096 = vrot.slane %v1190, 4
  %v2099 = vrot.slane %v2088, 1
  %v2101 = vsel %vm500, %v1186, %v2089
  %v2102 = vsel %vm502, %v2101, %v2092
  %v2103 = vsel %vm504, %v2092, %v2094
  %v2104 = vsel %vm506, %v2103, %v2096
  %v2105 = vsel %vm508, %v2104, %v2099
  %v2106 = vpack.c.bf16 %v2105, %v2102
  %v2107 = vpack.c.bf16 %v2099, %v2099
  %s2108 = scalar_lea.vmem %s4, 448
  %v2109 = vld [vmem:[%s2108] sm:$0xf]
  %v2110 = vld [vmem:[%s2108 + $0x4] sm:$0xf]
  %v2111 = vld [vmem:[%s2108 + $0x8] sm:$0xf]
  %v2112 = vld [vmem:[%s2108 + $0xc] sm:$0xf]
  %v2113 = vld [vmem:[%s2108 + $0x10] sm:$0xf]
  %v2114 = vld [vmem:[%s2108 + $0x14] sm:$0xf]
  %v2115 = vld [vmem:[%s2108 + $0x18] sm:$0xf]
  %v2116 = vld [vmem:[%s2108 + $0x1c] sm:$0xf]
  %v2125 = vunpack.c.l.b16 %v2109
  %v2126 = vunpack.c.l.b16 %v2110
  %v2127 = vunpack.c.l.b16 %v2111
  %v2128 = vunpack.c.l.b16 %v2112
  %v2129 = vunpack.c.l.b16 %v2113
  %v2130 = vunpack.c.l.b16 %v2114
  %v2131 = vunpack.c.l.b16 %v2115
  %v2132 = vunpack.c.l.b16 %v2116
  %v2133 = vpack.c.b16 %v2126, %v2125
  %v2134 = vpack.c.b16 %v2128, %v2127
  %v2135 = vpack.c.b16 %v2130, %v2129
  %v2136 = vpack.c.b16 %v2132, %v2131
  %v2142 = vsel %vm455, %v2106, 0
  %v2145 = vsel %vm455, %v2107, 0
  %2147 = vmatprep.subr.bf16.mxu0 0
  %2148 = vmatpush1.bf16.msra.mxu0 0
  %2149 = vmatprep.subr.bf16.mxu0 0
  %2150 = vmatpush1.bf16.msra.mxu0 0
  %2151 = vmatprep.subr.bf16.mxu0 0
  %2152 = vmatpush1.bf16.msra.mxu0 0
  %2153 = vmatprep.subr.bf16.mxu0 0
  %2154 = vmatpush1.bf16.msra.mxu0 0
  %2155 = vmatprep.subr.bf16.mxu0 0
  %2156 = vmatpush1.bf16.msra.mxu0 %v2136
  %2157 = vmatprep.subr.bf16.mxu0 0
  %2158 = vmatpush1.bf16.msra.mxu0 %v2135
  %2159 = vmatprep.subr.bf16.mxu0 0
  %2160 = vmatpush1.bf16.msra.mxu0 %v2134
  %2161 = vmatprep.subr.bf16.mxu0 0
  %2162 = vmatpush1.bf16.msra.mxu0 %v2133
  %2163 = vmatprep.subr.bf16.mxu0 0
  %2164 = vmatpush2.bf16.msra.mxu0 0
  %2165 = vmatprep.subr.bf16.mxu0 0
  %2166 = vmatpush2.bf16.msra.mxu0 0
  %2167 = vmatprep.subr.bf16.mxu0 0
  %2168 = vmatpush2.bf16.msra.mxu0 0
  %2169 = vmatprep.subr.bf16.mxu0 0
  %2170 = vmatpush2.bf16.msra.mxu0 0
  %2171 = vmatprep.subr.bf16.mxu0 0
  %2172 = vmatpush2.bf16.msra.mxu0 0
  %2173 = vmatprep.subr.bf16.mxu0 0
  %2174 = vmatpush2.bf16.msra.mxu0 0
  %2175 = vmatprep.subr.bf16.mxu0 0
  %2176 = vmatpush2.bf16.msra.mxu0 0
  %2177 = vmatprep.subr.bf16.mxu0 0
  %2178 = vmatpush2.bf16.msra.mxu0 0
  %2179 = vmatprep.mubr.bf16.mxu0 0
  %2180 = vmatmul.mubr.bf16.gmra.mxu0 %v2142
  %v2181 = vpop.f32.mrf.mxu0
  %v2182 = vadd.f32 0.0, %v2181
  %v2183 = vpop.f32.mrf.mxu0
  %v2184 = vpop.f32.mrf.mxu0
  %v2185 = vadd.f32 0.0, %v2184
  %v2186 = vpop.f32.mrf.mxu0
  %2187 = vmatprep.mubr.bf16.mxu0 0
  %2188 = vmatmul.mubr.bf16.gmra.mxu0 %v2145
  %v2189 = vpop.f32.mrf.mxu0
  %v2190 = vadd.f32 0.0, %v2189
  %v2191 = vpop.f32.mrf.mxu0
  %v2192 = vpop.f32.mrf.mxu0
  %v2193 = vpop.f32.mrf.mxu0
  %2194 = vdwg.mxu0
  %v2195 = vadd.f32 %v2084, %v2182
  %v2196 = vadd.f32 %v2085, %v2185
  %v2197 = vadd.f32 %v2086, %v2190
  %v2198 = vld [vmem:[#allocation2 + $0x45] sm:$0x7]
  %v2199 = vld [vmem:[#allocation2 + $0x96] sm:$0x7]
  %v2200 = vrot.slane %v1305, 5
  %v2203 = vrot.slane %v2198, 2
  %v2205 = vrot.slane %v1307, 7
  %v2207 = vrot.slane %v1308, 4
  %v2210 = vrot.slane %v2199, 1
  %v2212 = vsel %vm500, %v1304, %v2200
  %v2213 = vsel %vm502, %v2212, %v2203
  %v2214 = vsel %vm504, %v2203, %v2205
  %v2215 = vsel %vm506, %v2214, %v2207
  %v2216 = vsel %vm508, %v2215, %v2210
  %v2217 = vpack.c.bf16 %v2216, %v2213
  %v2218 = vpack.c.bf16 %v2210, %v2210
  %s2219 = scalar_lea.vmem %s4, 480
  %v2220 = vld [vmem:[%s2219] sm:$0xf]
  %v2221 = vld [vmem:[%s2219 + $0x4] sm:$0xf]
  %v2222 = vld [vmem:[%s2219 + $0x8] sm:$0xf]
  %v2223 = vld [vmem:[%s2219 + $0xc] sm:$0xf]
  %v2224 = vld [vmem:[%s2219 + $0x10] sm:$0xf]
  %v2225 = vld [vmem:[%s2219 + $0x14] sm:$0xf]
  %v2226 = vld [vmem:[%s2219 + $0x18] sm:$0xf]
  %v2227 = vld [vmem:[%s2219 + $0x1c] sm:$0xf]
  %v2236 = vunpack.c.l.b16 %v2220
  %v2237 = vunpack.c.l.b16 %v2221
  %v2238 = vunpack.c.l.b16 %v2222
  %v2239 = vunpack.c.l.b16 %v2223
  %v2240 = vunpack.c.l.b16 %v2224
  %v2241 = vunpack.c.l.b16 %v2225
  %v2242 = vunpack.c.l.b16 %v2226
  %v2243 = vunpack.c.l.b16 %v2227
  %v2244 = vpack.c.b16 %v2237, %v2236
  %v2245 = vpack.c.b16 %v2239, %v2238
  %v2246 = vpack.c.b16 %v2241, %v2240
  %v2247 = vpack.c.b16 %v2243, %v2242
  %v2253 = vsel %vm455, %v2217, 0
  %v2256 = vsel %vm455, %v2218, 0
  %2258 = vmatprep.subr.bf16.mxu0 0
  %2259 = vmatpush1.bf16.msra.mxu0 0
  %2260 = vmatprep.subr.bf16.mxu0 0
  %2261 = vmatpush1.bf16.msra.mxu0 0
  %2262 = vmatprep.subr.bf16.mxu0 0
  %2263 = vmatpush1.bf16.msra.mxu0 0
  %2264 = vmatprep.subr.bf16.mxu0 0
  %2265 = vmatpush1.bf16.msra.mxu0 0
  %2266 = vmatprep.subr.bf16.mxu0 0
  %2267 = vmatpush1.bf16.msra.mxu0 %v2247
  %2268 = vmatprep.subr.bf16.mxu0 0
  %2269 = vmatpush1.bf16.msra.mxu0 %v2246
  %2270 = vmatprep.subr.bf16.mxu0 0
  %2271 = vmatpush1.bf16.msra.mxu0 %v2245
  %2272 = vmatprep.subr.bf16.mxu0 0
  %2273 = vmatpush1.bf16.msra.mxu0 %v2244
  %2274 = vmatprep.subr.bf16.mxu0 0
  %2275 = vmatpush2.bf16.msra.mxu0 0
  %2276 = vmatprep.subr.bf16.mxu0 0
  %2277 = vmatpush2.bf16.msra.mxu0 0
  %2278 = vmatprep.subr.bf16.mxu0 0
  %2279 = vmatpush2.bf16.msra.mxu0 0
  %2280 = vmatprep.subr.bf16.mxu0 0
  %2281 = vmatpush2.bf16.msra.mxu0 0
  %2282 = vmatprep.subr.bf16.mxu0 0
  %2283 = vmatpush2.bf16.msra.mxu0 0
  %2284 = vmatprep.subr.bf16.mxu0 0
  %2285 = vmatpush2.bf16.msra.mxu0 0
  %2286 = vmatprep.subr.bf16.mxu0 0
  %2287 = vmatpush2.bf16.msra.mxu0 0
  %2288 = vmatprep.subr.bf16.mxu0 0
  %2289 = vmatpush2.bf16.msra.mxu0 0
  %2290 = vmatprep.mubr.bf16.mxu0 0
  %2291 = vmatmul.mubr.bf16.gmra.mxu0 %v2253
  %v2292 = vpop.f32.mrf.mxu0
  %v2293 = vadd.f32 0.0, %v2292
  %v2294 = vpop.f32.mrf.mxu0
  %v2295 = vpop.f32.mrf.mxu0
  %v2296 = vadd.f32 0.0, %v2295
  %v2297 = vpop.f32.mrf.mxu0
  %2298 = vmatprep.mubr.bf16.mxu0 0
  %2299 = vmatmul.mubr.bf16.gmra.mxu0 %v2256
  %v2300 = vpop.f32.mrf.mxu0
  %v2301 = vadd.f32 0.0, %v2300
  %v2302 = vpop.f32.mrf.mxu0
  %v2303 = vpop.f32.mrf.mxu0
  %v2304 = vpop.f32.mrf.mxu0
  %2305 = vdwg.mxu0
  %v2306 = vadd.f32 %v2195, %v2293
  %v2307 = vadd.f32 %v2196, %v2296
  %v2308 = vadd.f32 %v2197, %v2301
  %v2310 = vlaneseq
  %v2311 = vshrl.u32 %v2310, 7
  %v2312 = vsub.s32 0, %v2311
  %v2313 = vrot.slane %v478, %v2312
  %v2315 = vadd.f32 %v2306, %v2313
  %v2316 = vadd.f32 %v2307, %v2313
  %v2317 = vadd.f32 %v2308, %v2313
  %v2318 = vmax.f32 %v2315, 0.0
  %v2319 = vmax.f32 %v2316, 0.0
  %v2320 = vmax.f32 %v2317, 0.0
  %v2322 = vrot.slane %v2318, 1
  %v2324 = vrot.slane %v2318, 2
  %v2326 = vrot.slane %v2318, 3
  %v2328 = vrot.slane %v2318, 4
  %v2330 = vrot.slane %v2318, 5
  %v2332 = vrot.slane %v2318, 6
  %v2334 = vrot.slane %v2318, 7
  %v2337 = vrot.slane %v2319, 1
  %v2339 = vrot.slane %v2319, 2
  %v2341 = vrot.slane %v2319, 3
  %v2343 = vrot.slane %v2319, 4
  %v2345 = vrot.slane %v2319, 5
  %v2347 = vrot.slane %v2319, 6
  %v2350 = vrot.slane %v2320, 7
  %v2352 = vsel %vm504, %v2318, %v2319
  %v2353 = vsel %vm504, %v2322, %v2337
  %v2354 = vsel %vm504, %v2324, %v2339
  %v2355 = vsel %vm504, %v2326, %v2341
  %v2356 = vsel %vm504, %v2328, %v2343
  %v2357 = vsel %vm504, %v2330, %v2345
  %v2358 = vsel %vm504, %v2332, %v2347
  %v2359 = vsel %vm504, %v2334, %v2350
  %v2360 = vsel %vm504, %v2319, %v2320
  %v2361 = vpack.c.bf16 %v2352, %v2352
  %v2362 = vpack.c.bf16 %v2353, %v2353
  %v2363 = vpack.c.bf16 %v2354, %v2354
  %v2364 = vpack.c.bf16 %v2355, %v2355
  %v2365 = vpack.c.bf16 %v2356, %v2356
  %v2366 = vpack.c.bf16 %v2357, %v2357
  %v2367 = vpack.c.bf16 %v2358, %v2358
  %v2368 = vpack.c.bf16 %v2359, %v2359
  %v2369 = vpack.c.bf16 %v2360, %v2360
  %v2370 = vld [vmem:[%s6] sm:$0xff]
  %v2371 = vld [vmem:[%s6 + $0x8] sm:$0xff]
  %v2372 = vld [vmem:[%s6 + $0x10] sm:$0xff]
  %v2373 = vld [vmem:[%s6 + $0x18] sm:$0xff]
  %v2374 = vld [vmem:[%s6 + $0x20] sm:$0xff]
  %v2375 = vld [vmem:[%s6 + $0x28] sm:$0xff]
  %v2376 = vld [vmem:[%s6 + $0x30] sm:$0xff]
  %v2377 = vld [vmem:[%s6 + $0x38] sm:$0xff]
  %v2378 = vld [vmem:[%s6 + $0x40] sm:$0xff]
  %v2379 = vld [vmem:[%s6 + $0x48] sm:$0xff]
  %v2380 = vld [vmem:[%s6 + $0x50] sm:$0xff]
  %v2381 = vld [vmem:[%s6 + $0x58] sm:$0xff]
  %v2382 = vld [vmem:[%s6 + $0x60] sm:$0xff]
  %v2383 = vld [vmem:[%s6 + $0x68] sm:$0xff]
  %v2384 = vld [vmem:[%s6 + $0x70] sm:$0xff]
  %v2385 = vld [vmem:[%s6 + $0x78] sm:$0xff]
  %v2386 = vld [vmem:[%s6 + $0x80] sm:$0xff]
  %v2387 = vld [vmem:[%s6 + $0x88] sm:$0xff]
  %v2388 = vld [vmem:[%s6 + $0x90] sm:$0xff]
  %v2389 = vld [vmem:[%s6 + $0x98] sm:$0xff]
  %v2390 = vld [vmem:[%s6 + $0xa0] sm:$0xff]
  %v2391 = vld [vmem:[%s6 + $0xa8] sm:$0xff]
  %v2392 = vld [vmem:[%s6 + $0xb0] sm:$0xff]
  %v2393 = vld [vmem:[%s6 + $0xb8] sm:$0xff]
  %v2394 = vld [vmem:[%s6 + $0xc0] sm:$0xff]
  %v2395 = vld [vmem:[%s6 + $0xc8] sm:$0xff]
  %v2396 = vld [vmem:[%s6 + $0xd0] sm:$0xff]
  %v2397 = vld [vmem:[%s6 + $0xd8] sm:$0xff]
  %v2398 = vld [vmem:[%s6 + $0xe0] sm:$0xff]
  %v2399 = vld [vmem:[%s6 + $0xe8] sm:$0xff]
  %v2400 = vld [vmem:[%s6 + $0xf0] sm:$0xff]
  %v2401 = vld [vmem:[%s6 + $0xf8] sm:$0xff]
  %v2402 = vld [vmem:[%s6 + $0x100] sm:$0xff]
  %v2403 = vld [vmem:[%s6 + $0x108] sm:$0xff]
  %v2404 = vld [vmem:[%s6 + $0x110] sm:$0xff]
  %v2405 = vld [vmem:[%s6 + $0x118] sm:$0xff]
  %v2406 = vld [vmem:[%s6 + $0x120] sm:$0xff]
  %v2407 = vld [vmem:[%s6 + $0x128] sm:$0xff]
  %v2408 = vld [vmem:[%s6 + $0x130] sm:$0xff]
  %v2409 = vld [vmem:[%s6 + $0x138] sm:$0xff]
  %v2410 = vld [vmem:[%s6 + $0x140] sm:$0xff]
  %v2411 = vld [vmem:[%s6 + $0x148] sm:$0xff]
  %v2412 = vld [vmem:[%s6 + $0x150] sm:$0xff]
  %v2413 = vld [vmem:[%s6 + $0x158] sm:$0xff]
  %v2414 = vld [vmem:[%s6 + $0x160] sm:$0xff]
  %v2415 = vld [vmem:[%s6 + $0x168] sm:$0xff]
  %v2416 = vld [vmem:[%s6 + $0x170] sm:$0xff]
  %v2417 = vld [vmem:[%s6 + $0x178] sm:$0xff]
  %v2418 = vld [vmem:[%s6 + $0x180] sm:$0xff]
  %v2419 = vld [vmem:[%s6 + $0x188] sm:$0xff]
  %v2420 = vld [vmem:[%s6 + $0x190] sm:$0xff]
  %v2421 = vld [vmem:[%s6 + $0x198] sm:$0xff]
  %v2422 = vld [vmem:[%s6 + $0x1a0] sm:$0xff]
  %v2423 = vld [vmem:[%s6 + $0x1a8] sm:$0xff]
  %v2424 = vld [vmem:[%s6 + $0x1b0] sm:$0xff]
  %v2425 = vld [vmem:[%s6 + $0x1b8] sm:$0xff]
  %v2426 = vld [vmem:[%s6 + $0x1c0] sm:$0xff]
  %v2427 = vld [vmem:[%s6 + $0x1c8] sm:$0xff]
  %v2428 = vld [vmem:[%s6 + $0x1d0] sm:$0xff]
  %v2429 = vld [vmem:[%s6 + $0x1d8] sm:$0xff]
  %v2430 = vld [vmem:[%s6 + $0x1e0] sm:$0xff]
  %v2431 = vld [vmem:[%s6 + $0x1e8] sm:$0xff]
  %v2432 = vld [vmem:[%s6 + $0x1f0] sm:$0xff]
  %v2433 = vld [vmem:[%s6 + $0x1f8] sm:$0xff]
  %v2434 = vld [vmem:[%s6 + $0x200] sm:$0xff]
  %v2435 = vld [vmem:[%s6 + $0x208] sm:$0xff]
  %v2436 = vld [vmem:[%s6 + $0x210] sm:$0xff]
  %v2437 = vld [vmem:[%s6 + $0x218] sm:$0xff]
  %v2438 = vld [vmem:[%s6 + $0x220] sm:$0xff]
  %v2439 = vld [vmem:[%s6 + $0x228] sm:$0xff]
  %v2440 = vld [vmem:[%s6 + $0x230] sm:$0xff]
  %v2441 = vld [vmem:[%s6 + $0x238] sm:$0xff]
  %v2442 = vld [vmem:[%s6 + $0x240] sm:$0xff]
  %v2443 = vld [vmem:[%s6 + $0x248] sm:$0xff]
  %v2444 = vld [vmem:[%s6 + $0x250] sm:$0xff]
  %v2445 = vld [vmem:[%s6 + $0x258] sm:$0xff]
  %v2446 = vld [vmem:[%s6 + $0x260] sm:$0xff]
  %v2447 = vld [vmem:[%s6 + $0x268] sm:$0xff]
  %v2448 = vld [vmem:[%s6 + $0x270] sm:$0xff]
  %v2449 = vld [vmem:[%s6 + $0x278] sm:$0xff]
  %v2450 = vld [vmem:[%s6 + $0x280] sm:$0xff]
  %v2451 = vld [vmem:[%s6 + $0x288] sm:$0xff]
  %v2452 = vld [vmem:[%s6 + $0x290] sm:$0xff]
  %v2453 = vld [vmem:[%s6 + $0x298] sm:$0xff]
  %v2454 = vld [vmem:[%s6 + $0x2a0] sm:$0xff]
  %v2455 = vld [vmem:[%s6 + $0x2a8] sm:$0xff]
  %v2456 = vld [vmem:[%s6 + $0x2b0] sm:$0xff]
  %v2457 = vld [vmem:[%s6 + $0x2b8] sm:$0xff]
  %v2458 = vld [vmem:[%s6 + $0x2c0] sm:$0xff]
  %v2459 = vld [vmem:[%s6 + $0x2c8] sm:$0xff]
  %v2460 = vld [vmem:[%s6 + $0x2d0] sm:$0xff]
  %v2461 = vld [vmem:[%s6 + $0x2d8] sm:$0xff]
  %v2462 = vld [vmem:[%s6 + $0x2e0] sm:$0xff]
  %v2463 = vld [vmem:[%s6 + $0x2e8] sm:$0xff]
  %v2464 = vld [vmem:[%s6 + $0x2f0] sm:$0xff]
  %v2465 = vld [vmem:[%s6 + $0x2f8] sm:$0xff]
  %v2466 = vld [vmem:[%s6 + $0x300] sm:$0xff]
  %v2467 = vld [vmem:[%s6 + $0x308] sm:$0xff]
  %v2468 = vld [vmem:[%s6 + $0x310] sm:$0xff]
  %v2469 = vld [vmem:[%s6 + $0x318] sm:$0xff]
  %v2470 = vld [vmem:[%s6 + $0x320] sm:$0xff]
  %v2471 = vld [vmem:[%s6 + $0x328] sm:$0xff]
  %v2472 = vld [vmem:[%s6 + $0x330] sm:$0xff]
  %v2473 = vld [vmem:[%s6 + $0x338] sm:$0xff]
  %v2474 = vld [vmem:[%s6 + $0x340] sm:$0xff]
  %v2475 = vld [vmem:[%s6 + $0x348] sm:$0xff]
  %v2476 = vld [vmem:[%s6 + $0x350] sm:$0xff]
  %v2477 = vld [vmem:[%s6 + $0x358] sm:$0xff]
  %v2478 = vld [vmem:[%s6 + $0x360] sm:$0xff]
  %v2479 = vld [vmem:[%s6 + $0x368] sm:$0xff]
  %v2480 = vld [vmem:[%s6 + $0x370] sm:$0xff]
  %v2481 = vld [vmem:[%s6 + $0x378] sm:$0xff]
  %v2482 = vld [vmem:[%s6 + $0x380] sm:$0xff]
  %v2483 = vld [vmem:[%s6 + $0x388] sm:$0xff]
  %v2484 = vld [vmem:[%s6 + $0x390] sm:$0xff]
  %v2485 = vld [vmem:[%s6 + $0x398] sm:$0xff]
  %v2486 = vld [vmem:[%s6 + $0x3a0] sm:$0xff]
  %v2487 = vld [vmem:[%s6 + $0x3a8] sm:$0xff]
  %v2488 = vld [vmem:[%s6 + $0x3b0] sm:$0xff]
  %v2489 = vld [vmem:[%s6 + $0x3b8] sm:$0xff]
  %v2490 = vld [vmem:[%s6 + $0x3c0] sm:$0xff]
  %v2491 = vld [vmem:[%s6 + $0x3c8] sm:$0xff]
  %v2492 = vld [vmem:[%s6 + $0x3d0] sm:$0xff]
  %v2493 = vld [vmem:[%s6 + $0x3d8] sm:$0xff]
  %v2494 = vld [vmem:[%s6 + $0x3e0] sm:$0xff]
  %v2495 = vld [vmem:[%s6 + $0x3e8] sm:$0xff]
  %v2496 = vld [vmem:[%s6 + $0x3f0] sm:$0xff]
  %v2497 = vld [vmem:[%s6 + $0x3f8] sm:$0xff]
  %v2498 = vld [vmem:[%s6 + $0x400] sm:$0xff]
  %v2499 = vld [vmem:[%s6 + $0x408] sm:$0xff]
  %v2500 = vld [vmem:[%s6 + $0x410] sm:$0xff]
  %v2501 = vld [vmem:[%s6 + $0x418] sm:$0xff]
  %v2502 = vld [vmem:[%s6 + $0x420] sm:$0xff]
  %v2503 = vld [vmem:[%s6 + $0x428] sm:$0xff]
  %v2504 = vld [vmem:[%s6 + $0x430] sm:$0xff]
  %v2505 = vld [vmem:[%s6 + $0x438] sm:$0xff]
  %v2506 = vld [vmem:[%s6 + $0x440] sm:$0xff]
  %v2507 = vld [vmem:[%s6 + $0x448] sm:$0xff]
  %v2508 = vld [vmem:[%s6 + $0x450] sm:$0xff]
  %v2509 = vld [vmem:[%s6 + $0x458] sm:$0xff]
  %v2510 = vld [vmem:[%s6 + $0x460] sm:$0xff]
  %v2511 = vld [vmem:[%s6 + $0x468] sm:$0xff]
  %v2512 = vld [vmem:[%s6 + $0x470] sm:$0xff]
  %v2513 = vld [vmem:[%s6 + $0x478] sm:$0xff]
  %v2514 = vld [vmem:[%s7] sm:$0x3]
  %v2516 = vlaneseq
  %v2517 = vshrl.u32 %v2516, 7
  %v2518 = vsub.s32 0, %v2517
  %v2519 = vrot.slane %v2514, %v2518
  %v2520 = vlaneseq
  %v2521 = vshrl.u32 %v2520, 7
  %v2522 = vsub.s32 1, %v2521
  %v2523 = vrot.slane %v2514, %v2522
  %v2670 = vunpack.c.l.b16 %v2370
  %v2671 = vunpack.c.h.b16 %v2370
  %v2672 = vunpack.c.l.b16 %v2371
  %v2673 = vunpack.c.h.b16 %v2371
  %v2674 = vunpack.c.l.b16 %v2372
  %v2675 = vunpack.c.h.b16 %v2372
  %v2676 = vunpack.c.l.b16 %v2373
  %v2677 = vunpack.c.h.b16 %v2373
  %v2678 = vunpack.c.l.b16 %v2374
  %v2679 = vunpack.c.h.b16 %v2374
  %v2680 = vunpack.c.l.b16 %v2375
  %v2681 = vunpack.c.h.b16 %v2375
  %v2682 = vunpack.c.l.b16 %v2376
  %v2683 = vunpack.c.h.b16 %v2376
  %v2684 = vunpack.c.l.b16 %v2377
  %v2685 = vunpack.c.h.b16 %v2377
  %v2686 = vunpack.c.l.b16 %v2378
  %v2687 = vunpack.c.h.b16 %v2378
  %v2688 = vunpack.c.l.b16 %v2379
  %v2689 = vunpack.c.h.b16 %v2379
  %v2690 = vunpack.c.l.b16 %v2380
  %v2691 = vunpack.c.h.b16 %v2380
  %v2692 = vunpack.c.l.b16 %v2381
  %v2693 = vunpack.c.h.b16 %v2381
  %v2694 = vunpack.c.l.b16 %v2382
  %v2695 = vunpack.c.h.b16 %v2382
  %v2696 = vunpack.c.l.b16 %v2383
  %v2697 = vunpack.c.h.b16 %v2383
  %v2698 = vunpack.c.l.b16 %v2384
  %v2699 = vunpack.c.h.b16 %v2384
  %v2700 = vunpack.c.l.b16 %v2385
  %v2701 = vunpack.c.h.b16 %v2385
  %v2702 = vunpack.c.l.b16 %v2386
  %v2703 = vunpack.c.h.b16 %v2386
  %v2704 = vunpack.c.l.b16 %v2387
  %v2705 = vunpack.c.h.b16 %v2387
  %v2706 = vunpack.c.l.b16 %v2388
  %v2707 = vunpack.c.h.b16 %v2388
  %v2708 = vunpack.c.l.b16 %v2389
  %v2709 = vunpack.c.h.b16 %v2389
  %v2710 = vunpack.c.l.b16 %v2390
  %v2711 = vunpack.c.h.b16 %v2390
  %v2712 = vunpack.c.l.b16 %v2391
  %v2713 = vunpack.c.h.b16 %v2391
  %v2714 = vunpack.c.l.b16 %v2392
  %v2715 = vunpack.c.h.b16 %v2392
  %v2716 = vunpack.c.l.b16 %v2393
  %v2717 = vunpack.c.h.b16 %v2393
  %v2718 = vunpack.c.l.b16 %v2394
  %v2719 = vunpack.c.h.b16 %v2394
  %v2720 = vunpack.c.l.b16 %v2395
  %v2721 = vunpack.c.h.b16 %v2395
  %v2722 = vunpack.c.l.b16 %v2396
  %v2723 = vunpack.c.h.b16 %v2396
  %v2724 = vunpack.c.l.b16 %v2397
  %v2725 = vunpack.c.h.b16 %v2397
  %v2726 = vunpack.c.l.b16 %v2398
  %v2727 = vunpack.c.h.b16 %v2398
  %v2728 = vunpack.c.l.b16 %v2399
  %v2729 = vunpack.c.h.b16 %v2399
  %v2730 = vunpack.c.l.b16 %v2400
  %v2731 = vunpack.c.h.b16 %v2400
  %v2732 = vunpack.c.l.b16 %v2401
  %v2733 = vunpack.c.h.b16 %v2401
  %v2734 = vunpack.c.l.b16 %v2402
  %v2735 = vunpack.c.h.b16 %v2402
  %v2736 = vunpack.c.l.b16 %v2403
  %v2737 = vunpack.c.h.b16 %v2403
  %v2738 = vunpack.c.l.b16 %v2404
  %v2739 = vunpack.c.h.b16 %v2404
  %v2740 = vunpack.c.l.b16 %v2405
  %v2741 = vunpack.c.h.b16 %v2405
  %v2742 = vunpack.c.l.b16 %v2406
  %v2743 = vunpack.c.h.b16 %v2406
  %v2744 = vunpack.c.l.b16 %v2407
  %v2745 = vunpack.c.h.b16 %v2407
  %v2746 = vunpack.c.l.b16 %v2408
  %v2747 = vunpack.c.h.b16 %v2408
  %v2748 = vunpack.c.l.b16 %v2409
  %v2749 = vunpack.c.h.b16 %v2409
  %v2750 = vunpack.c.l.b16 %v2410
  %v2751 = vunpack.c.h.b16 %v2410
  %v2752 = vunpack.c.l.b16 %v2411
  %v2753 = vunpack.c.h.b16 %v2411
  %v2754 = vunpack.c.l.b16 %v2412
  %v2755 = vunpack.c.h.b16 %v2412
  %v2756 = vunpack.c.l.b16 %v2413
  %v2757 = vunpack.c.h.b16 %v2413
  %v2758 = vunpack.c.l.b16 %v2414
  %v2759 = vunpack.c.h.b16 %v2414
  %v2760 = vunpack.c.l.b16 %v2415
  %v2761 = vunpack.c.h.b16 %v2415
  %v2762 = vunpack.c.l.b16 %v2416
  %v2763 = vunpack.c.h.b16 %v2416
  %v2764 = vunpack.c.l.b16 %v2417
  %v2765 = vunpack.c.h.b16 %v2417
  %v2766 = vunpack.c.l.b16 %v2418
  %v2767 = vunpack.c.h.b16 %v2418
  %v2768 = vunpack.c.l.b16 %v2419
  %v2769 = vunpack.c.h.b16 %v2419
  %v2770 = vunpack.c.l.b16 %v2420
  %v2771 = vunpack.c.h.b16 %v2420
  %v2772 = vunpack.c.l.b16 %v2421
  %v2773 = vunpack.c.h.b16 %v2421
  %v2774 = vunpack.c.l.b16 %v2422
  %v2775 = vunpack.c.h.b16 %v2422
  %v2776 = vunpack.c.l.b16 %v2423
  %v2777 = vunpack.c.h.b16 %v2423
  %v2778 = vunpack.c.l.b16 %v2424
  %v2779 = vunpack.c.h.b16 %v2424
  %v2780 = vunpack.c.l.b16 %v2425
  %v2781 = vunpack.c.h.b16 %v2425
  %v2782 = vunpack.c.l.b16 %v2426
  %v2783 = vunpack.c.h.b16 %v2426
  %v2784 = vunpack.c.l.b16 %v2427
  %v2785 = vunpack.c.h.b16 %v2427
  %v2786 = vunpack.c.l.b16 %v2428
  %v2787 = vunpack.c.h.b16 %v2428
  %v2788 = vunpack.c.l.b16 %v2429
  %v2789 = vunpack.c.h.b16 %v2429
  %v2790 = vunpack.c.l.b16 %v2430
  %v2791 = vunpack.c.h.b16 %v2430
  %v2792 = vunpack.c.l.b16 %v2431
  %v2793 = vunpack.c.h.b16 %v2431
  %v2794 = vunpack.c.l.b16 %v2432
  %v2795 = vunpack.c.h.b16 %v2432
  %v2796 = vunpack.c.l.b16 %v2433
  %v2797 = vunpack.c.h.b16 %v2433
  %v2798 = vunpack.c.l.b16 %v2434
  %v2799 = vunpack.c.h.b16 %v2434
  %v2800 = vunpack.c.l.b16 %v2435
  %v2801 = vunpack.c.h.b16 %v2435
  %v2802 = vunpack.c.l.b16 %v2436
  %v2803 = vunpack.c.h.b16 %v2436
  %v2804 = vunpack.c.l.b16 %v2437
  %v2805 = vunpack.c.h.b16 %v2437
  %v2806 = vunpack.c.l.b16 %v2438
  %v2807 = vunpack.c.h.b16 %v2438
  %v2808 = vunpack.c.l.b16 %v2439
  %v2809 = vunpack.c.h.b16 %v2439
  %v2810 = vunpack.c.l.b16 %v2440
  %v2811 = vunpack.c.h.b16 %v2440
  %v2812 = vunpack.c.l.b16 %v2441
  %v2813 = vunpack.c.h.b16 %v2441
  %v2814 = vunpack.c.l.b16 %v2442
  %v2815 = vunpack.c.h.b16 %v2442
  %v2816 = vunpack.c.l.b16 %v2443
  %v2817 = vunpack.c.h.b16 %v2443
  %v2818 = vunpack.c.l.b16 %v2444
  %v2819 = vunpack.c.h.b16 %v2444
  %v2820 = vunpack.c.l.b16 %v2445
  %v2821 = vunpack.c.h.b16 %v2445
  %v2822 = vunpack.c.l.b16 %v2446
  %v2823 = vunpack.c.h.b16 %v2446
  %v2824 = vunpack.c.l.b16 %v2447
  %v2825 = vunpack.c.h.b16 %v2447
  %v2826 = vunpack.c.l.b16 %v2448
  %v2827 = vunpack.c.h.b16 %v2448
  %v2828 = vunpack.c.l.b16 %v2449
  %v2829 = vunpack.c.h.b16 %v2449
  %v2830 = vunpack.c.l.b16 %v2450
  %v2831 = vunpack.c.h.b16 %v2450
  %v2832 = vunpack.c.l.b16 %v2451
  %v2833 = vunpack.c.h.b16 %v2451
  %v2834 = vunpack.c.l.b16 %v2452
  %v2835 = vunpack.c.h.b16 %v2452
  %v2836 = vunpack.c.l.b16 %v2453
  %v2837 = vunpack.c.h.b16 %v2453
  %v2838 = vunpack.c.l.b16 %v2454
  %v2839 = vunpack.c.h.b16 %v2454
  %v2840 = vunpack.c.l.b16 %v2455
  %v2841 = vunpack.c.h.b16 %v2455
  %v2842 = vunpack.c.l.b16 %v2456
  %v2843 = vunpack.c.h.b16 %v2456
  %v2844 = vunpack.c.l.b16 %v2457
  %v2845 = vunpack.c.h.b16 %v2457
  %v2846 = vunpack.c.l.b16 %v2458
  %v2847 = vunpack.c.h.b16 %v2458
  %v2848 = vunpack.c.l.b16 %v2459
  %v2849 = vunpack.c.h.b16 %v2459
  %v2850 = vunpack.c.l.b16 %v2460
  %v2851 = vunpack.c.h.b16 %v2460
  %v2852 = vunpack.c.l.b16 %v2461
  %v2853 = vunpack.c.h.b16 %v2461
  %v2854 = vunpack.c.l.b16 %v2462
  %v2855 = vunpack.c.h.b16 %v2462
  %v2856 = vunpack.c.l.b16 %v2463
  %v2857 = vunpack.c.h.b16 %v2463
  %v2858 = vunpack.c.l.b16 %v2464
  %v2859 = vunpack.c.h.b16 %v2464
  %v2860 = vunpack.c.l.b16 %v2465
  %v2861 = vunpack.c.h.b16 %v2465
  %v2862 = vunpack.c.l.b16 %v2466
  %v2863 = vunpack.c.h.b16 %v2466
  %v2864 = vunpack.c.l.b16 %v2467
  %v2865 = vunpack.c.h.b16 %v2467
  %v2866 = vunpack.c.l.b16 %v2468
  %v2867 = vunpack.c.h.b16 %v2468
  %v2868 = vunpack.c.l.b16 %v2469
  %v2869 = vunpack.c.h.b16 %v2469
  %v2870 = vunpack.c.l.b16 %v2470
  %v2871 = vunpack.c.h.b16 %v2470
  %v2872 = vunpack.c.l.b16 %v2471
  %v2873 = vunpack.c.h.b16 %v2471
  %v2874 = vunpack.c.l.b16 %v2472
  %v2875 = vunpack.c.h.b16 %v2472
  %v2876 = vunpack.c.l.b16 %v2473
  %v2877 = vunpack.c.h.b16 %v2473
  %v2878 = vunpack.c.l.b16 %v2474
  %v2879 = vunpack.c.h.b16 %v2474
  %v2880 = vunpack.c.l.b16 %v2475
  %v2881 = vunpack.c.h.b16 %v2475
  %v2882 = vunpack.c.l.b16 %v2476
  %v2883 = vunpack.c.h.b16 %v2476
  %v2884 = vunpack.c.l.b16 %v2477
  %v2885 = vunpack.c.h.b16 %v2477
  %v2886 = vunpack.c.l.b16 %v2478
  %v2887 = vunpack.c.h.b16 %v2478
  %v2888 = vunpack.c.l.b16 %v2479
  %v2889 = vunpack.c.h.b16 %v2479
  %v2890 = vunpack.c.l.b16 %v2480
  %v2891 = vunpack.c.h.b16 %v2480
  %v2892 = vunpack.c.l.b16 %v2481
  %v2893 = vunpack.c.h.b16 %v2481
  %v2894 = vunpack.c.l.b16 %v2482
  %v2895 = vunpack.c.h.b16 %v2482
  %v2896 = vunpack.c.l.b16 %v2483
  %v2897 = vunpack.c.h.b16 %v2483
  %v2898 = vunpack.c.l.b16 %v2484
  %v2899 = vunpack.c.h.b16 %v2484
  %v2900 = vunpack.c.l.b16 %v2485
  %v2901 = vunpack.c.h.b16 %v2485
  %v2902 = vunpack.c.l.b16 %v2486
  %v2903 = vunpack.c.h.b16 %v2486
  %v2904 = vunpack.c.l.b16 %v2487
  %v2905 = vunpack.c.h.b16 %v2487
  %v2906 = vunpack.c.l.b16 %v2488
  %v2907 = vunpack.c.h.b16 %v2488
  %v2908 = vunpack.c.l.b16 %v2489
  %v2909 = vunpack.c.h.b16 %v2489
  %v2910 = vunpack.c.l.b16 %v2490
  %v2911 = vunpack.c.h.b16 %v2490
  %v2912 = vunpack.c.l.b16 %v2491
  %v2913 = vunpack.c.h.b16 %v2491
  %v2914 = vunpack.c.l.b16 %v2492
  %v2915 = vunpack.c.h.b16 %v2492
  %v2916 = vunpack.c.l.b16 %v2493
  %v2917 = vunpack.c.h.b16 %v2493
  %v2918 = vunpack.c.l.b16 %v2494
  %v2919 = vunpack.c.h.b16 %v2494
  %v2920 = vunpack.c.l.b16 %v2495
  %v2921 = vunpack.c.h.b16 %v2495
  %v2922 = vunpack.c.l.b16 %v2496
  %v2923 = vunpack.c.h.b16 %v2496
  %v2924 = vunpack.c.l.b16 %v2497
  %v2925 = vunpack.c.h.b16 %v2497
  %v2926 = vunpack.c.l.b16 %v2498
  %v2927 = vunpack.c.h.b16 %v2498
  %v2928 = vunpack.c.l.b16 %v2499
  %v2929 = vunpack.c.h.b16 %v2499
  %v2930 = vunpack.c.l.b16 %v2500
  %v2931 = vunpack.c.h.b16 %v2500
  %v2932 = vunpack.c.l.b16 %v2501
  %v2933 = vunpack.c.h.b16 %v2501
  %v2934 = vunpack.c.l.b16 %v2502
  %v2935 = vunpack.c.h.b16 %v2502
  %v2936 = vunpack.c.l.b16 %v2503
  %v2937 = vunpack.c.h.b16 %v2503
  %v2938 = vunpack.c.l.b16 %v2504
  %v2939 = vunpack.c.h.b16 %v2504
  %v2940 = vunpack.c.l.b16 %v2505
  %v2941 = vunpack.c.h.b16 %v2505
  %v2942 = vunpack.c.l.b16 %v2506
  %v2943 = vunpack.c.h.b16 %v2506
  %v2944 = vunpack.c.l.b16 %v2507
  %v2945 = vunpack.c.h.b16 %v2507
  %v2946 = vunpack.c.l.b16 %v2508
  %v2947 = vunpack.c.h.b16 %v2508
  %v2948 = vunpack.c.l.b16 %v2509
  %v2949 = vunpack.c.h.b16 %v2509
  %v2950 = vunpack.c.l.b16 %v2510
  %v2951 = vunpack.c.h.b16 %v2510
  %v2952 = vunpack.c.l.b16 %v2511
  %v2953 = vunpack.c.h.b16 %v2511
  %v2954 = vunpack.c.l.b16 %v2512
  %v2955 = vunpack.c.h.b16 %v2512
  %v2956 = vunpack.c.l.b16 %v2513
  %v2957 = vunpack.c.h.b16 %v2513
  %v2958 = vpack.c.b16 %v2672, %v2670
  %v2959 = vpack.c.b16 %v2673, %v2671
  %v2960 = vpack.c.b16 %v2676, %v2674
  %v2961 = vpack.c.b16 %v2677, %v2675
  %v2962 = vpack.c.b16 %v2680, %v2678
  %v2963 = vpack.c.b16 %v2681, %v2679
  %v2964 = vpack.c.b16 %v2684, %v2682
  %v2965 = vpack.c.b16 %v2685, %v2683
  %v2966 = vpack.c.b16 %v2688, %v2686
  %v2967 = vpack.c.b16 %v2689, %v2687
  %v2968 = vpack.c.b16 %v2692, %v2690
  %v2969 = vpack.c.b16 %v2693, %v2691
  %v2970 = vpack.c.b16 %v2696, %v2694
  %v2971 = vpack.c.b16 %v2697, %v2695
  %v2972 = vpack.c.b16 %v2700, %v2698
  %v2973 = vpack.c.b16 %v2701, %v2699
  %v2974 = vpack.c.b16 %v2704, %v2702
  %v2975 = vpack.c.b16 %v2705, %v2703
  %v2976 = vpack.c.b16 %v2708, %v2706
  %v2977 = vpack.c.b16 %v2709, %v2707
  %v2978 = vpack.c.b16 %v2712, %v2710
  %v2979 = vpack.c.b16 %v2713, %v2711
  %v2980 = vpack.c.b16 %v2716, %v2714
  %v2981 = vpack.c.b16 %v2717, %v2715
  %v2982 = vpack.c.b16 %v2720, %v2718
  %v2983 = vpack.c.b16 %v2721, %v2719
  %v2984 = vpack.c.b16 %v2724, %v2722
  %v2985 = vpack.c.b16 %v2725, %v2723
  %v2986 = vpack.c.b16 %v2728, %v2726
  %v2987 = vpack.c.b16 %v2729, %v2727
  %v2988 = vpack.c.b16 %v2732, %v2730
  %v2989 = vpack.c.b16 %v2733, %v2731
  %v2990 = vpack.c.b16 %v2736, %v2734
  %v2991 = vpack.c.b16 %v2737, %v2735
  %v2992 = vpack.c.b16 %v2740, %v2738
  %v2993 = vpack.c.b16 %v2741, %v2739
  %v2994 = vpack.c.b16 %v2744, %v2742
  %v2995 = vpack.c.b16 %v2745, %v2743
  %v2996 = vpack.c.b16 %v2748, %v2746
  %v2997 = vpack.c.b16 %v2749, %v2747
  %v2998 = vpack.c.b16 %v2752, %v2750
  %v2999 = vpack.c.b16 %v2753, %v2751
  %v3000 = vpack.c.b16 %v2756, %v2754
  %v3001 = vpack.c.b16 %v2757, %v2755
  %v3002 = vpack.c.b16 %v2760, %v2758
  %v3003 = vpack.c.b16 %v2761, %v2759
  %v3004 = vpack.c.b16 %v2764, %v2762
  %v3005 = vpack.c.b16 %v2765, %v2763
  %v3006 = vpack.c.b16 %v2768, %v2766
  %v3007 = vpack.c.b16 %v2769, %v2767
  %v3008 = vpack.c.b16 %v2772, %v2770
  %v3009 = vpack.c.b16 %v2773, %v2771
  %v3010 = vpack.c.b16 %v2776, %v2774
  %v3011 = vpack.c.b16 %v2777, %v2775
  %v3012 = vpack.c.b16 %v2780, %v2778
  %v3013 = vpack.c.b16 %v2781, %v2779
  %v3014 = vpack.c.b16 %v2784, %v2782
  %v3015 = vpack.c.b16 %v2785, %v2783
  %v3016 = vpack.c.b16 %v2788, %v2786
  %v3017 = vpack.c.b16 %v2789, %v2787
  %v3018 = vpack.c.b16 %v2792, %v2790
  %v3019 = vpack.c.b16 %v2793, %v2791
  %v3020 = vpack.c.b16 %v2796, %v2794
  %v3021 = vpack.c.b16 %v2797, %v2795
  %v3022 = vpack.c.b16 %v2800, %v2798
  %v3023 = vpack.c.b16 %v2801, %v2799
  %v3024 = vpack.c.b16 %v2804, %v2802
  %v3025 = vpack.c.b16 %v2805, %v2803
  %v3026 = vpack.c.b16 %v2808, %v2806
  %v3027 = vpack.c.b16 %v2809, %v2807
  %v3028 = vpack.c.b16 %v2812, %v2810
  %v3029 = vpack.c.b16 %v2813, %v2811
  %v3030 = vpack.c.b16 %v2816, %v2814
  %v3031 = vpack.c.b16 %v2817, %v2815
  %v3032 = vpack.c.b16 %v2820, %v2818
  %v3033 = vpack.c.b16 %v2821, %v2819
  %v3034 = vpack.c.b16 %v2824, %v2822
  %v3035 = vpack.c.b16 %v2825, %v2823
  %v3036 = vpack.c.b16 %v2828, %v2826
  %v3037 = vpack.c.b16 %v2829, %v2827
  %v3038 = vpack.c.b16 %v2832, %v2830
  %v3039 = vpack.c.b16 %v2833, %v2831
  %v3040 = vpack.c.b16 %v2836, %v2834
  %v3041 = vpack.c.b16 %v2837, %v2835
  %v3042 = vpack.c.b16 %v2840, %v2838
  %v3043 = vpack.c.b16 %v2841, %v2839
  %v3044 = vpack.c.b16 %v2844, %v2842
  %v3045 = vpack.c.b16 %v2845, %v2843
  %v3046 = vpack.c.b16 %v2848, %v2846
  %v3047 = vpack.c.b16 %v2849, %v2847
  %v3048 = vpack.c.b16 %v2852, %v2850
  %v3049 = vpack.c.b16 %v2853, %v2851
  %v3050 = vpack.c.b16 %v2856, %v2854
  %v3051 = vpack.c.b16 %v2857, %v2855
  %v3052 = vpack.c.b16 %v2860, %v2858
  %v3053 = vpack.c.b16 %v2861, %v2859
  %v3054 = vpack.c.b16 %v2864, %v2862
  %v3055 = vpack.c.b16 %v2865, %v2863
  %v3056 = vpack.c.b16 %v2868, %v2866
  %v3057 = vpack.c.b16 %v2869, %v2867
  %v3058 = vpack.c.b16 %v2872, %v2870
  %v3059 = vpack.c.b16 %v2873, %v2871
  %v3060 = vpack.c.b16 %v2876, %v2874
  %v3061 = vpack.c.b16 %v2877, %v2875
  %v3062 = vpack.c.b16 %v2880, %v2878
  %v3063 = vpack.c.b16 %v2881, %v2879
  %v3064 = vpack.c.b16 %v2884, %v2882
  %v3065 = vpack.c.b16 %v2885, %v2883
  %v3066 = vpack.c.b16 %v2888, %v2886
  %v3067 = vpack.c.b16 %v2889, %v2887
  %v3068 = vpack.c.b16 %v2892, %v2890
  %v3069 = vpack.c.b16 %v2893, %v2891
  %v3070 = vpack.c.b16 %v2896, %v2894
  %v3071 = vpack.c.b16 %v2897, %v2895
  %v3072 = vpack.c.b16 %v2900, %v2898
  %v3073 = vpack.c.b16 %v2901, %v2899
  %v3074 = vpack.c.b16 %v2904, %v2902
  %v3075 = vpack.c.b16 %v2905, %v2903
  %v3076 = vpack.c.b16 %v2908, %v2906
  %v3077 = vpack.c.b16 %v2909, %v2907
  %v3078 = vpack.c.b16 %v2912, %v2910
  %v3079 = vpack.c.b16 %v2913, %v2911
  %v3080 = vpack.c.b16 %v2916, %v2914
  %v3081 = vpack.c.b16 %v2917, %v2915
  %v3082 = vpack.c.b16 %v2920, %v2918
  %v3083 = vpack.c.b16 %v2921, %v2919
  %v3084 = vpack.c.b16 %v2924, %v2922
  %v3085 = vpack.c.b16 %v2925, %v2923
  %v3086 = vpack.c.b16 %v2928, %v2926
  %v3087 = vpack.c.b16 %v2929, %v2927
  %v3088 = vpack.c.b16 %v2932, %v2930
  %v3089 = vpack.c.b16 %v2933, %v2931
  %v3090 = vpack.c.b16 %v2936, %v2934
  %v3091 = vpack.c.b16 %v2937, %v2935
  %v3092 = vpack.c.b16 %v2940, %v2938
  %v3093 = vpack.c.b16 %v2941, %v2939
  %v3094 = vpack.c.b16 %v2944, %v2942
  %v3095 = vpack.c.b16 %v2945, %v2943
  %v3096 = vpack.c.b16 %v2948, %v2946
  %v3097 = vpack.c.b16 %v2949, %v2947
  %v3098 = vpack.c.b16 %v2952, %v2950
  %v3099 = vpack.c.b16 %v2953, %v2951
  %v3100 = vpack.c.b16 %v2956, %v2954
  %v3101 = vpack.c.b16 %v2957, %v2955
  %3246 = vmatprep.subr.bf16.mxu0 %v2973
  %3247 = vmatpush1.bf16.msra.mxu0 %v2972
  %3248 = vmatprep.subr.bf16.mxu0 %v2971
  %3249 = vmatpush1.bf16.msra.mxu0 %v2970
  %3250 = vmatprep.subr.bf16.mxu0 %v2969
  %3251 = vmatpush1.bf16.msra.mxu0 %v2968
  %3252 = vmatprep.subr.bf16.mxu0 %v2967
  %3253 = vmatpush1.bf16.msra.mxu0 %v2966
  %3254 = vmatprep.subr.bf16.mxu0 %v2965
  %3255 = vmatpush1.bf16.msra.mxu0 %v2964
  %3256 = vmatprep.subr.bf16.mxu0 %v2963
  %3257 = vmatpush1.bf16.msra.mxu0 %v2962
  %3258 = vmatprep.subr.bf16.mxu0 %v2961
  %3259 = vmatpush1.bf16.msra.mxu0 %v2960
  %3260 = vmatprep.subr.bf16.mxu0 %v2959
  %3261 = vmatpush1.bf16.msra.mxu0 %v2958
  %3262 = vmatprep.subr.bf16.mxu0 %v2989
  %3263 = vmatpush2.bf16.msra.mxu0 %v2988
  %3264 = vmatprep.subr.bf16.mxu0 %v2987
  %3265 = vmatpush2.bf16.msra.mxu0 %v2986
  %3266 = vmatprep.subr.bf16.mxu0 %v2985
  %3267 = vmatpush2.bf16.msra.mxu0 %v2984
  %3268 = vmatprep.subr.bf16.mxu0 %v2983
  %3269 = vmatpush2.bf16.msra.mxu0 %v2982
  %3270 = vmatprep.subr.bf16.mxu0 %v2981
  %3271 = vmatpush2.bf16.msra.mxu0 %v2980
  %3272 = vmatprep.subr.bf16.mxu0 %v2979
  %3273 = vmatpush2.bf16.msra.mxu0 %v2978
  %3274 = vmatprep.subr.bf16.mxu0 %v2977
  %3275 = vmatpush2.bf16.msra.mxu0 %v2976
  %3276 = vmatprep.subr.bf16.mxu0 %v2975
  %3277 = vmatpush2.bf16.msra.mxu0 %v2974
  %3278 = vmatprep.mubr.bf16.mxu0 %v2362
  %3279 = vmatmul.mubr.bf16.gmra.mxu0 %v2361
  %v3280 = vpop.f32.mrf.mxu0
  %v3281 = vadd.f32 %v2519, %v3280
  %v3282 = vpop.f32.mrf.mxu0
  %v3283 = vadd.f32 %v2523, %v3282
  %v3284 = vpop.f32.mrf.mxu0
  %v3285 = vpop.f32.mrf.mxu0
  %3286 = vdwg.mxu0
  %3287 = vmatprep.subr.bf16.mxu0 %v3005
  %3288 = vmatpush1.bf16.msra.mxu0 %v3004
  %3289 = vmatprep.subr.bf16.mxu0 %v3003
  %3290 = vmatpush1.bf16.msra.mxu0 %v3002
  %3291 = vmatprep.subr.bf16.mxu0 %v3001
  %3292 = vmatpush1.bf16.msra.mxu0 %v3000
  %3293 = vmatprep.subr.bf16.mxu0 %v2999
  %3294 = vmatpush1.bf16.msra.mxu0 %v2998
  %3295 = vmatprep.subr.bf16.mxu0 %v2997
  %3296 = vmatpush1.bf16.msra.mxu0 %v2996
  %3297 = vmatprep.subr.bf16.mxu0 %v2995
  %3298 = vmatpush1.bf16.msra.mxu0 %v2994
  %3299 = vmatprep.subr.bf16.mxu0 %v2993
  %3300 = vmatpush1.bf16.msra.mxu0 %v2992
  %3301 = vmatprep.subr.bf16.mxu0 %v2991
  %3302 = vmatpush1.bf16.msra.mxu0 %v2990
  %3303 = vmatprep.subr.bf16.mxu0 %v3021
  %3304 = vmatpush2.bf16.msra.mxu0 %v3020
  %3305 = vmatprep.subr.bf16.mxu0 %v3019
  %3306 = vmatpush2.bf16.msra.mxu0 %v3018
  %3307 = vmatprep.subr.bf16.mxu0 %v3017
  %3308 = vmatpush2.bf16.msra.mxu0 %v3016
  %3309 = vmatprep.subr.bf16.mxu0 %v3015
  %3310 = vmatpush2.bf16.msra.mxu0 %v3014
  %3311 = vmatprep.subr.bf16.mxu0 %v3013
  %3312 = vmatpush2.bf16.msra.mxu0 %v3012
  %3313 = vmatprep.subr.bf16.mxu0 %v3011
  %3314 = vmatpush2.bf16.msra.mxu0 %v3010
  %3315 = vmatprep.subr.bf16.mxu0 %v3009
  %3316 = vmatpush2.bf16.msra.mxu0 %v3008
  %3317 = vmatprep.subr.bf16.mxu0 %v3007
  %3318 = vmatpush2.bf16.msra.mxu0 %v3006
  %3319 = vmatprep.mubr.bf16.mxu0 %v2364
  %3320 = vmatmul.mubr.bf16.gmra.mxu0 %v2363
  %v3321 = vpop.f32.mrf.mxu0
  %v3322 = vadd.f32 %v3281, %v3321
  %v3323 = vpop.f32.mrf.mxu0
  %v3324 = vadd.f32 %v3283, %v3323
  %v3325 = vpop.f32.mrf.mxu0
  %v3326 = vpop.f32.mrf.mxu0
  %3327 = vdwg.mxu0
  %3328 = vmatprep.subr.bf16.mxu0 %v3037
  %3329 = vmatpush1.bf16.msra.mxu0 %v3036
  %3330 = vmatprep.subr.bf16.mxu0 %v3035
  %3331 = vmatpush1.bf16.msra.mxu0 %v3034
  %3332 = vmatprep.subr.bf16.mxu0 %v3033
  %3333 = vmatpush1.bf16.msra.mxu0 %v3032
  %3334 = vmatprep.subr.bf16.mxu0 %v3031
  %3335 = vmatpush1.bf16.msra.mxu0 %v3030
  %3336 = vmatprep.subr.bf16.mxu0 %v3029
  %3337 = vmatpush1.bf16.msra.mxu0 %v3028
  %3338 = vmatprep.subr.bf16.mxu0 %v3027
  %3339 = vmatpush1.bf16.msra.mxu0 %v3026
  %3340 = vmatprep.subr.bf16.mxu0 %v3025
  %3341 = vmatpush1.bf16.msra.mxu0 %v3024
  %3342 = vmatprep.subr.bf16.mxu0 %v3023
  %3343 = vmatpush1.bf16.msra.mxu0 %v3022
  %3344 = vmatprep.subr.bf16.mxu0 %v3053
  %3345 = vmatpush2.bf16.msra.mxu0 %v3052
  %3346 = vmatprep.subr.bf16.mxu0 %v3051
  %3347 = vmatpush2.bf16.msra.mxu0 %v3050
  %3348 = vmatprep.subr.bf16.mxu0 %v3049
  %3349 = vmatpush2.bf16.msra.mxu0 %v3048
  %3350 = vmatprep.subr.bf16.mxu0 %v3047
  %3351 = vmatpush2.bf16.msra.mxu0 %v3046
  %3352 = vmatprep.subr.bf16.mxu0 %v3045
  %3353 = vmatpush2.bf16.msra.mxu0 %v3044
  %3354 = vmatprep.subr.bf16.mxu0 %v3043
  %3355 = vmatpush2.bf16.msra.mxu0 %v3042
  %3356 = vmatprep.subr.bf16.mxu0 %v3041
  %3357 = vmatpush2.bf16.msra.mxu0 %v3040
  %3358 = vmatprep.subr.bf16.mxu0 %v3039
  %3359 = vmatpush2.bf16.msra.mxu0 %v3038
  %3360 = vmatprep.mubr.bf16.mxu0 %v2366
  %3361 = vmatmul.mubr.bf16.gmra.mxu0 %v2365
  %v3362 = vpop.f32.mrf.mxu0
  %v3363 = vadd.f32 %v3322, %v3362
  %v3364 = vpop.f32.mrf.mxu0
  %v3365 = vadd.f32 %v3324, %v3364
  %v3366 = vpop.f32.mrf.mxu0
  %v3367 = vpop.f32.mrf.mxu0
  %3368 = vdwg.mxu0
  %3369 = vmatprep.subr.bf16.mxu0 %v3069
  %3370 = vmatpush1.bf16.msra.mxu0 %v3068
  %3371 = vmatprep.subr.bf16.mxu0 %v3067
  %3372 = vmatpush1.bf16.msra.mxu0 %v3066
  %3373 = vmatprep.subr.bf16.mxu0 %v3065
  %3374 = vmatpush1.bf16.msra.mxu0 %v3064
  %3375 = vmatprep.subr.bf16.mxu0 %v3063
  %3376 = vmatpush1.bf16.msra.mxu0 %v3062
  %3377 = vmatprep.subr.bf16.mxu0 %v3061
  %3378 = vmatpush1.bf16.msra.mxu0 %v3060
  %3379 = vmatprep.subr.bf16.mxu0 %v3059
  %3380 = vmatpush1.bf16.msra.mxu0 %v3058
  %3381 = vmatprep.subr.bf16.mxu0 %v3057
  %3382 = vmatpush1.bf16.msra.mxu0 %v3056
  %3383 = vmatprep.subr.bf16.mxu0 %v3055
  %3384 = vmatpush1.bf16.msra.mxu0 %v3054
  %3385 = vmatprep.subr.bf16.mxu0 %v3085
  %3386 = vmatpush2.bf16.msra.mxu0 %v3084
  %3387 = vmatprep.subr.bf16.mxu0 %v3083
  %3388 = vmatpush2.bf16.msra.mxu0 %v3082
  %3389 = vmatprep.subr.bf16.mxu0 %v3081
  %3390 = vmatpush2.bf16.msra.mxu0 %v3080
  %3391 = vmatprep.subr.bf16.mxu0 %v3079
  %3392 = vmatpush2.bf16.msra.mxu0 %v3078
  %3393 = vmatprep.subr.bf16.mxu0 %v3077
  %3394 = vmatpush2.bf16.msra.mxu0 %v3076
  %3395 = vmatprep.subr.bf16.mxu0 %v3075
  %3396 = vmatpush2.bf16.msra.mxu0 %v3074
  %3397 = vmatprep.subr.bf16.mxu0 %v3073
  %3398 = vmatpush2.bf16.msra.mxu0 %v3072
  %3399 = vmatprep.subr.bf16.mxu0 %v3071
  %3400 = vmatpush2.bf16.msra.mxu0 %v3070
  %3401 = vmatprep.mubr.bf16.mxu0 %v2368
  %3402 = vmatmul.mubr.bf16.gmra.mxu0 %v2367
  %v3403 = vpop.f32.mrf.mxu0
  %v3404 = vadd.f32 %v3363, %v3403
  %v3405 = vpop.f32.mrf.mxu0
  %v3406 = vadd.f32 %v3365, %v3405
  %v3407 = vpop.f32.mrf.mxu0
  %v3408 = vpop.f32.mrf.mxu0
  %3409 = vdwg.mxu0
  %3410 = vmatprep.subr.bf16.mxu0 %v3101
  %3411 = vmatpush1.bf16.msra.mxu0 %v3100
  %3412 = vmatprep.subr.bf16.mxu0 %v3099
  %3413 = vmatpush1.bf16.msra.mxu0 %v3098
  %3414 = vmatprep.subr.bf16.mxu0 %v3097
  %3415 = vmatpush1.bf16.msra.mxu0 %v3096
  %3416 = vmatprep.subr.bf16.mxu0 %v3095
  %3417 = vmatpush1.bf16.msra.mxu0 %v3094
  %3418 = vmatprep.subr.bf16.mxu0 %v3093
  %3419 = vmatpush1.bf16.msra.mxu0 %v3092
  %3420 = vmatprep.subr.bf16.mxu0 %v3091
  %3421 = vmatpush1.bf16.msra.mxu0 %v3090
  %3422 = vmatprep.subr.bf16.mxu0 %v3089
  %3423 = vmatpush1.bf16.msra.mxu0 %v3088
  %3424 = vmatprep.subr.bf16.mxu0 %v3087
  %3425 = vmatpush1.bf16.msra.mxu0 %v3086
  %3426 = vmatprep.subr.bf16.mxu0 0
  %3427 = vmatpush2.bf16.msra.mxu0 0
  %3428 = vmatprep.subr.bf16.mxu0 0
  %3429 = vmatpush2.bf16.msra.mxu0 0
  %3430 = vmatprep.subr.bf16.mxu0 0
  %3431 = vmatpush2.bf16.msra.mxu0 0
  %3432 = vmatprep.subr.bf16.mxu0 0
  %3433 = vmatpush2.bf16.msra.mxu0 0
  %3434 = vmatprep.subr.bf16.mxu0 0
  %3435 = vmatpush2.bf16.msra.mxu0 0
  %3436 = vmatprep.subr.bf16.mxu0 0
  %3437 = vmatpush2.bf16.msra.mxu0 0
  %3438 = vmatprep.subr.bf16.mxu0 0
  %3439 = vmatpush2.bf16.msra.mxu0 0
  %3440 = vmatprep.subr.bf16.mxu0 0
  %3441 = vmatpush2.bf16.msra.mxu0 0
  %3442 = vmatprep.mubr.bf16.mxu0 0
  %3443 = vmatmul.mubr.bf16.gmra.mxu0 %v2369
  %v3444 = vpop.f32.mrf.mxu0
  %v3445 = vadd.f32 %v3404, %v3444
  %v3446 = vpop.f32.mrf.mxu0
  %v3447 = vadd.f32 %v3406, %v3446
  %v3448 = vpop.f32.mrf.mxu0
  %v3449 = vpop.f32.mrf.mxu0
  %3450 = vdwg.mxu0
  %v3451 = vmax.f32 %v3445, 0.0
  %v3452 = vmax.f32 %v3447, 0.0
  %v3453 = vpack.c.bf16 %v3451, %v3451
  %v3454 = vpack.c.bf16 %v3452, %v3452
  %v3455 = vld [vmem:[%s8] sm:$0xff]
  %v3456 = vld [vmem:[%s8 + $0x8] sm:$0xff]
  %v3457 = vld [vmem:[%s8 + $0x10] sm:$0xff]
  %v3458 = vld [vmem:[%s8 + $0x18] sm:$0xff]
  %v3459 = vld [vmem:[%s8 + $0x20] sm:$0xff]
  %v3460 = vld [vmem:[%s8 + $0x28] sm:$0xff]
  %v3461 = vld [vmem:[%s8 + $0x30] sm:$0xff]
  %v3462 = vld [vmem:[%s8 + $0x38] sm:$0xff]
  %v3463 = vld [vmem:[%s8 + $0x40] sm:$0xff]
  %v3464 = vld [vmem:[%s8 + $0x48] sm:$0xff]
  %v3465 = vld [vmem:[%s8 + $0x50] sm:$0xff]
  %v3466 = vld [vmem:[%s8 + $0x58] sm:$0xff]
  %v3467 = vld [vmem:[%s8 + $0x60] sm:$0xff]
  %v3468 = vld [vmem:[%s8 + $0x68] sm:$0xff]
  %v3469 = vld [vmem:[%s8 + $0x70] sm:$0xff]
  %v3470 = vld [vmem:[%s8 + $0x78] sm:$0xff]
  %v3471 = vld [vmem:[%s8 + $0x80] sm:$0xff]
  %v3472 = vld [vmem:[%s8 + $0x88] sm:$0xff]
  %v3473 = vld [vmem:[%s8 + $0x90] sm:$0xff]
  %v3474 = vld [vmem:[%s8 + $0x98] sm:$0xff]
  %v3475 = vld [vmem:[%s8 + $0xa0] sm:$0xff]
  %v3476 = vld [vmem:[%s8 + $0xa8] sm:$0xff]
  %v3477 = vld [vmem:[%s8 + $0xb0] sm:$0xff]
  %v3478 = vld [vmem:[%s8 + $0xb8] sm:$0xff]
  %v3479 = vld [vmem:[%s8 + $0xc0] sm:$0xff]
  %v3480 = vld [vmem:[%s8 + $0xc8] sm:$0xff]
  %v3481 = vld [vmem:[%s8 + $0xd0] sm:$0xff]
  %v3482 = vld [vmem:[%s8 + $0xd8] sm:$0xff]
  %v3483 = vld [vmem:[%s8 + $0xe0] sm:$0xff]
  %v3484 = vld [vmem:[%s8 + $0xe8] sm:$0xff]
  %v3485 = vld [vmem:[%s8 + $0xf0] sm:$0xff]
  %v3486 = vld [vmem:[%s8 + $0xf8] sm:$0xff]
  %v3487 = vld [vmem:[%s8 + $0x100] sm:$0xff]
  %v3488 = vld [vmem:[%s8 + $0x108] sm:$0xff]
  %v3489 = vld [vmem:[%s8 + $0x110] sm:$0xff]
  %v3490 = vld [vmem:[%s8 + $0x118] sm:$0xff]
  %v3491 = vld [vmem:[%s8 + $0x120] sm:$0xff]
  %v3492 = vld [vmem:[%s8 + $0x128] sm:$0xff]
  %v3493 = vld [vmem:[%s8 + $0x130] sm:$0xff]
  %v3494 = vld [vmem:[%s8 + $0x138] sm:$0xff]
  %v3495 = vld [vmem:[%s8 + $0x140] sm:$0xff]
  %v3496 = vld [vmem:[%s8 + $0x148] sm:$0xff]
  %v3497 = vld [vmem:[%s8 + $0x150] sm:$0xff]
  %v3498 = vld [vmem:[%s8 + $0x158] sm:$0xff]
  %v3499 = vld [vmem:[%s8 + $0x160] sm:$0xff]
  %v3500 = vld [vmem:[%s8 + $0x168] sm:$0xff]
  %v3501 = vld [vmem:[%s8 + $0x170] sm:$0xff]
  %v3502 = vld [vmem:[%s8 + $0x178] sm:$0xff]
  %v3503 = vld [vmem:[%s8 + $0x180] sm:$0xff]
  %v3504 = vld [vmem:[%s8 + $0x188] sm:$0xff]
  %v3505 = vld [vmem:[%s8 + $0x190] sm:$0xff]
  %v3506 = vld [vmem:[%s8 + $0x198] sm:$0xff]
  %v3507 = vld [vmem:[%s8 + $0x1a0] sm:$0xff]
  %v3508 = vld [vmem:[%s8 + $0x1a8] sm:$0xff]
  %v3509 = vld [vmem:[%s8 + $0x1b0] sm:$0xff]
  %v3510 = vld [vmem:[%s8 + $0x1b8] sm:$0xff]
  %v3511 = vld [vmem:[%s8 + $0x1c0] sm:$0xff]
  %v3512 = vld [vmem:[%s8 + $0x1c8] sm:$0xff]
  %v3513 = vld [vmem:[%s8 + $0x1d0] sm:$0xff]
  %v3514 = vld [vmem:[%s8 + $0x1d8] sm:$0xff]
  %v3515 = vld [vmem:[%s8 + $0x1e0] sm:$0xff]
  %v3516 = vld [vmem:[%s8 + $0x1e8] sm:$0xff]
  %v3517 = vld [vmem:[%s8 + $0x1f0] sm:$0xff]
  %v3518 = vld [vmem:[%s8 + $0x1f8] sm:$0xff]
  %v3519 = vld [vmem:[%s1] sm:$0x3]
  %v3520 = vld [vmem:[%s9] sm:$0xf]
  %3522 = vset.pattern.permute.xlu0 0
  %3523 = vperm.xlu0 %3522, %v3519
  %v3524 = vpop.permute.xlu0 %3523
  %v3527 = vlaneseq
  %v3528 = vshrl.u32 %v3527, 7
  %v3529 = vsub.s32 0, %v3528
  %v3530 = vrot.slane %v3520, %v3529
  %v3531 = vlaneseq
  %v3532 = vshrl.u32 %v3531, 7
  %v3533 = vsub.s32 1, %v3532
  %v3534 = vrot.slane %v3520, %v3533
  %v3535 = vlaneseq
  %v3536 = vshrl.u32 %v3535, 7
  %v3537 = vsub.s32 2, %v3536
  %v3538 = vrot.slane %v3520, %v3537
  %v3539 = vlaneseq
  %v3540 = vshrl.u32 %v3539, 7
  %v3541 = vsub.s32 3, %v3540
  %v3542 = vrot.slane %v3520, %v3541
  %v3547 = vmul.f32 %v3524, %v3530
  %v3548 = vmul.f32 %v3524, %v3534
  %v3549 = vmul.f32 %v3524, %v3538
  %v3550 = vmul.f32 %v3524, %v3542
  %v3615 = vunpack.c.l.b16 %v3455
  %v3616 = vunpack.c.h.b16 %v3455
  %v3617 = vunpack.c.l.b16 %v3456
  %v3618 = vunpack.c.h.b16 %v3456
  %v3619 = vunpack.c.l.b16 %v3457
  %v3620 = vunpack.c.h.b16 %v3457
  %v3621 = vunpack.c.l.b16 %v3458
  %v3622 = vunpack.c.h.b16 %v3458
  %v3623 = vunpack.c.l.b16 %v3459
  %v3624 = vunpack.c.h.b16 %v3459
  %v3625 = vunpack.c.l.b16 %v3460
  %v3626 = vunpack.c.h.b16 %v3460
  %v3627 = vunpack.c.l.b16 %v3461
  %v3628 = vunpack.c.h.b16 %v3461
  %v3629 = vunpack.c.l.b16 %v3462
  %v3630 = vunpack.c.h.b16 %v3462
  %v3631 = vunpack.c.l.b16 %v3463
  %v3632 = vunpack.c.h.b16 %v3463
  %v3633 = vunpack.c.l.b16 %v3464
  %v3634 = vunpack.c.h.b16 %v3464
  %v3635 = vunpack.c.l.b16 %v3465
  %v3636 = vunpack.c.h.b16 %v3465
  %v3637 = vunpack.c.l.b16 %v3466
  %v3638 = vunpack.c.h.b16 %v3466
  %v3639 = vunpack.c.l.b16 %v3467
  %v3640 = vunpack.c.h.b16 %v3467
  %v3641 = vunpack.c.l.b16 %v3468
  %v3642 = vunpack.c.h.b16 %v3468
  %v3643 = vunpack.c.l.b16 %v3469
  %v3644 = vunpack.c.h.b16 %v3469
  %v3645 = vunpack.c.l.b16 %v3470
  %v3646 = vunpack.c.h.b16 %v3470
  %v3647 = vunpack.c.l.b16 %v3471
  %v3648 = vunpack.c.h.b16 %v3471
  %v3649 = vunpack.c.l.b16 %v3472
  %v3650 = vunpack.c.h.b16 %v3472
  %v3651 = vunpack.c.l.b16 %v3473
  %v3652 = vunpack.c.h.b16 %v3473
  %v3653 = vunpack.c.l.b16 %v3474
  %v3654 = vunpack.c.h.b16 %v3474
  %v3655 = vunpack.c.l.b16 %v3475
  %v3656 = vunpack.c.h.b16 %v3475
  %v3657 = vunpack.c.l.b16 %v3476
  %v3658 = vunpack.c.h.b16 %v3476
  %v3659 = vunpack.c.l.b16 %v3477
  %v3660 = vunpack.c.h.b16 %v3477
  %v3661 = vunpack.c.l.b16 %v3478
  %v3662 = vunpack.c.h.b16 %v3478
  %v3663 = vunpack.c.l.b16 %v3479
  %v3664 = vunpack.c.h.b16 %v3479
  %v3665 = vunpack.c.l.b16 %v3480
  %v3666 = vunpack.c.h.b16 %v3480
  %v3667 = vunpack.c.l.b16 %v3481
  %v3668 = vunpack.c.h.b16 %v3481
  %v3669 = vunpack.c.l.b16 %v3482
  %v3670 = vunpack.c.h.b16 %v3482
  %v3671 = vunpack.c.l.b16 %v3483
  %v3672 = vunpack.c.h.b16 %v3483
  %v3673 = vunpack.c.l.b16 %v3484
  %v3674 = vunpack.c.h.b16 %v3484
  %v3675 = vunpack.c.l.b16 %v3485
  %v3676 = vunpack.c.h.b16 %v3485
  %v3677 = vunpack.c.l.b16 %v3486
  %v3678 = vunpack.c.h.b16 %v3486
  %v3679 = vunpack.c.l.b16 %v3487
  %v3680 = vunpack.c.h.b16 %v3487
  %v3681 = vunpack.c.l.b16 %v3488
  %v3682 = vunpack.c.h.b16 %v3488
  %v3683 = vunpack.c.l.b16 %v3489
  %v3684 = vunpack.c.h.b16 %v3489
  %v3685 = vunpack.c.l.b16 %v3490
  %v3686 = vunpack.c.h.b16 %v3490
  %v3687 = vunpack.c.l.b16 %v3491
  %v3688 = vunpack.c.h.b16 %v3491
  %v3689 = vunpack.c.l.b16 %v3492
  %v3690 = vunpack.c.h.b16 %v3492
  %v3691 = vunpack.c.l.b16 %v3493
  %v3692 = vunpack.c.h.b16 %v3493
  %v3693 = vunpack.c.l.b16 %v3494
  %v3694 = vunpack.c.h.b16 %v3494
  %v3695 = vunpack.c.l.b16 %v3495
  %v3696 = vunpack.c.h.b16 %v3495
  %v3697 = vunpack.c.l.b16 %v3496
  %v3698 = vunpack.c.h.b16 %v3496
  %v3699 = vunpack.c.l.b16 %v3497
  %v3700 = vunpack.c.h.b16 %v3497
  %v3701 = vunpack.c.l.b16 %v3498
  %v3702 = vunpack.c.h.b16 %v3498
  %v3703 = vunpack.c.l.b16 %v3499
  %v3704 = vunpack.c.h.b16 %v3499
  %v3705 = vunpack.c.l.b16 %v3500
  %v3706 = vunpack.c.h.b16 %v3500
  %v3707 = vunpack.c.l.b16 %v3501
  %v3708 = vunpack.c.h.b16 %v3501
  %v3709 = vunpack.c.l.b16 %v3502
  %v3710 = vunpack.c.h.b16 %v3502
  %v3711 = vunpack.c.l.b16 %v3503
  %v3712 = vunpack.c.h.b16 %v3503
  %v3713 = vunpack.c.l.b16 %v3504
  %v3714 = vunpack.c.h.b16 %v3504
  %v3715 = vunpack.c.l.b16 %v3505
  %v3716 = vunpack.c.h.b16 %v3505
  %v3717 = vunpack.c.l.b16 %v3506
  %v3718 = vunpack.c.h.b16 %v3506
  %v3719 = vunpack.c.l.b16 %v3507
  %v3720 = vunpack.c.h.b16 %v3507
  %v3721 = vunpack.c.l.b16 %v3508
  %v3722 = vunpack.c.h.b16 %v3508
  %v3723 = vunpack.c.l.b16 %v3509
  %v3724 = vunpack.c.h.b16 %v3509
  %v3725 = vunpack.c.l.b16 %v3510
  %v3726 = vunpack.c.h.b16 %v3510
  %v3727 = vunpack.c.l.b16 %v3511
  %v3728 = vunpack.c.h.b16 %v3511
  %v3729 = vunpack.c.l.b16 %v3512
  %v3730 = vunpack.c.h.b16 %v3512
  %v3731 = vunpack.c.l.b16 %v3513
  %v3732 = vunpack.c.h.b16 %v3513
  %v3733 = vunpack.c.l.b16 %v3514
  %v3734 = vunpack.c.h.b16 %v3514
  %v3735 = vunpack.c.l.b16 %v3515
  %v3736 = vunpack.c.h.b16 %v3515
  %v3737 = vunpack.c.l.b16 %v3516
  %v3738 = vunpack.c.h.b16 %v3516
  %v3739 = vunpack.c.l.b16 %v3517
  %v3740 = vunpack.c.h.b16 %v3517
  %v3741 = vunpack.c.l.b16 %v3518
  %v3742 = vunpack.c.h.b16 %v3518
  %v3743 = vpack.c.b16 %v3619, %v3615
  %v3744 = vpack.c.b16 %v3620, %v3616
  %v3745 = vpack.c.b16 %v3621, %v3617
  %v3746 = vpack.c.b16 %v3622, %v3618
  %v3747 = vpack.c.b16 %v3627, %v3623
  %v3748 = vpack.c.b16 %v3628, %v3624
  %v3749 = vpack.c.b16 %v3629, %v3625
  %v3750 = vpack.c.b16 %v3630, %v3626
  %v3751 = vpack.c.b16 %v3635, %v3631
  %v3752 = vpack.c.b16 %v3636, %v3632
  %v3753 = vpack.c.b16 %v3637, %v3633
  %v3754 = vpack.c.b16 %v3638, %v3634
  %v3755 = vpack.c.b16 %v3643, %v3639
  %v3756 = vpack.c.b16 %v3644, %v3640
  %v3757 = vpack.c.b16 %v3645, %v3641
  %v3758 = vpack.c.b16 %v3646, %v3642
  %v3759 = vpack.c.b16 %v3651, %v3647
  %v3760 = vpack.c.b16 %v3652, %v3648
  %v3761 = vpack.c.b16 %v3653, %v3649
  %v3762 = vpack.c.b16 %v3654, %v3650
  %v3763 = vpack.c.b16 %v3659, %v3655
  %v3764 = vpack.c.b16 %v3660, %v3656
  %v3765 = vpack.c.b16 %v3661, %v3657
  %v3766 = vpack.c.b16 %v3662, %v3658
  %v3767 = vpack.c.b16 %v3667, %v3663
  %v3768 = vpack.c.b16 %v3668, %v3664
  %v3769 = vpack.c.b16 %v3669, %v3665
  %v3770 = vpack.c.b16 %v3670, %v3666
  %v3771 = vpack.c.b16 %v3675, %v3671
  %v3772 = vpack.c.b16 %v3676, %v3672
  %v3773 = vpack.c.b16 %v3677, %v3673
  %v3774 = vpack.c.b16 %v3678, %v3674
  %v3775 = vpack.c.b16 %v3683, %v3679
  %v3776 = vpack.c.b16 %v3684, %v3680
  %v3777 = vpack.c.b16 %v3685, %v3681
  %v3778 = vpack.c.b16 %v3686, %v3682
  %v3779 = vpack.c.b16 %v3691, %v3687
  %v3780 = vpack.c.b16 %v3692, %v3688
  %v3781 = vpack.c.b16 %v3693, %v3689
  %v3782 = vpack.c.b16 %v3694, %v3690
  %v3783 = vpack.c.b16 %v3699, %v3695
  %v3784 = vpack.c.b16 %v3700, %v3696
  %v3785 = vpack.c.b16 %v3701, %v3697
  %v3786 = vpack.c.b16 %v3702, %v3698
  %v3787 = vpack.c.b16 %v3707, %v3703
  %v3788 = vpack.c.b16 %v3708, %v3704
  %v3789 = vpack.c.b16 %v3709, %v3705
  %v3790 = vpack.c.b16 %v3710, %v3706
  %v3791 = vpack.c.b16 %v3715, %v3711
  %v3792 = vpack.c.b16 %v3716, %v3712
  %v3793 = vpack.c.b16 %v3717, %v3713
  %v3794 = vpack.c.b16 %v3718, %v3714
  %v3795 = vpack.c.b16 %v3723, %v3719
  %v3796 = vpack.c.b16 %v3724, %v3720
  %v3797 = vpack.c.b16 %v3725, %v3721
  %v3798 = vpack.c.b16 %v3726, %v3722
  %v3799 = vpack.c.b16 %v3731, %v3727
  %v3800 = vpack.c.b16 %v3732, %v3728
  %v3801 = vpack.c.b16 %v3733, %v3729
  %v3802 = vpack.c.b16 %v3734, %v3730
  %v3803 = vpack.c.b16 %v3739, %v3735
  %v3804 = vpack.c.b16 %v3740, %v3736
  %v3805 = vpack.c.b16 %v3741, %v3737
  %v3806 = vpack.c.b16 %v3742, %v3738
  %3871 = vmatprep.subr.bf16.mxu0 %v3772
  %3872 = vmatpush1.bf16.msra.mxu0 %v3771
  %3873 = vmatprep.subr.bf16.mxu0 %v3768
  %3874 = vmatpush1.bf16.msra.mxu0 %v3767
  %3875 = vmatprep.subr.bf16.mxu0 %v3764
  %3876 = vmatpush1.bf16.msra.mxu0 %v3763
  %3877 = vmatprep.subr.bf16.mxu0 %v3760
  %3878 = vmatpush1.bf16.msra.mxu0 %v3759
  %3879 = vmatprep.subr.bf16.mxu0 %v3756
  %3880 = vmatpush1.bf16.msra.mxu0 %v3755
  %3881 = vmatprep.subr.bf16.mxu0 %v3752
  %3882 = vmatpush1.bf16.msra.mxu0 %v3751
  %3883 = vmatprep.subr.bf16.mxu0 %v3748
  %3884 = vmatpush1.bf16.msra.mxu0 %v3747
  %3885 = vmatprep.subr.bf16.mxu0 %v3744
  %3886 = vmatpush1.bf16.msra.mxu0 %v3743
  %3887 = vmatprep.subr.bf16.mxu0 %v3804
  %3888 = vmatpush2.bf16.msra.mxu0 %v3803
  %3889 = vmatprep.subr.bf16.mxu0 %v3800
  %3890 = vmatpush2.bf16.msra.mxu0 %v3799
  %3891 = vmatprep.subr.bf16.mxu0 %v3796
  %3892 = vmatpush2.bf16.msra.mxu0 %v3795
  %3893 = vmatprep.subr.bf16.mxu0 %v3792
  %3894 = vmatpush2.bf16.msra.mxu0 %v3791
  %3895 = vmatprep.subr.bf16.mxu0 %v3788
  %3896 = vmatpush2.bf16.msra.mxu0 %v3787
  %3897 = vmatprep.subr.bf16.mxu0 %v3784
  %3898 = vmatpush2.bf16.msra.mxu0 %v3783
  %3899 = vmatprep.subr.bf16.mxu0 %v3780
  %3900 = vmatpush2.bf16.msra.mxu0 %v3779
  %3901 = vmatprep.subr.bf16.mxu0 %v3776
  %3902 = vmatpush2.bf16.msra.mxu0 %v3775
  %3903 = vmatprep.mubr.bf16.mxu0 %v3454
  %3904 = vmatmul.mubr.bf16.gmra.mxu0 %v3453
  %v3905 = vpop.f32.mrf.mxu0
  %v3906 = vadd.f32 %v3547, %v3905
  %v3907 = vpop.f32.mrf.mxu0
  %v3908 = vadd.f32 %v3548, %v3907
  %v3909 = vpop.f32.mrf.mxu0
  %v3910 = vpop.f32.mrf.mxu0
  %3911 = vdwg.mxu0
  %3912 = vmatprep.subr.bf16.mxu0 %v3774
  %3913 = vmatpush1.bf16.msra.mxu0 %v3773
  %3914 = vmatprep.subr.bf16.mxu0 %v3770
  %3915 = vmatpush1.bf16.msra.mxu0 %v3769
  %3916 = vmatprep.subr.bf16.mxu0 %v3766
  %3917 = vmatpush1.bf16.msra.mxu0 %v3765
  %3918 = vmatprep.subr.bf16.mxu0 %v3762
  %3919 = vmatpush1.bf16.msra.mxu0 %v3761
  %3920 = vmatprep.subr.bf16.mxu0 %v3758
  %3921 = vmatpush1.bf16.msra.mxu0 %v3757
  %3922 = vmatprep.subr.bf16.mxu0 %v3754
  %3923 = vmatpush1.bf16.msra.mxu0 %v3753
  %3924 = vmatprep.subr.bf16.mxu0 %v3750
  %3925 = vmatpush1.bf16.msra.mxu0 %v3749
  %3926 = vmatprep.subr.bf16.mxu0 %v3746
  %3927 = vmatpush1.bf16.msra.mxu0 %v3745
  %3928 = vmatprep.subr.bf16.mxu0 %v3806
  %3929 = vmatpush2.bf16.msra.mxu0 %v3805
  %3930 = vmatprep.subr.bf16.mxu0 %v3802
  %3931 = vmatpush2.bf16.msra.mxu0 %v3801
  %3932 = vmatprep.subr.bf16.mxu0 %v3798
  %3933 = vmatpush2.bf16.msra.mxu0 %v3797
  %3934 = vmatprep.subr.bf16.mxu0 %v3794
  %3935 = vmatpush2.bf16.msra.mxu0 %v3793
  %3936 = vmatprep.subr.bf16.mxu0 %v3790
  %3937 = vmatpush2.bf16.msra.mxu0 %v3789
  %3938 = vmatprep.subr.bf16.mxu0 %v3786
  %3939 = vmatpush2.bf16.msra.mxu0 %v3785
  %3940 = vmatprep.subr.bf16.mxu0 %v3782
  %3941 = vmatpush2.bf16.msra.mxu0 %v3781
  %3942 = vmatprep.subr.bf16.mxu0 %v3778
  %3943 = vmatpush2.bf16.msra.mxu0 %v3777
  %3944 = vmatprep.mubr.bf16.mxu0 %v3454
  %3945 = vmatmul.mubr.bf16.gmra.mxu0 %v3453
  %v3946 = vpop.f32.mrf.mxu0
  %v3947 = vadd.f32 %v3549, %v3946
  %v3948 = vpop.f32.mrf.mxu0
  %v3949 = vadd.f32 %v3550, %v3948
  %v3950 = vpop.f32.mrf.mxu0
  %v3951 = vpop.f32.mrf.mxu0
  %3952 = vdwg.mxu0
  %v3953 = vld [vmem:[%s10] sm:$0xf]
  %v3955 = vlaneseq
  %v3956 = vshrl.u32 %v3955, 7
  %v3957 = vsub.s32 0, %v3956
  %v3958 = vrot.slane %v3953, %v3957
  %v3959 = vlaneseq
  %v3960 = vshrl.u32 %v3959, 7
  %v3961 = vsub.s32 1, %v3960
  %v3962 = vrot.slane %v3953, %v3961
  %v3963 = vlaneseq
  %v3964 = vshrl.u32 %v3963, 7
  %v3965 = vsub.s32 2, %v3964
  %v3966 = vrot.slane %v3953, %v3965
  %v3967 = vlaneseq
  %v3968 = vshrl.u32 %v3967, 7
  %v3969 = vsub.s32 3, %v3968
  %v3970 = vrot.slane %v3953, %v3969
  %v3975 = vadd.f32 %v3906, %v3958
  %v3976 = vadd.f32 %v3908, %v3962
  %v3977 = vadd.f32 %v3947, %v3966
  %v3978 = vadd.f32 %v3949, %v3970
  %v3979 = vpack.c.bf16 %v3975, %v3975
  %v3980 = vpack.c.bf16 %v3976, %v3976
  %v3981 = vpack.c.bf16 %v3977, %v3977
  %v3982 = vpack.c.bf16 %v3978, %v3978
  %v3983 = vld [vmem:[%s11] sm:$0xff]
  %v3984 = vld [vmem:[%s11 + $0x8] sm:$0xff]
  %v3985 = vld [vmem:[%s11 + $0x10] sm:$0xff]
  %v3986 = vld [vmem:[%s11 + $0x18] sm:$0xff]
  %v3987 = vld [vmem:[%s11 + $0x20] sm:$0xff]
  %v3988 = vld [vmem:[%s11 + $0x28] sm:$0xff]
  %v3989 = vld [vmem:[%s11 + $0x30] sm:$0xff]
  %v3990 = vld [vmem:[%s11 + $0x38] sm:$0xff]
  %v3991 = vld [vmem:[%s11 + $0x40] sm:$0xff]
  %v3992 = vld [vmem:[%s11 + $0x48] sm:$0xff]
  %v3993 = vld [vmem:[%s11 + $0x50] sm:$0xff]
  %v3994 = vld [vmem:[%s11 + $0x58] sm:$0xff]
  %v3995 = vld [vmem:[%s11 + $0x60] sm:$0xff]
  %v3996 = vld [vmem:[%s11 + $0x68] sm:$0xff]
  %v3997 = vld [vmem:[%s11 + $0x70] sm:$0xff]
  %v3998 = vld [vmem:[%s11 + $0x78] sm:$0xff]
  %v3999 = vld [vmem:[%s11 + $0x80] sm:$0xff]
  %v4000 = vld [vmem:[%s11 + $0x88] sm:$0xff]
  %v4001 = vld [vmem:[%s11 + $0x90] sm:$0xff]
  %v4002 = vld [vmem:[%s11 + $0x98] sm:$0xff]
  %v4003 = vld [vmem:[%s11 + $0xa0] sm:$0xff]
  %v4004 = vld [vmem:[%s11 + $0xa8] sm:$0xff]
  %v4005 = vld [vmem:[%s11 + $0xb0] sm:$0xff]
  %v4006 = vld [vmem:[%s11 + $0xb8] sm:$0xff]
  %v4007 = vld [vmem:[%s11 + $0xc0] sm:$0xff]
  %v4008 = vld [vmem:[%s11 + $0xc8] sm:$0xff]
  %v4009 = vld [vmem:[%s11 + $0xd0] sm:$0xff]
  %v4010 = vld [vmem:[%s11 + $0xd8] sm:$0xff]
  %v4011 = vld [vmem:[%s11 + $0xe0] sm:$0xff]
  %v4012 = vld [vmem:[%s11 + $0xe8] sm:$0xff]
  %v4013 = vld [vmem:[%s11 + $0xf0] sm:$0xff]
  %v4014 = vld [vmem:[%s11 + $0xf8] sm:$0xff]
  %v4015 = vld [vmem:[%s11 + $0x100] sm:$0xff]
  %v4016 = vld [vmem:[%s11 + $0x108] sm:$0xff]
  %v4017 = vld [vmem:[%s11 + $0x110] sm:$0xff]
  %v4018 = vld [vmem:[%s11 + $0x118] sm:$0xff]
  %v4019 = vld [vmem:[%s11 + $0x120] sm:$0xff]
  %v4020 = vld [vmem:[%s11 + $0x128] sm:$0xff]
  %v4021 = vld [vmem:[%s11 + $0x130] sm:$0xff]
  %v4022 = vld [vmem:[%s11 + $0x138] sm:$0xff]
  %v4023 = vld [vmem:[%s11 + $0x140] sm:$0xff]
  %v4024 = vld [vmem:[%s11 + $0x148] sm:$0xff]
  %v4025 = vld [vmem:[%s11 + $0x150] sm:$0xff]
  %v4026 = vld [vmem:[%s11 + $0x158] sm:$0xff]
  %v4027 = vld [vmem:[%s11 + $0x160] sm:$0xff]
  %v4028 = vld [vmem:[%s11 + $0x168] sm:$0xff]
  %v4029 = vld [vmem:[%s11 + $0x170] sm:$0xff]
  %v4030 = vld [vmem:[%s11 + $0x178] sm:$0xff]
  %v4031 = vld [vmem:[%s11 + $0x180] sm:$0xff]
  %v4032 = vld [vmem:[%s11 + $0x188] sm:$0xff]
  %v4033 = vld [vmem:[%s11 + $0x190] sm:$0xff]
  %v4034 = vld [vmem:[%s11 + $0x198] sm:$0xff]
  %v4035 = vld [vmem:[%s11 + $0x1a0] sm:$0xff]
  %v4036 = vld [vmem:[%s11 + $0x1a8] sm:$0xff]
  %v4037 = vld [vmem:[%s11 + $0x1b0] sm:$0xff]
  %v4038 = vld [vmem:[%s11 + $0x1b8] sm:$0xff]
  %v4039 = vld [vmem:[%s11 + $0x1c0] sm:$0xff]
  %v4040 = vld [vmem:[%s11 + $0x1c8] sm:$0xff]
  %v4041 = vld [vmem:[%s11 + $0x1d0] sm:$0xff]
  %v4042 = vld [vmem:[%s11 + $0x1d8] sm:$0xff]
  %v4043 = vld [vmem:[%s11 + $0x1e0] sm:$0xff]
  %v4044 = vld [vmem:[%s11 + $0x1e8] sm:$0xff]
  %v4045 = vld [vmem:[%s11 + $0x1f0] sm:$0xff]
  %v4046 = vld [vmem:[%s11 + $0x1f8] sm:$0xff]
  %v4047 = vld [vmem:[%s11 + $0x200] sm:$0xff]
  %v4048 = vld [vmem:[%s11 + $0x208] sm:$0xff]
  %v4049 = vld [vmem:[%s11 + $0x210] sm:$0xff]
  %v4050 = vld [vmem:[%s11 + $0x218] sm:$0xff]
  %v4051 = vld [vmem:[%s11 + $0x220] sm:$0xff]
  %v4052 = vld [vmem:[%s11 + $0x228] sm:$0xff]
  %v4053 = vld [vmem:[%s11 + $0x230] sm:$0xff]
  %v4054 = vld [vmem:[%s11 + $0x238] sm:$0xff]
  %v4055 = vld [vmem:[%s11 + $0x240] sm:$0xff]
  %v4056 = vld [vmem:[%s11 + $0x248] sm:$0xff]
  %v4057 = vld [vmem:[%s11 + $0x250] sm:$0xff]
  %v4058 = vld [vmem:[%s11 + $0x258] sm:$0xff]
  %v4059 = vld [vmem:[%s11 + $0x260] sm:$0xff]
  %v4060 = vld [vmem:[%s11 + $0x268] sm:$0xff]
  %v4061 = vld [vmem:[%s11 + $0x270] sm:$0xff]
  %v4062 = vld [vmem:[%s11 + $0x278] sm:$0xff]
  %v4063 = vld [vmem:[%s11 + $0x280] sm:$0xff]
  %v4064 = vld [vmem:[%s11 + $0x288] sm:$0xff]
  %v4065 = vld [vmem:[%s11 + $0x290] sm:$0xff]
  %v4066 = vld [vmem:[%s11 + $0x298] sm:$0xff]
  %v4067 = vld [vmem:[%s11 + $0x2a0] sm:$0xff]
  %v4068 = vld [vmem:[%s11 + $0x2a8] sm:$0xff]
  %v4069 = vld [vmem:[%s11 + $0x2b0] sm:$0xff]
  %v4070 = vld [vmem:[%s11 + $0x2b8] sm:$0xff]
  %v4071 = vld [vmem:[%s11 + $0x2c0] sm:$0xff]
  %v4072 = vld [vmem:[%s11 + $0x2c8] sm:$0xff]
  %v4073 = vld [vmem:[%s11 + $0x2d0] sm:$0xff]
  %v4074 = vld [vmem:[%s11 + $0x2d8] sm:$0xff]
  %v4075 = vld [vmem:[%s11 + $0x2e0] sm:$0xff]
  %v4076 = vld [vmem:[%s11 + $0x2e8] sm:$0xff]
  %v4077 = vld [vmem:[%s11 + $0x2f0] sm:$0xff]
  %v4078 = vld [vmem:[%s11 + $0x2f8] sm:$0xff]
  %v4079 = vld [vmem:[%s11 + $0x300] sm:$0xff]
  %v4080 = vld [vmem:[%s11 + $0x308] sm:$0xff]
  %v4081 = vld [vmem:[%s11 + $0x310] sm:$0xff]
  %v4082 = vld [vmem:[%s11 + $0x318] sm:$0xff]
  %v4083 = vld [vmem:[%s11 + $0x320] sm:$0xff]
  %v4084 = vld [vmem:[%s11 + $0x328] sm:$0xff]
  %v4085 = vld [vmem:[%s11 + $0x330] sm:$0xff]
  %v4086 = vld [vmem:[%s11 + $0x338] sm:$0xff]
  %v4087 = vld [vmem:[%s11 + $0x340] sm:$0xff]
  %v4088 = vld [vmem:[%s11 + $0x348] sm:$0xff]
  %v4089 = vld [vmem:[%s11 + $0x350] sm:$0xff]
  %v4090 = vld [vmem:[%s11 + $0x358] sm:$0xff]
  %v4091 = vld [vmem:[%s11 + $0x360] sm:$0xff]
  %v4092 = vld [vmem:[%s11 + $0x368] sm:$0xff]
  %v4093 = vld [vmem:[%s11 + $0x370] sm:$0xff]
  %v4094 = vld [vmem:[%s11 + $0x378] sm:$0xff]
  %v4095 = vld [vmem:[%s11 + $0x380] sm:$0xff]
  %v4096 = vld [vmem:[%s11 + $0x388] sm:$0xff]
  %v4097 = vld [vmem:[%s11 + $0x390] sm:$0xff]
  %v4098 = vld [vmem:[%s11 + $0x398] sm:$0xff]
  %v4099 = vld [vmem:[%s11 + $0x3a0] sm:$0xff]
  %v4100 = vld [vmem:[%s11 + $0x3a8] sm:$0xff]
  %v4101 = vld [vmem:[%s11 + $0x3b0] sm:$0xff]
  %v4102 = vld [vmem:[%s11 + $0x3b8] sm:$0xff]
  %v4103 = vld [vmem:[%s11 + $0x3c0] sm:$0xff]
  %v4104 = vld [vmem:[%s11 + $0x3c8] sm:$0xff]
  %v4105 = vld [vmem:[%s11 + $0x3d0] sm:$0xff]
  %v4106 = vld [vmem:[%s11 + $0x3d8] sm:$0xff]
  %v4107 = vld [vmem:[%s11 + $0x3e0] sm:$0xff]
  %v4108 = vld [vmem:[%s11 + $0x3e8] sm:$0xff]
  %v4109 = vld [vmem:[%s11 + $0x3f0] sm:$0xff]
  %v4110 = vld [vmem:[%s11 + $0x3f8] sm:$0xff]
  %v4111 = vld [vmem:[%s11 + $0x400] sm:$0xff]
  %v4112 = vld [vmem:[%s11 + $0x408] sm:$0xff]
  %v4113 = vld [vmem:[%s11 + $0x410] sm:$0xff]
  %v4114 = vld [vmem:[%s11 + $0x418] sm:$0xff]
  %v4115 = vld [vmem:[%s11 + $0x420] sm:$0xff]
  %v4116 = vld [vmem:[%s11 + $0x428] sm:$0xff]
  %v4117 = vld [vmem:[%s11 + $0x430] sm:$0xff]
  %v4118 = vld [vmem:[%s11 + $0x438] sm:$0xff]
  %v4119 = vld [vmem:[%s11 + $0x440] sm:$0xff]
  %v4120 = vld [vmem:[%s11 + $0x448] sm:$0xff]
  %v4121 = vld [vmem:[%s11 + $0x450] sm:$0xff]
  %v4122 = vld [vmem:[%s11 + $0x458] sm:$0xff]
  %v4123 = vld [vmem:[%s11 + $0x460] sm:$0xff]
  %v4124 = vld [vmem:[%s11 + $0x468] sm:$0xff]
  %v4125 = vld [vmem:[%s11 + $0x470] sm:$0xff]
  %v4126 = vld [vmem:[%s11 + $0x478] sm:$0xff]
  %v4127 = vld [vmem:[%s11 + $0x480] sm:$0xff]
  %v4128 = vld [vmem:[%s11 + $0x488] sm:$0xff]
  %v4129 = vld [vmem:[%s11 + $0x490] sm:$0xff]
  %v4130 = vld [vmem:[%s11 + $0x498] sm:$0xff]
  %v4131 = vld [vmem:[%s11 + $0x4a0] sm:$0xff]
  %v4132 = vld [vmem:[%s11 + $0x4a8] sm:$0xff]
  %v4133 = vld [vmem:[%s11 + $0x4b0] sm:$0xff]
  %v4134 = vld [vmem:[%s11 + $0x4b8] sm:$0xff]
  %v4135 = vld [vmem:[%s11 + $0x4c0] sm:$0xff]
  %v4136 = vld [vmem:[%s11 + $0x4c8] sm:$0xff]
  %v4137 = vld [vmem:[%s11 + $0x4d0] sm:$0xff]
  %v4138 = vld [vmem:[%s11 + $0x4d8] sm:$0xff]
  %v4139 = vld [vmem:[%s11 + $0x4e0] sm:$0xff]
  %v4140 = vld [vmem:[%s11 + $0x4e8] sm:$0xff]
  %v4141 = vld [vmem:[%s11 + $0x4f0] sm:$0xff]
  %v4142 = vld [vmem:[%s11 + $0x4f8] sm:$0xff]
  %v4143 = vld [vmem:[%s11 + $0x500] sm:$0xff]
  %v4144 = vld [vmem:[%s11 + $0x508] sm:$0xff]
  %v4145 = vld [vmem:[%s11 + $0x510] sm:$0xff]
  %v4146 = vld [vmem:[%s11 + $0x518] sm:$0xff]
  %v4147 = vld [vmem:[%s11 + $0x520] sm:$0xff]
  %v4148 = vld [vmem:[%s11 + $0x528] sm:$0xff]
  %v4149 = vld [vmem:[%s11 + $0x530] sm:$0xff]
  %v4150 = vld [vmem:[%s11 + $0x538] sm:$0xff]
  %v4151 = vld [vmem:[%s11 + $0x540] sm:$0xff]
  %v4152 = vld [vmem:[%s11 + $0x548] sm:$0xff]
  %v4153 = vld [vmem:[%s11 + $0x550] sm:$0xff]
  %v4154 = vld [vmem:[%s11 + $0x558] sm:$0xff]
  %v4155 = vld [vmem:[%s11 + $0x560] sm:$0xff]
  %v4156 = vld [vmem:[%s11 + $0x568] sm:$0xff]
  %v4157 = vld [vmem:[%s11 + $0x570] sm:$0xff]
  %v4158 = vld [vmem:[%s11 + $0x578] sm:$0xff]
  %v4159 = vld [vmem:[%s11 + $0x580] sm:$0xff]
  %v4160 = vld [vmem:[%s11 + $0x588] sm:$0xff]
  %v4161 = vld [vmem:[%s11 + $0x590] sm:$0xff]
  %v4162 = vld [vmem:[%s11 + $0x598] sm:$0xff]
  %v4163 = vld [vmem:[%s11 + $0x5a0] sm:$0xff]
  %v4164 = vld [vmem:[%s11 + $0x5a8] sm:$0xff]
  %v4165 = vld [vmem:[%s11 + $0x5b0] sm:$0xff]
  %v4166 = vld [vmem:[%s11 + $0x5b8] sm:$0xff]
  %v4167 = vld [vmem:[%s11 + $0x5c0] sm:$0xff]
  %v4168 = vld [vmem:[%s11 + $0x5c8] sm:$0xff]
  %v4169 = vld [vmem:[%s11 + $0x5d0] sm:$0xff]
  %v4170 = vld [vmem:[%s11 + $0x5d8] sm:$0xff]
  %v4171 = vld [vmem:[%s11 + $0x5e0] sm:$0xff]
  %v4172 = vld [vmem:[%s11 + $0x5e8] sm:$0xff]
  %v4173 = vld [vmem:[%s11 + $0x5f0] sm:$0xff]
  %v4174 = vld [vmem:[%s11 + $0x5f8] sm:$0xff]
  %v4175 = vld [vmem:[%s11 + $0x600] sm:$0xff]
  %v4176 = vld [vmem:[%s11 + $0x608] sm:$0xff]
  %v4177 = vld [vmem:[%s11 + $0x610] sm:$0xff]
  %v4178 = vld [vmem:[%s11 + $0x618] sm:$0xff]
  %v4179 = vld [vmem:[%s11 + $0x620] sm:$0xff]
  %v4180 = vld [vmem:[%s11 + $0x628] sm:$0xff]
  %v4181 = vld [vmem:[%s11 + $0x630] sm:$0xff]
  %v4182 = vld [vmem:[%s11 + $0x638] sm:$0xff]
  %v4183 = vld [vmem:[%s11 + $0x640] sm:$0xff]
  %v4184 = vld [vmem:[%s11 + $0x648] sm:$0xff]
  %v4185 = vld [vmem:[%s11 + $0x650] sm:$0xff]
  %v4186 = vld [vmem:[%s11 + $0x658] sm:$0xff]
  %v4187 = vld [vmem:[%s11 + $0x660] sm:$0xff]
  %v4188 = vld [vmem:[%s11 + $0x668] sm:$0xff]
  %v4189 = vld [vmem:[%s11 + $0x670] sm:$0xff]
  %v4190 = vld [vmem:[%s11 + $0x678] sm:$0xff]
  %v4191 = vld [vmem:[%s11 + $0x680] sm:$0xff]
  %v4192 = vld [vmem:[%s11 + $0x688] sm:$0xff]
  %v4193 = vld [vmem:[%s11 + $0x690] sm:$0xff]
  %v4194 = vld [vmem:[%s11 + $0x698] sm:$0xff]
  %v4195 = vld [vmem:[%s11 + $0x6a0] sm:$0xff]
  %v4196 = vld [vmem:[%s11 + $0x6a8] sm:$0xff]
  %v4197 = vld [vmem:[%s11 + $0x6b0] sm:$0xff]
  %v4198 = vld [vmem:[%s11 + $0x6b8] sm:$0xff]
  %v4199 = vld [vmem:[%s11 + $0x6c0] sm:$0xff]
  %v4200 = vld [vmem:[%s11 + $0x6c8] sm:$0xff]
  %v4201 = vld [vmem:[%s11 + $0x6d0] sm:$0xff]
  %v4202 = vld [vmem:[%s11 + $0x6d8] sm:$0xff]
  %v4203 = vld [vmem:[%s11 + $0x6e0] sm:$0xff]
  %v4204 = vld [vmem:[%s11 + $0x6e8] sm:$0xff]
  %v4205 = vld [vmem:[%s11 + $0x6f0] sm:$0xff]
  %v4206 = vld [vmem:[%s11 + $0x6f8] sm:$0xff]
  %v4207 = vld [vmem:[%s11 + $0x700] sm:$0xff]
  %v4208 = vld [vmem:[%s11 + $0x708] sm:$0xff]
  %v4209 = vld [vmem:[%s11 + $0x710] sm:$0xff]
  %v4210 = vld [vmem:[%s11 + $0x718] sm:$0xff]
  %v4211 = vld [vmem:[%s11 + $0x720] sm:$0xff]
  %v4212 = vld [vmem:[%s11 + $0x728] sm:$0xff]
  %v4213 = vld [vmem:[%s11 + $0x730] sm:$0xff]
  %v4214 = vld [vmem:[%s11 + $0x738] sm:$0xff]
  %v4215 = vld [vmem:[%s11 + $0x740] sm:$0xff]
  %v4216 = vld [vmem:[%s11 + $0x748] sm:$0xff]
  %v4217 = vld [vmem:[%s11 + $0x750] sm:$0xff]
  %v4218 = vld [vmem:[%s11 + $0x758] sm:$0xff]
  %v4219 = vld [vmem:[%s11 + $0x760] sm:$0xff]
  %v4220 = vld [vmem:[%s11 + $0x768] sm:$0xff]
  %v4221 = vld [vmem:[%s11 + $0x770] sm:$0xff]
  %v4222 = vld [vmem:[%s11 + $0x778] sm:$0xff]
  %v4223 = vld [vmem:[%s11 + $0x780] sm:$0xff]
  %v4224 = vld [vmem:[%s11 + $0x788] sm:$0xff]
  %v4225 = vld [vmem:[%s11 + $0x790] sm:$0xff]
  %v4226 = vld [vmem:[%s11 + $0x798] sm:$0xff]
  %v4227 = vld [vmem:[%s11 + $0x7a0] sm:$0xff]
  %v4228 = vld [vmem:[%s11 + $0x7a8] sm:$0xff]
  %v4229 = vld [vmem:[%s11 + $0x7b0] sm:$0xff]
  %v4230 = vld [vmem:[%s11 + $0x7b8] sm:$0xff]
  %v4231 = vld [vmem:[%s11 + $0x7c0] sm:$0xff]
  %v4232 = vld [vmem:[%s11 + $0x7c8] sm:$0xff]
  %v4233 = vld [vmem:[%s11 + $0x7d0] sm:$0xff]
  %v4234 = vld [vmem:[%s11 + $0x7d8] sm:$0xff]
  %v4235 = vld [vmem:[%s11 + $0x7e0] sm:$0xff]
  %v4236 = vld [vmem:[%s11 + $0x7e8] sm:$0xff]
  %v4237 = vld [vmem:[%s11 + $0x7f0] sm:$0xff]
  %v4238 = vld [vmem:[%s11 + $0x7f8] sm:$0xff]
  %v4239 = vld [vmem:[%s12] sm:$0xff]
  %v4241 = vlaneseq
  %v4242 = vshrl.u32 %v4241, 7
  %v4243 = vsub.s32 0, %v4242
  %v4244 = vrot.slane %v4239, %v4243
  %v4245 = vlaneseq
  %v4246 = vshrl.u32 %v4245, 7
  %v4247 = vsub.s32 1, %v4246
  %v4248 = vrot.slane %v4239, %v4247
  %v4249 = vlaneseq
  %v4250 = vshrl.u32 %v4249, 7
  %v4251 = vsub.s32 2, %v4250
  %v4252 = vrot.slane %v4239, %v4251
  %v4253 = vlaneseq
  %v4254 = vshrl.u32 %v4253, 7
  %v4255 = vsub.s32 3, %v4254
  %v4256 = vrot.slane %v4239, %v4255
  %v4257 = vlaneseq
  %v4258 = vshrl.u32 %v4257, 7
  %v4259 = vsub.s32 4, %v4258
  %v4260 = vrot.slane %v4239, %v4259
  %v4261 = vlaneseq
  %v4262 = vshrl.u32 %v4261, 7
  %v4263 = vsub.s32 5, %v4262
  %v4264 = vrot.slane %v4239, %v4263
  %v4265 = vlaneseq
  %v4266 = vshrl.u32 %v4265, 7
  %v4267 = vsub.s32 6, %v4266
  %v4268 = vrot.slane %v4239, %v4267
  %v4269 = vlaneseq
  %v4270 = vshrl.u32 %v4269, 7
  %v4271 = vsub.s32 7, %v4270
  %v4272 = vrot.slane %v4239, %v4271
  %v4537 = vunpack.c.l.b16 %v3983
  %v4538 = vunpack.c.h.b16 %v3983
  %v4539 = vunpack.c.l.b16 %v3984
  %v4540 = vunpack.c.h.b16 %v3984
  %v4541 = vunpack.c.l.b16 %v3985
  %v4542 = vunpack.c.h.b16 %v3985
  %v4543 = vunpack.c.l.b16 %v3986
  %v4544 = vunpack.c.h.b16 %v3986
  %v4545 = vunpack.c.l.b16 %v3987
  %v4546 = vunpack.c.h.b16 %v3987
  %v4547 = vunpack.c.l.b16 %v3988
  %v4548 = vunpack.c.h.b16 %v3988
  %v4549 = vunpack.c.l.b16 %v3989
  %v4550 = vunpack.c.h.b16 %v3989
  %v4551 = vunpack.c.l.b16 %v3990
  %v4552 = vunpack.c.h.b16 %v3990
  %v4553 = vunpack.c.l.b16 %v3991
  %v4554 = vunpack.c.h.b16 %v3991
  %v4555 = vunpack.c.l.b16 %v3992
  %v4556 = vunpack.c.h.b16 %v3992
  %v4557 = vunpack.c.l.b16 %v3993
  %v4558 = vunpack.c.h.b16 %v3993
  %v4559 = vunpack.c.l.b16 %v3994
  %v4560 = vunpack.c.h.b16 %v3994
  %v4561 = vunpack.c.l.b16 %v3995
  %v4562 = vunpack.c.h.b16 %v3995
  %v4563 = vunpack.c.l.b16 %v3996
  %v4564 = vunpack.c.h.b16 %v3996
  %v4565 = vunpack.c.l.b16 %v3997
  %v4566 = vunpack.c.h.b16 %v3997
  %v4567 = vunpack.c.l.b16 %v3998
  %v4568 = vunpack.c.h.b16 %v3998
  %v4569 = vunpack.c.l.b16 %v3999
  %v4570 = vunpack.c.h.b16 %v3999
  %v4571 = vunpack.c.l.b16 %v4000
  %v4572 = vunpack.c.h.b16 %v4000
  %v4573 = vunpack.c.l.b16 %v4001
  %v4574 = vunpack.c.h.b16 %v4001
  %v4575 = vunpack.c.l.b16 %v4002
  %v4576 = vunpack.c.h.b16 %v4002
  %v4577 = vunpack.c.l.b16 %v4003
  %v4578 = vunpack.c.h.b16 %v4003
  %v4579 = vunpack.c.l.b16 %v4004
  %v4580 = vunpack.c.h.b16 %v4004
  %v4581 = vunpack.c.l.b16 %v4005
  %v4582 = vunpack.c.h.b16 %v4005
  %v4583 = vunpack.c.l.b16 %v4006
  %v4584 = vunpack.c.h.b16 %v4006
  %v4585 = vunpack.c.l.b16 %v4007
  %v4586 = vunpack.c.h.b16 %v4007
  %v4587 = vunpack.c.l.b16 %v4008
  %v4588 = vunpack.c.h.b16 %v4008
  %v4589 = vunpack.c.l.b16 %v4009
  %v4590 = vunpack.c.h.b16 %v4009
  %v4591 = vunpack.c.l.b16 %v4010
  %v4592 = vunpack.c.h.b16 %v4010
  %v4593 = vunpack.c.l.b16 %v4011
  %v4594 = vunpack.c.h.b16 %v4011
  %v4595 = vunpack.c.l.b16 %v4012
  %v4596 = vunpack.c.h.b16 %v4012
  %v4597 = vunpack.c.l.b16 %v4013
  %v4598 = vunpack.c.h.b16 %v4013
  %v4599 = vunpack.c.l.b16 %v4014
  %v4600 = vunpack.c.h.b16 %v4014
  %v4601 = vunpack.c.l.b16 %v4015
  %v4602 = vunpack.c.h.b16 %v4015
  %v4603 = vunpack.c.l.b16 %v4016
  %v4604 = vunpack.c.h.b16 %v4016
  %v4605 = vunpack.c.l.b16 %v4017
  %v4606 = vunpack.c.h.b16 %v4017
  %v4607 = vunpack.c.l.b16 %v4018
  %v4608 = vunpack.c.h.b16 %v4018
  %v4609 = vunpack.c.l.b16 %v4019
  %v4610 = vunpack.c.h.b16 %v4019
  %v4611 = vunpack.c.l.b16 %v4020
  %v4612 = vunpack.c.h.b16 %v4020
  %v4613 = vunpack.c.l.b16 %v4021
  %v4614 = vunpack.c.h.b16 %v4021
  %v4615 = vunpack.c.l.b16 %v4022
  %v4616 = vunpack.c.h.b16 %v4022
  %v4617 = vunpack.c.l.b16 %v4023
  %v4618 = vunpack.c.h.b16 %v4023
  %v4619 = vunpack.c.l.b16 %v4024
  %v4620 = vunpack.c.h.b16 %v4024
  %v4621 = vunpack.c.l.b16 %v4025
  %v4622 = vunpack.c.h.b16 %v4025
  %v4623 = vunpack.c.l.b16 %v4026
  %v4624 = vunpack.c.h.b16 %v4026
  %v4625 = vunpack.c.l.b16 %v4027
  %v4626 = vunpack.c.h.b16 %v4027
  %v4627 = vunpack.c.l.b16 %v4028
  %v4628 = vunpack.c.h.b16 %v4028
  %v4629 = vunpack.c.l.b16 %v4029
  %v4630 = vunpack.c.h.b16 %v4029
  %v4631 = vunpack.c.l.b16 %v4030
  %v4632 = vunpack.c.h.b16 %v4030
  %v4633 = vunpack.c.l.b16 %v4031
  %v4634 = vunpack.c.h.b16 %v4031
  %v4635 = vunpack.c.l.b16 %v4032
  %v4636 = vunpack.c.h.b16 %v4032
  %v4637 = vunpack.c.l.b16 %v4033
  %v4638 = vunpack.c.h.b16 %v4033
  %v4639 = vunpack.c.l.b16 %v4034
  %v4640 = vunpack.c.h.b16 %v4034
  %v4641 = vunpack.c.l.b16 %v4035
  %v4642 = vunpack.c.h.b16 %v4035
  %v4643 = vunpack.c.l.b16 %v4036
  %v4644 = vunpack.c.h.b16 %v4036
  %v4645 = vunpack.c.l.b16 %v4037
  %v4646 = vunpack.c.h.b16 %v4037
  %v4647 = vunpack.c.l.b16 %v4038
  %v4648 = vunpack.c.h.b16 %v4038
  %v4649 = vunpack.c.l.b16 %v4039
  %v4650 = vunpack.c.h.b16 %v4039
  %v4651 = vunpack.c.l.b16 %v4040
  %v4652 = vunpack.c.h.b16 %v4040
  %v4653 = vunpack.c.l.b16 %v4041
  %v4654 = vunpack.c.h.b16 %v4041
  %v4655 = vunpack.c.l.b16 %v4042
  %v4656 = vunpack.c.h.b16 %v4042
  %v4657 = vunpack.c.l.b16 %v4043
  %v4658 = vunpack.c.h.b16 %v4043
  %v4659 = vunpack.c.l.b16 %v4044
  %v4660 = vunpack.c.h.b16 %v4044
  %v4661 = vunpack.c.l.b16 %v4045
  %v4662 = vunpack.c.h.b16 %v4045
  %v4663 = vunpack.c.l.b16 %v4046
  %v4664 = vunpack.c.h.b16 %v4046
  %v4665 = vunpack.c.l.b16 %v4047
  %v4666 = vunpack.c.h.b16 %v4047
  %v4667 = vunpack.c.l.b16 %v4048
  %v4668 = vunpack.c.h.b16 %v4048
  %v4669 = vunpack.c.l.b16 %v4049
  %v4670 = vunpack.c.h.b16 %v4049
  %v4671 = vunpack.c.l.b16 %v4050
  %v4672 = vunpack.c.h.b16 %v4050
  %v4673 = vunpack.c.l.b16 %v4051
  %v4674 = vunpack.c.h.b16 %v4051
  %v4675 = vunpack.c.l.b16 %v4052
  %v4676 = vunpack.c.h.b16 %v4052
  %v4677 = vunpack.c.l.b16 %v4053
  %v4678 = vunpack.c.h.b16 %v4053
  %v4679 = vunpack.c.l.b16 %v4054
  %v4680 = vunpack.c.h.b16 %v4054
  %v4681 = vunpack.c.l.b16 %v4055
  %v4682 = vunpack.c.h.b16 %v4055
  %v4683 = vunpack.c.l.b16 %v4056
  %v4684 = vunpack.c.h.b16 %v4056
  %v4685 = vunpack.c.l.b16 %v4057
  %v4686 = vunpack.c.h.b16 %v4057
  %v4687 = vunpack.c.l.b16 %v4058
  %v4688 = vunpack.c.h.b16 %v4058
  %v4689 = vunpack.c.l.b16 %v4059
  %v4690 = vunpack.c.h.b16 %v4059
  %v4691 = vunpack.c.l.b16 %v4060
  %v4692 = vunpack.c.h.b16 %v4060
  %v4693 = vunpack.c.l.b16 %v4061
  %v4694 = vunpack.c.h.b16 %v4061
  %v4695 = vunpack.c.l.b16 %v4062
  %v4696 = vunpack.c.h.b16 %v4062
  %v4697 = vunpack.c.l.b16 %v4063
  %v4698 = vunpack.c.h.b16 %v4063
  %v4699 = vunpack.c.l.b16 %v4064
  %v4700 = vunpack.c.h.b16 %v4064
  %v4701 = vunpack.c.l.b16 %v4065
  %v4702 = vunpack.c.h.b16 %v4065
  %v4703 = vunpack.c.l.b16 %v4066
  %v4704 = vunpack.c.h.b16 %v4066
  %v4705 = vunpack.c.l.b16 %v4067
  %v4706 = vunpack.c.h.b16 %v4067
  %v4707 = vunpack.c.l.b16 %v4068
  %v4708 = vunpack.c.h.b16 %v4068
  %v4709 = vunpack.c.l.b16 %v4069
  %v4710 = vunpack.c.h.b16 %v4069
  %v4711 = vunpack.c.l.b16 %v4070
  %v4712 = vunpack.c.h.b16 %v4070
  %v4713 = vunpack.c.l.b16 %v4071
  %v4714 = vunpack.c.h.b16 %v4071
  %v4715 = vunpack.c.l.b16 %v4072
  %v4716 = vunpack.c.h.b16 %v4072
  %v4717 = vunpack.c.l.b16 %v4073
  %v4718 = vunpack.c.h.b16 %v4073
  %v4719 = vunpack.c.l.b16 %v4074
  %v4720 = vunpack.c.h.b16 %v4074
  %v4721 = vunpack.c.l.b16 %v4075
  %v4722 = vunpack.c.h.b16 %v4075
  %v4723 = vunpack.c.l.b16 %v4076
  %v4724 = vunpack.c.h.b16 %v4076
  %v4725 = vunpack.c.l.b16 %v4077
  %v4726 = vunpack.c.h.b16 %v4077
  %v4727 = vunpack.c.l.b16 %v4078
  %v4728 = vunpack.c.h.b16 %v4078
  %v4729 = vunpack.c.l.b16 %v4079
  %v4730 = vunpack.c.h.b16 %v4079
  %v4731 = vunpack.c.l.b16 %v4080
  %v4732 = vunpack.c.h.b16 %v4080
  %v4733 = vunpack.c.l.b16 %v4081
  %v4734 = vunpack.c.h.b16 %v4081
  %v4735 = vunpack.c.l.b16 %v4082
  %v4736 = vunpack.c.h.b16 %v4082
  %v4737 = vunpack.c.l.b16 %v4083
  %v4738 = vunpack.c.h.b16 %v4083
  %v4739 = vunpack.c.l.b16 %v4084
  %v4740 = vunpack.c.h.b16 %v4084
  %v4741 = vunpack.c.l.b16 %v4085
  %v4742 = vunpack.c.h.b16 %v4085
  %v4743 = vunpack.c.l.b16 %v4086
  %v4744 = vunpack.c.h.b16 %v4086
  %v4745 = vunpack.c.l.b16 %v4087
  %v4746 = vunpack.c.h.b16 %v4087
  %v4747 = vunpack.c.l.b16 %v4088
  %v4748 = vunpack.c.h.b16 %v4088
  %v4749 = vunpack.c.l.b16 %v4089
  %v4750 = vunpack.c.h.b16 %v4089
  %v4751 = vunpack.c.l.b16 %v4090
  %v4752 = vunpack.c.h.b16 %v4090
  %v4753 = vunpack.c.l.b16 %v4091
  %v4754 = vunpack.c.h.b16 %v4091
  %v4755 = vunpack.c.l.b16 %v4092
  %v4756 = vunpack.c.h.b16 %v4092
  %v4757 = vunpack.c.l.b16 %v4093
  %v4758 = vunpack.c.h.b16 %v4093
  %v4759 = vunpack.c.l.b16 %v4094
  %v4760 = vunpack.c.h.b16 %v4094
  %v4761 = vunpack.c.l.b16 %v4095
  %v4762 = vunpack.c.h.b16 %v4095
  %v4763 = vunpack.c.l.b16 %v4096
  %v4764 = vunpack.c.h.b16 %v4096
  %v4765 = vunpack.c.l.b16 %v4097
  %v4766 = vunpack.c.h.b16 %v4097
  %v4767 = vunpack.c.l.b16 %v4098
  %v4768 = vunpack.c.h.b16 %v4098
  %v4769 = vunpack.c.l.b16 %v4099
  %v4770 = vunpack.c.h.b16 %v4099
  %v4771 = vunpack.c.l.b16 %v4100
  %v4772 = vunpack.c.h.b16 %v4100
  %v4773 = vunpack.c.l.b16 %v4101
  %v4774 = vunpack.c.h.b16 %v4101
  %v4775 = vunpack.c.l.b16 %v4102
  %v4776 = vunpack.c.h.b16 %v4102
  %v4777 = vunpack.c.l.b16 %v4103
  %v4778 = vunpack.c.h.b16 %v4103
  %v4779 = vunpack.c.l.b16 %v4104
  %v4780 = vunpack.c.h.b16 %v4104
  %v4781 = vunpack.c.l.b16 %v4105
  %v4782 = vunpack.c.h.b16 %v4105
  %v4783 = vunpack.c.l.b16 %v4106
  %v4784 = vunpack.c.h.b16 %v4106
  %v4785 = vunpack.c.l.b16 %v4107
  %v4786 = vunpack.c.h.b16 %v4107
  %v4787 = vunpack.c.l.b16 %v4108
  %v4788 = vunpack.c.h.b16 %v4108
  %v4789 = vunpack.c.l.b16 %v4109
  %v4790 = vunpack.c.h.b16 %v4109
  %v4791 = vunpack.c.l.b16 %v4110
  %v4792 = vunpack.c.h.b16 %v4110
  %v4793 = vunpack.c.l.b16 %v4111
  %v4794 = vunpack.c.h.b16 %v4111
  %v4795 = vunpack.c.l.b16 %v4112
  %v4796 = vunpack.c.h.b16 %v4112
  %v4797 = vunpack.c.l.b16 %v4113
  %v4798 = vunpack.c.h.b16 %v4113
  %v4799 = vunpack.c.l.b16 %v4114
  %v4800 = vunpack.c.h.b16 %v4114
  %v4801 = vunpack.c.l.b16 %v4115
  %v4802 = vunpack.c.h.b16 %v4115
  %v4803 = vunpack.c.l.b16 %v4116
  %v4804 = vunpack.c.h.b16 %v4116
  %v4805 = vunpack.c.l.b16 %v4117
  %v4806 = vunpack.c.h.b16 %v4117
  %v4807 = vunpack.c.l.b16 %v4118
  %v4808 = vunpack.c.h.b16 %v4118
  %v4809 = vunpack.c.l.b16 %v4119
  %v4810 = vunpack.c.h.b16 %v4119
  %v4811 = vunpack.c.l.b16 %v4120
  %v4812 = vunpack.c.h.b16 %v4120
  %v4813 = vunpack.c.l.b16 %v4121
  %v4814 = vunpack.c.h.b16 %v4121
  %v4815 = vunpack.c.l.b16 %v4122
  %v4816 = vunpack.c.h.b16 %v4122
  %v4817 = vunpack.c.l.b16 %v4123
  %v4818 = vunpack.c.h.b16 %v4123
  %v4819 = vunpack.c.l.b16 %v4124
  %v4820 = vunpack.c.h.b16 %v4124
  %v4821 = vunpack.c.l.b16 %v4125
  %v4822 = vunpack.c.h.b16 %v4125
  %v4823 = vunpack.c.l.b16 %v4126
  %v4824 = vunpack.c.h.b16 %v4126
  %v4825 = vunpack.c.l.b16 %v4127
  %v4826 = vunpack.c.h.b16 %v4127
  %v4827 = vunpack.c.l.b16 %v4128
  %v4828 = vunpack.c.h.b16 %v4128
  %v4829 = vunpack.c.l.b16 %v4129
  %v4830 = vunpack.c.h.b16 %v4129
  %v4831 = vunpack.c.l.b16 %v4130
  %v4832 = vunpack.c.h.b16 %v4130
  %v4833 = vunpack.c.l.b16 %v4131
  %v4834 = vunpack.c.h.b16 %v4131
  %v4835 = vunpack.c.l.b16 %v4132
  %v4836 = vunpack.c.h.b16 %v4132
  %v4837 = vunpack.c.l.b16 %v4133
  %v4838 = vunpack.c.h.b16 %v4133
  %v4839 = vunpack.c.l.b16 %v4134
  %v4840 = vunpack.c.h.b16 %v4134
  %v4841 = vunpack.c.l.b16 %v4135
  %v4842 = vunpack.c.h.b16 %v4135
  %v4843 = vunpack.c.l.b16 %v4136
  %v4844 = vunpack.c.h.b16 %v4136
  %v4845 = vunpack.c.l.b16 %v4137
  %v4846 = vunpack.c.h.b16 %v4137
  %v4847 = vunpack.c.l.b16 %v4138
  %v4848 = vunpack.c.h.b16 %v4138
  %v4849 = vunpack.c.l.b16 %v4139
  %v4850 = vunpack.c.h.b16 %v4139
  %v4851 = vunpack.c.l.b16 %v4140
  %v4852 = vunpack.c.h.b16 %v4140
  %v4853 = vunpack.c.l.b16 %v4141
  %v4854 = vunpack.c.h.b16 %v4141
  %v4855 = vunpack.c.l.b16 %v4142
  %v4856 = vunpack.c.h.b16 %v4142
  %v4857 = vunpack.c.l.b16 %v4143
  %v4858 = vunpack.c.h.b16 %v4143
  %v4859 = vunpack.c.l.b16 %v4144
  %v4860 = vunpack.c.h.b16 %v4144
  %v4861 = vunpack.c.l.b16 %v4145
  %v4862 = vunpack.c.h.b16 %v4145
  %v4863 = vunpack.c.l.b16 %v4146
  %v4864 = vunpack.c.h.b16 %v4146
  %v4865 = vunpack.c.l.b16 %v4147
  %v4866 = vunpack.c.h.b16 %v4147
  %v4867 = vunpack.c.l.b16 %v4148
  %v4868 = vunpack.c.h.b16 %v4148
  %v4869 = vunpack.c.l.b16 %v4149
  %v4870 = vunpack.c.h.b16 %v4149
  %v4871 = vunpack.c.l.b16 %v4150
  %v4872 = vunpack.c.h.b16 %v4150
  %v4873 = vunpack.c.l.b16 %v4151
  %v4874 = vunpack.c.h.b16 %v4151
  %v4875 = vunpack.c.l.b16 %v4152
  %v4876 = vunpack.c.h.b16 %v4152
  %v4877 = vunpack.c.l.b16 %v4153
  %v4878 = vunpack.c.h.b16 %v4153
  %v4879 = vunpack.c.l.b16 %v4154
  %v4880 = vunpack.c.h.b16 %v4154
  %v4881 = vunpack.c.l.b16 %v4155
  %v4882 = vunpack.c.h.b16 %v4155
  %v4883 = vunpack.c.l.b16 %v4156
  %v4884 = vunpack.c.h.b16 %v4156
  %v4885 = vunpack.c.l.b16 %v4157
  %v4886 = vunpack.c.h.b16 %v4157
  %v4887 = vunpack.c.l.b16 %v4158
  %v4888 = vunpack.c.h.b16 %v4158
  %v4889 = vunpack.c.l.b16 %v4159
  %v4890 = vunpack.c.h.b16 %v4159
  %v4891 = vunpack.c.l.b16 %v4160
  %v4892 = vunpack.c.h.b16 %v4160
  %v4893 = vunpack.c.l.b16 %v4161
  %v4894 = vunpack.c.h.b16 %v4161
  %v4895 = vunpack.c.l.b16 %v4162
  %v4896 = vunpack.c.h.b16 %v4162
  %v4897 = vunpack.c.l.b16 %v4163
  %v4898 = vunpack.c.h.b16 %v4163
  %v4899 = vunpack.c.l.b16 %v4164
  %v4900 = vunpack.c.h.b16 %v4164
  %v4901 = vunpack.c.l.b16 %v4165
  %v4902 = vunpack.c.h.b16 %v4165
  %v4903 = vunpack.c.l.b16 %v4166
  %v4904 = vunpack.c.h.b16 %v4166
  %v4905 = vunpack.c.l.b16 %v4167
  %v4906 = vunpack.c.h.b16 %v4167
  %v4907 = vunpack.c.l.b16 %v4168
  %v4908 = vunpack.c.h.b16 %v4168
  %v4909 = vunpack.c.l.b16 %v4169
  %v4910 = vunpack.c.h.b16 %v4169
  %v4911 = vunpack.c.l.b16 %v4170
  %v4912 = vunpack.c.h.b16 %v4170
  %v4913 = vunpack.c.l.b16 %v4171
  %v4914 = vunpack.c.h.b16 %v4171
  %v4915 = vunpack.c.l.b16 %v4172
  %v4916 = vunpack.c.h.b16 %v4172
  %v4917 = vunpack.c.l.b16 %v4173
  %v4918 = vunpack.c.h.b16 %v4173
  %v4919 = vunpack.c.l.b16 %v4174
  %v4920 = vunpack.c.h.b16 %v4174
  %v4921 = vunpack.c.l.b16 %v4175
  %v4922 = vunpack.c.h.b16 %v4175
  %v4923 = vunpack.c.l.b16 %v4176
  %v4924 = vunpack.c.h.b16 %v4176
  %v4925 = vunpack.c.l.b16 %v4177
  %v4926 = vunpack.c.h.b16 %v4177
  %v4927 = vunpack.c.l.b16 %v4178
  %v4928 = vunpack.c.h.b16 %v4178
  %v4929 = vunpack.c.l.b16 %v4179
  %v4930 = vunpack.c.h.b16 %v4179
  %v4931 = vunpack.c.l.b16 %v4180
  %v4932 = vunpack.c.h.b16 %v4180
  %v4933 = vunpack.c.l.b16 %v4181
  %v4934 = vunpack.c.h.b16 %v4181
  %v4935 = vunpack.c.l.b16 %v4182
  %v4936 = vunpack.c.h.b16 %v4182
  %v4937 = vunpack.c.l.b16 %v4183
  %v4938 = vunpack.c.h.b16 %v4183
  %v4939 = vunpack.c.l.b16 %v4184
  %v4940 = vunpack.c.h.b16 %v4184
  %v4941 = vunpack.c.l.b16 %v4185
  %v4942 = vunpack.c.h.b16 %v4185
  %v4943 = vunpack.c.l.b16 %v4186
  %v4944 = vunpack.c.h.b16 %v4186
  %v4945 = vunpack.c.l.b16 %v4187
  %v4946 = vunpack.c.h.b16 %v4187
  %v4947 = vunpack.c.l.b16 %v4188
  %v4948 = vunpack.c.h.b16 %v4188
  %v4949 = vunpack.c.l.b16 %v4189
  %v4950 = vunpack.c.h.b16 %v4189
  %v4951 = vunpack.c.l.b16 %v4190
  %v4952 = vunpack.c.h.b16 %v4190
  %v4953 = vunpack.c.l.b16 %v4191
  %v4954 = vunpack.c.h.b16 %v4191
  %v4955 = vunpack.c.l.b16 %v4192
  %v4956 = vunpack.c.h.b16 %v4192
  %v4957 = vunpack.c.l.b16 %v4193
  %v4958 = vunpack.c.h.b16 %v4193
  %v4959 = vunpack.c.l.b16 %v4194
  %v4960 = vunpack.c.h.b16 %v4194
  %v4961 = vunpack.c.l.b16 %v4195
  %v4962 = vunpack.c.h.b16 %v4195
  %v4963 = vunpack.c.l.b16 %v4196
  %v4964 = vunpack.c.h.b16 %v4196
  %v4965 = vunpack.c.l.b16 %v4197
  %v4966 = vunpack.c.h.b16 %v4197
  %v4967 = vunpack.c.l.b16 %v4198
  %v4968 = vunpack.c.h.b16 %v4198
  %v4969 = vunpack.c.l.b16 %v4199
  %v4970 = vunpack.c.h.b16 %v4199
  %v4971 = vunpack.c.l.b16 %v4200
  %v4972 = vunpack.c.h.b16 %v4200
  %v4973 = vunpack.c.l.b16 %v4201
  %v4974 = vunpack.c.h.b16 %v4201
  %v4975 = vunpack.c.l.b16 %v4202
  %v4976 = vunpack.c.h.b16 %v4202
  %v4977 = vunpack.c.l.b16 %v4203
  %v4978 = vunpack.c.h.b16 %v4203
  %v4979 = vunpack.c.l.b16 %v4204
  %v4980 = vunpack.c.h.b16 %v4204
  %v4981 = vunpack.c.l.b16 %v4205
  %v4982 = vunpack.c.h.b16 %v4205
  %v4983 = vunpack.c.l.b16 %v4206
  %v4984 = vunpack.c.h.b16 %v4206
  %v4985 = vunpack.c.l.b16 %v4207
  %v4986 = vunpack.c.h.b16 %v4207
  %v4987 = vunpack.c.l.b16 %v4208
  %v4988 = vunpack.c.h.b16 %v4208
  %v4989 = vunpack.c.l.b16 %v4209
  %v4990 = vunpack.c.h.b16 %v4209
  %v4991 = vunpack.c.l.b16 %v4210
  %v4992 = vunpack.c.h.b16 %v4210
  %v4993 = vunpack.c.l.b16 %v4211
  %v4994 = vunpack.c.h.b16 %v4211
  %v4995 = vunpack.c.l.b16 %v4212
  %v4996 = vunpack.c.h.b16 %v4212
  %v4997 = vunpack.c.l.b16 %v4213
  %v4998 = vunpack.c.h.b16 %v4213
  %v4999 = vunpack.c.l.b16 %v4214
  %v5000 = vunpack.c.h.b16 %v4214
  %v5001 = vunpack.c.l.b16 %v4215
  %v5002 = vunpack.c.h.b16 %v4215
  %v5003 = vunpack.c.l.b16 %v4216
  %v5004 = vunpack.c.h.b16 %v4216
  %v5005 = vunpack.c.l.b16 %v4217
  %v5006 = vunpack.c.h.b16 %v4217
  %v5007 = vunpack.c.l.b16 %v4218
  %v5008 = vunpack.c.h.b16 %v4218
  %v5009 = vunpack.c.l.b16 %v4219
  %v5010 = vunpack.c.h.b16 %v4219
  %v5011 = vunpack.c.l.b16 %v4220
  %v5012 = vunpack.c.h.b16 %v4220
  %v5013 = vunpack.c.l.b16 %v4221
  %v5014 = vunpack.c.h.b16 %v4221
  %v5015 = vunpack.c.l.b16 %v4222
  %v5016 = vunpack.c.h.b16 %v4222
  %v5017 = vunpack.c.l.b16 %v4223
  %v5018 = vunpack.c.h.b16 %v4223
  %v5019 = vunpack.c.l.b16 %v4224
  %v5020 = vunpack.c.h.b16 %v4224
  %v5021 = vunpack.c.l.b16 %v4225
  %v5022 = vunpack.c.h.b16 %v4225
  %v5023 = vunpack.c.l.b16 %v4226
  %v5024 = vunpack.c.h.b16 %v4226
  %v5025 = vunpack.c.l.b16 %v4227
  %v5026 = vunpack.c.h.b16 %v4227
  %v5027 = vunpack.c.l.b16 %v4228
  %v5028 = vunpack.c.h.b16 %v4228
  %v5029 = vunpack.c.l.b16 %v4229
  %v5030 = vunpack.c.h.b16 %v4229
  %v5031 = vunpack.c.l.b16 %v4230
  %v5032 = vunpack.c.h.b16 %v4230
  %v5033 = vunpack.c.l.b16 %v4231
  %v5034 = vunpack.c.h.b16 %v4231
  %v5035 = vunpack.c.l.b16 %v4232
  %v5036 = vunpack.c.h.b16 %v4232
  %v5037 = vunpack.c.l.b16 %v4233
  %v5038 = vunpack.c.h.b16 %v4233
  %v5039 = vunpack.c.l.b16 %v4234
  %v5040 = vunpack.c.h.b16 %v4234
  %v5041 = vunpack.c.l.b16 %v4235
  %v5042 = vunpack.c.h.b16 %v4235
  %v5043 = vunpack.c.l.b16 %v4236
  %v5044 = vunpack.c.h.b16 %v4236
  %v5045 = vunpack.c.l.b16 %v4237
  %v5046 = vunpack.c.h.b16 %v4237
  %v5047 = vunpack.c.l.b16 %v4238
  %v5048 = vunpack.c.h.b16 %v4238
  %v5049 = vpack.c.b16 %v4545, %v4537
  %v5050 = vpack.c.b16 %v4546, %v4538
  %v5051 = vpack.c.b16 %v4547, %v4539
  %v5052 = vpack.c.b16 %v4548, %v4540
  %v5053 = vpack.c.b16 %v4549, %v4541
  %v5054 = vpack.c.b16 %v4550, %v4542
  %v5055 = vpack.c.b16 %v4551, %v4543
  %v5056 = vpack.c.b16 %v4552, %v4544
  %v5057 = vpack.c.b16 %v4561, %v4553
  %v5058 = vpack.c.b16 %v4562, %v4554
  %v5059 = vpack.c.b16 %v4563, %v4555
  %v5060 = vpack.c.b16 %v4564, %v4556
  %v5061 = vpack.c.b16 %v4565, %v4557
  %v5062 = vpack.c.b16 %v4566, %v4558
  %v5063 = vpack.c.b16 %v4567, %v4559
  %v5064 = vpack.c.b16 %v4568, %v4560
  %v5065 = vpack.c.b16 %v4577, %v4569
  %v5066 = vpack.c.b16 %v4578, %v4570
  %v5067 = vpack.c.b16 %v4579, %v4571
  %v5068 = vpack.c.b16 %v4580, %v4572
  %v5069 = vpack.c.b16 %v4581, %v4573
  %v5070 = vpack.c.b16 %v4582, %v4574
  %v5071 = vpack.c.b16 %v4583, %v4575
  %v5072 = vpack.c.b16 %v4584, %v4576
  %v5073 = vpack.c.b16 %v4593, %v4585
  %v5074 = vpack.c.b16 %v4594, %v4586
  %v5075 = vpack.c.b16 %v4595, %v4587
  %v5076 = vpack.c.b16 %v4596, %v4588
  %v5077 = vpack.c.b16 %v4597, %v4589
  %v5078 = vpack.c.b16 %v4598, %v4590
  %v5079 = vpack.c.b16 %v4599, %v4591
  %v5080 = vpack.c.b16 %v4600, %v4592
  %v5081 = vpack.c.b16 %v4609, %v4601
  %v5082 = vpack.c.b16 %v4610, %v4602
  %v5083 = vpack.c.b16 %v4611, %v4603
  %v5084 = vpack.c.b16 %v4612, %v4604
  %v5085 = vpack.c.b16 %v4613, %v4605
  %v5086 = vpack.c.b16 %v4614, %v4606
  %v5087 = vpack.c.b16 %v4615, %v4607
  %v5088 = vpack.c.b16 %v4616, %v4608
  %v5089 = vpack.c.b16 %v4625, %v4617
  %v5090 = vpack.c.b16 %v4626, %v4618
  %v5091 = vpack.c.b16 %v4627, %v4619
  %v5092 = vpack.c.b16 %v4628, %v4620
  %v5093 = vpack.c.b16 %v4629, %v4621
  %v5094 = vpack.c.b16 %v4630, %v4622
  %v5095 = vpack.c.b16 %v4631, %v4623
  %v5096 = vpack.c.b16 %v4632, %v4624
  %v5097 = vpack.c.b16 %v4641, %v4633
  %v5098 = vpack.c.b16 %v4642, %v4634
  %v5099 = vpack.c.b16 %v4643, %v4635
  %v5100 = vpack.c.b16 %v4644, %v4636
  %v5101 = vpack.c.b16 %v4645, %v4637
  %v5102 = vpack.c.b16 %v4646, %v4638
  %v5103 = vpack.c.b16 %v4647, %v4639
  %v5104 = vpack.c.b16 %v4648, %v4640
  %v5105 = vpack.c.b16 %v4657, %v4649
  %v5106 = vpack.c.b16 %v4658, %v4650
  %v5107 = vpack.c.b16 %v4659, %v4651
  %v5108 = vpack.c.b16 %v4660, %v4652
  %v5109 = vpack.c.b16 %v4661, %v4653
  %v5110 = vpack.c.b16 %v4662, %v4654
  %v5111 = vpack.c.b16 %v4663, %v4655
  %v5112 = vpack.c.b16 %v4664, %v4656
  %v5113 = vpack.c.b16 %v4673, %v4665
  %v5114 = vpack.c.b16 %v4674, %v4666
  %v5115 = vpack.c.b16 %v4675, %v4667
  %v5116 = vpack.c.b16 %v4676, %v4668
  %v5117 = vpack.c.b16 %v4677, %v4669
  %v5118 = vpack.c.b16 %v4678, %v4670
  %v5119 = vpack.c.b16 %v4679, %v4671
  %v5120 = vpack.c.b16 %v4680, %v4672
  %v5121 = vpack.c.b16 %v4689, %v4681
  %v5122 = vpack.c.b16 %v4690, %v4682
  %v5123 = vpack.c.b16 %v4691, %v4683
  %v5124 = vpack.c.b16 %v4692, %v4684
  %v5125 = vpack.c.b16 %v4693, %v4685
  %v5126 = vpack.c.b16 %v4694, %v4686
  %v5127 = vpack.c.b16 %v4695, %v4687
  %v5128 = vpack.c.b16 %v4696, %v4688
  %v5129 = vpack.c.b16 %v4705, %v4697
  %v5130 = vpack.c.b16 %v4706, %v4698
  %v5131 = vpack.c.b16 %v4707, %v4699
  %v5132 = vpack.c.b16 %v4708, %v4700
  %v5133 = vpack.c.b16 %v4709, %v4701
  %v5134 = vpack.c.b16 %v4710, %v4702
  %v5135 = vpack.c.b16 %v4711, %v4703
  %v5136 = vpack.c.b16 %v4712, %v4704
  %v5137 = vpack.c.b16 %v4721, %v4713
  %v5138 = vpack.c.b16 %v4722, %v4714
  %v5139 = vpack.c.b16 %v4723, %v4715
  %v5140 = vpack.c.b16 %v4724, %v4716
  %v5141 = vpack.c.b16 %v4725, %v4717
  %v5142 = vpack.c.b16 %v4726, %v4718
  %v5143 = vpack.c.b16 %v4727, %v4719
  %v5144 = vpack.c.b16 %v4728, %v4720
  %v5145 = vpack.c.b16 %v4737, %v4729
  %v5146 = vpack.c.b16 %v4738, %v4730
  %v5147 = vpack.c.b16 %v4739, %v4731
  %v5148 = vpack.c.b16 %v4740, %v4732
  %v5149 = vpack.c.b16 %v4741, %v4733
  %v5150 = vpack.c.b16 %v4742, %v4734
  %v5151 = vpack.c.b16 %v4743, %v4735
  %v5152 = vpack.c.b16 %v4744, %v4736
  %v5153 = vpack.c.b16 %v4753, %v4745
  %v5154 = vpack.c.b16 %v4754, %v4746
  %v5155 = vpack.c.b16 %v4755, %v4747
  %v5156 = vpack.c.b16 %v4756, %v4748
  %v5157 = vpack.c.b16 %v4757, %v4749
  %v5158 = vpack.c.b16 %v4758, %v4750
  %v5159 = vpack.c.b16 %v4759, %v4751
  %v5160 = vpack.c.b16 %v4760, %v4752
  %v5161 = vpack.c.b16 %v4769, %v4761
  %v5162 = vpack.c.b16 %v4770, %v4762
  %v5163 = vpack.c.b16 %v4771, %v4763
  %v5164 = vpack.c.b16 %v4772, %v4764
  %v5165 = vpack.c.b16 %v4773, %v4765
  %v5166 = vpack.c.b16 %v4774, %v4766
  %v5167 = vpack.c.b16 %v4775, %v4767
  %v5168 = vpack.c.b16 %v4776, %v4768
  %v5169 = vpack.c.b16 %v4785, %v4777
  %v5170 = vpack.c.b16 %v4786, %v4778
  %v5171 = vpack.c.b16 %v4787, %v4779
  %v5172 = vpack.c.b16 %v4788, %v4780
  %v5173 = vpack.c.b16 %v4789, %v4781
  %v5174 = vpack.c.b16 %v4790, %v4782
  %v5175 = vpack.c.b16 %v4791, %v4783
  %v5176 = vpack.c.b16 %v4792, %v4784
  %v5177 = vpack.c.b16 %v4801, %v4793
  %v5178 = vpack.c.b16 %v4802, %v4794
  %v5179 = vpack.c.b16 %v4803, %v4795
  %v5180 = vpack.c.b16 %v4804, %v4796
  %v5181 = vpack.c.b16 %v4805, %v4797
  %v5182 = vpack.c.b16 %v4806, %v4798
  %v5183 = vpack.c.b16 %v4807, %v4799
  %v5184 = vpack.c.b16 %v4808, %v4800
  %v5185 = vpack.c.b16 %v4817, %v4809
  %v5186 = vpack.c.b16 %v4818, %v4810
  %v5187 = vpack.c.b16 %v4819, %v4811
  %v5188 = vpack.c.b16 %v4820, %v4812
  %v5189 = vpack.c.b16 %v4821, %v4813
  %v5190 = vpack.c.b16 %v4822, %v4814
  %v5191 = vpack.c.b16 %v4823, %v4815
  %v5192 = vpack.c.b16 %v4824, %v4816
  %v5193 = vpack.c.b16 %v4833, %v4825
  %v5194 = vpack.c.b16 %v4834, %v4826
  %v5195 = vpack.c.b16 %v4835, %v4827
  %v5196 = vpack.c.b16 %v4836, %v4828
  %v5197 = vpack.c.b16 %v4837, %v4829
  %v5198 = vpack.c.b16 %v4838, %v4830
  %v5199 = vpack.c.b16 %v4839, %v4831
  %v5200 = vpack.c.b16 %v4840, %v4832
  %v5201 = vpack.c.b16 %v4849, %v4841
  %v5202 = vpack.c.b16 %v4850, %v4842
  %v5203 = vpack.c.b16 %v4851, %v4843
  %v5204 = vpack.c.b16 %v4852, %v4844
  %v5205 = vpack.c.b16 %v4853, %v4845
  %v5206 = vpack.c.b16 %v4854, %v4846
  %v5207 = vpack.c.b16 %v4855, %v4847
  %v5208 = vpack.c.b16 %v4856, %v4848
  %v5209 = vpack.c.b16 %v4865, %v4857
  %v5210 = vpack.c.b16 %v4866, %v4858
  %v5211 = vpack.c.b16 %v4867, %v4859
  %v5212 = vpack.c.b16 %v4868, %v4860
  %v5213 = vpack.c.b16 %v4869, %v4861
  %v5214 = vpack.c.b16 %v4870, %v4862
  %v5215 = vpack.c.b16 %v4871, %v4863
  %v5216 = vpack.c.b16 %v4872, %v4864
  %v5217 = vpack.c.b16 %v4881, %v4873
  %v5218 = vpack.c.b16 %v4882, %v4874
  %v5219 = vpack.c.b16 %v4883, %v4875
  %v5220 = vpack.c.b16 %v4884, %v4876
  %v5221 = vpack.c.b16 %v4885, %v4877
  %v5222 = vpack.c.b16 %v4886, %v4878
  %v5223 = vpack.c.b16 %v4887, %v4879
  %v5224 = vpack.c.b16 %v4888, %v4880
  %v5225 = vpack.c.b16 %v4897, %v4889
  %v5226 = vpack.c.b16 %v4898, %v4890
  %v5227 = vpack.c.b16 %v4899, %v4891
  %v5228 = vpack.c.b16 %v4900, %v4892
  %v5229 = vpack.c.b16 %v4901, %v4893
  %v5230 = vpack.c.b16 %v4902, %v4894
  %v5231 = vpack.c.b16 %v4903, %v4895
  %v5232 = vpack.c.b16 %v4904, %v4896
  %v5233 = vpack.c.b16 %v4913, %v4905
  %v5234 = vpack.c.b16 %v4914, %v4906
  %v5235 = vpack.c.b16 %v4915, %v4907
  %v5236 = vpack.c.b16 %v4916, %v4908
  %v5237 = vpack.c.b16 %v4917, %v4909
  %v5238 = vpack.c.b16 %v4918, %v4910
  %v5239 = vpack.c.b16 %v4919, %v4911
  %v5240 = vpack.c.b16 %v4920, %v4912
  %v5241 = vpack.c.b16 %v4929, %v4921
  %v5242 = vpack.c.b16 %v4930, %v4922
  %v5243 = vpack.c.b16 %v4931, %v4923
  %v5244 = vpack.c.b16 %v4932, %v4924
  %v5245 = vpack.c.b16 %v4933, %v4925
  %v5246 = vpack.c.b16 %v4934, %v4926
  %v5247 = vpack.c.b16 %v4935, %v4927
  %v5248 = vpack.c.b16 %v4936, %v4928
  %v5249 = vpack.c.b16 %v4945, %v4937
  %v5250 = vpack.c.b16 %v4946, %v4938
  %v5251 = vpack.c.b16 %v4947, %v4939
  %v5252 = vpack.c.b16 %v4948, %v4940
  %v5253 = vpack.c.b16 %v4949, %v4941
  %v5254 = vpack.c.b16 %v4950, %v4942
  %v5255 = vpack.c.b16 %v4951, %v4943
  %v5256 = vpack.c.b16 %v4952, %v4944
  %v5257 = vpack.c.b16 %v4961, %v4953
  %v5258 = vpack.c.b16 %v4962, %v4954
  %v5259 = vpack.c.b16 %v4963, %v4955
  %v5260 = vpack.c.b16 %v4964, %v4956
  %v5261 = vpack.c.b16 %v4965, %v4957
  %v5262 = vpack.c.b16 %v4966, %v4958
  %v5263 = vpack.c.b16 %v4967, %v4959
  %v5264 = vpack.c.b16 %v4968, %v4960
  %v5265 = vpack.c.b16 %v4977, %v4969
  %v5266 = vpack.c.b16 %v4978, %v4970
  %v5267 = vpack.c.b16 %v4979, %v4971
  %v5268 = vpack.c.b16 %v4980, %v4972
  %v5269 = vpack.c.b16 %v4981, %v4973
  %v5270 = vpack.c.b16 %v4982, %v4974
  %v5271 = vpack.c.b16 %v4983, %v4975
  %v5272 = vpack.c.b16 %v4984, %v4976
  %v5273 = vpack.c.b16 %v4993, %v4985
  %v5274 = vpack.c.b16 %v4994, %v4986
  %v5275 = vpack.c.b16 %v4995, %v4987
  %v5276 = vpack.c.b16 %v4996, %v4988
  %v5277 = vpack.c.b16 %v4997, %v4989
  %v5278 = vpack.c.b16 %v4998, %v4990
  %v5279 = vpack.c.b16 %v4999, %v4991
  %v5280 = vpack.c.b16 %v5000, %v4992
  %v5281 = vpack.c.b16 %v5009, %v5001
  %v5282 = vpack.c.b16 %v5010, %v5002
  %v5283 = vpack.c.b16 %v5011, %v5003
  %v5284 = vpack.c.b16 %v5012, %v5004
  %v5285 = vpack.c.b16 %v5013, %v5005
  %v5286 = vpack.c.b16 %v5014, %v5006
  %v5287 = vpack.c.b16 %v5015, %v5007
  %v5288 = vpack.c.b16 %v5016, %v5008
  %v5289 = vpack.c.b16 %v5025, %v5017
  %v5290 = vpack.c.b16 %v5026, %v5018
  %v5291 = vpack.c.b16 %v5027, %v5019
  %v5292 = vpack.c.b16 %v5028, %v5020
  %v5293 = vpack.c.b16 %v5029, %v5021
  %v5294 = vpack.c.b16 %v5030, %v5022
  %v5295 = vpack.c.b16 %v5031, %v5023
  %v5296 = vpack.c.b16 %v5032, %v5024
  %v5297 = vpack.c.b16 %v5041, %v5033
  %v5298 = vpack.c.b16 %v5042, %v5034
  %v5299 = vpack.c.b16 %v5043, %v5035
  %v5300 = vpack.c.b16 %v5044, %v5036
  %v5301 = vpack.c.b16 %v5045, %v5037
  %v5302 = vpack.c.b16 %v5046, %v5038
  %v5303 = vpack.c.b16 %v5047, %v5039
  %v5304 = vpack.c.b16 %v5048, %v5040
  %5561 = vmatprep.subr.bf16.mxu0 %v5106
  %5562 = vmatpush1.bf16.msra.mxu0 %v5105
  %5563 = vmatprep.subr.bf16.mxu0 %v5098
  %5564 = vmatpush1.bf16.msra.mxu0 %v5097
  %5565 = vmatprep.subr.bf16.mxu0 %v5090
  %5566 = vmatpush1.bf16.msra.mxu0 %v5089
  %5567 = vmatprep.subr.bf16.mxu0 %v5082
  %5568 = vmatpush1.bf16.msra.mxu0 %v5081
  %5569 = vmatprep.subr.bf16.mxu0 %v5074
  %5570 = vmatpush1.bf16.msra.mxu0 %v5073
  %5571 = vmatprep.subr.bf16.mxu0 %v5066
  %5572 = vmatpush1.bf16.msra.mxu0 %v5065
  %5573 = vmatprep.subr.bf16.mxu0 %v5058
  %5574 = vmatpush1.bf16.msra.mxu0 %v5057
  %5575 = vmatprep.subr.bf16.mxu0 %v5050
  %5576 = vmatpush1.bf16.msra.mxu0 %v5049
  %5577 = vmatprep.subr.bf16.mxu0 %v5170
  %5578 = vmatpush2.bf16.msra.mxu0 %v5169
  %5579 = vmatprep.subr.bf16.mxu0 %v5162
  %5580 = vmatpush2.bf16.msra.mxu0 %v5161
  %5581 = vmatprep.subr.bf16.mxu0 %v5154
  %5582 = vmatpush2.bf16.msra.mxu0 %v5153
  %5583 = vmatprep.subr.bf16.mxu0 %v5146
  %5584 = vmatpush2.bf16.msra.mxu0 %v5145
  %5585 = vmatprep.subr.bf16.mxu0 %v5138
  %5586 = vmatpush2.bf16.msra.mxu0 %v5137
  %5587 = vmatprep.subr.bf16.mxu0 %v5130
  %5588 = vmatpush2.bf16.msra.mxu0 %v5129
  %5589 = vmatprep.subr.bf16.mxu0 %v5122
  %5590 = vmatpush2.bf16.msra.mxu0 %v5121
  %5591 = vmatprep.subr.bf16.mxu0 %v5114
  %5592 = vmatpush2.bf16.msra.mxu0 %v5113
  %5593 = vmatprep.mubr.bf16.mxu0 %v3980
  %5594 = vmatmul.mubr.bf16.gmra.mxu0 %v3979
  %v5595 = vpop.f32.mrf.mxu0
  %v5596 = vadd.f32 %v4244, %v5595
  %v5597 = vpop.f32.mrf.mxu0
  %v5598 = vadd.f32 %v4248, %v5597
  %v5599 = vpop.f32.mrf.mxu0
  %v5600 = vpop.f32.mrf.mxu0
  %5601 = vdwg.mxu0
  %5602 = vmatprep.subr.bf16.mxu0 %v5234
  %5603 = vmatpush1.bf16.msra.mxu0 %v5233
  %5604 = vmatprep.subr.bf16.mxu0 %v5226
  %5605 = vmatpush1.bf16.msra.mxu0 %v5225
  %5606 = vmatprep.subr.bf16.mxu0 %v5218
  %5607 = vmatpush1.bf16.msra.mxu0 %v5217
  %5608 = vmatprep.subr.bf16.mxu0 %v5210
  %5609 = vmatpush1.bf16.msra.mxu0 %v5209
  %5610 = vmatprep.subr.bf16.mxu0 %v5202
  %5611 = vmatpush1.bf16.msra.mxu0 %v5201
  %5612 = vmatprep.subr.bf16.mxu0 %v5194
  %5613 = vmatpush1.bf16.msra.mxu0 %v5193
  %5614 = vmatprep.subr.bf16.mxu0 %v5186
  %5615 = vmatpush1.bf16.msra.mxu0 %v5185
  %5616 = vmatprep.subr.bf16.mxu0 %v5178
  %5617 = vmatpush1.bf16.msra.mxu0 %v5177
  %5618 = vmatprep.subr.bf16.mxu0 %v5298
  %5619 = vmatpush2.bf16.msra.mxu0 %v5297
  %5620 = vmatprep.subr.bf16.mxu0 %v5290
  %5621 = vmatpush2.bf16.msra.mxu0 %v5289
  %5622 = vmatprep.subr.bf16.mxu0 %v5282
  %5623 = vmatpush2.bf16.msra.mxu0 %v5281
  %5624 = vmatprep.subr.bf16.mxu0 %v5274
  %5625 = vmatpush2.bf16.msra.mxu0 %v5273
  %5626 = vmatprep.subr.bf16.mxu0 %v5266
  %5627 = vmatpush2.bf16.msra.mxu0 %v5265
  %5628 = vmatprep.subr.bf16.mxu0 %v5258
  %5629 = vmatpush2.bf16.msra.mxu0 %v5257
  %5630 = vmatprep.subr.bf16.mxu0 %v5250
  %5631 = vmatpush2.bf16.msra.mxu0 %v5249
  %5632 = vmatprep.subr.bf16.mxu0 %v5242
  %5633 = vmatpush2.bf16.msra.mxu0 %v5241
  %5634 = vmatprep.mubr.bf16.mxu0 %v3982
  %5635 = vmatmul.mubr.bf16.gmra.mxu0 %v3981
  %v5636 = vpop.f32.mrf.mxu0
  %v5637 = vadd.f32 %v5596, %v5636
  %v5638 = vpop.f32.mrf.mxu0
  %v5639 = vadd.f32 %v5598, %v5638
  %v5640 = vpop.f32.mrf.mxu0
  %v5641 = vpop.f32.mrf.mxu0
  %5642 = vdwg.mxu0
  %5643 = vmatprep.subr.bf16.mxu0 %v5108
  %5644 = vmatpush1.bf16.msra.mxu0 %v5107
  %5645 = vmatprep.subr.bf16.mxu0 %v5100
  %5646 = vmatpush1.bf16.msra.mxu0 %v5099
  %5647 = vmatprep.subr.bf16.mxu0 %v5092
  %5648 = vmatpush1.bf16.msra.mxu0 %v5091
  %5649 = vmatprep.subr.bf16.mxu0 %v5084
  %5650 = vmatpush1.bf16.msra.mxu0 %v5083
  %5651 = vmatprep.subr.bf16.mxu0 %v5076
  %5652 = vmatpush1.bf16.msra.mxu0 %v5075
  %5653 = vmatprep.subr.bf16.mxu0 %v5068
  %5654 = vmatpush1.bf16.msra.mxu0 %v5067
  %5655 = vmatprep.subr.bf16.mxu0 %v5060
  %5656 = vmatpush1.bf16.msra.mxu0 %v5059
  %5657 = vmatprep.subr.bf16.mxu0 %v5052
  %5658 = vmatpush1.bf16.msra.mxu0 %v5051
  %5659 = vmatprep.subr.bf16.mxu0 %v5172
  %5660 = vmatpush2.bf16.msra.mxu0 %v5171
  %5661 = vmatprep.subr.bf16.mxu0 %v5164
  %5662 = vmatpush2.bf16.msra.mxu0 %v5163
  %5663 = vmatprep.subr.bf16.mxu0 %v5156
  %5664 = vmatpush2.bf16.msra.mxu0 %v5155
  %5665 = vmatprep.subr.bf16.mxu0 %v5148
  %5666 = vmatpush2.bf16.msra.mxu0 %v5147
  %5667 = vmatprep.subr.bf16.mxu0 %v5140
  %5668 = vmatpush2.bf16.msra.mxu0 %v5139
  %5669 = vmatprep.subr.bf16.mxu0 %v5132
  %5670 = vmatpush2.bf16.msra.mxu0 %v5131
  %5671 = vmatprep.subr.bf16.mxu0 %v5124
  %5672 = vmatpush2.bf16.msra.mxu0 %v5123
  %5673 = vmatprep.subr.bf16.mxu0 %v5116
  %5674 = vmatpush2.bf16.msra.mxu0 %v5115
  %5675 = vmatprep.mubr.bf16.mxu0 %v3980
  %5676 = vmatmul.mubr.bf16.gmra.mxu0 %v3979
  %v5677 = vpop.f32.mrf.mxu0
  %v5678 = vadd.f32 %v4252, %v5677
  %v5679 = vpop.f32.mrf.mxu0
  %v5680 = vadd.f32 %v4256, %v5679
  %v5681 = vpop.f32.mrf.mxu0
  %v5682 = vpop.f32.mrf.mxu0
  %5683 = vdwg.mxu0
  %5684 = vmatprep.subr.bf16.mxu0 %v5236
  %5685 = vmatpush1.bf16.msra.mxu0 %v5235
  %5686 = vmatprep.subr.bf16.mxu0 %v5228
  %5687 = vmatpush1.bf16.msra.mxu0 %v5227
  %5688 = vmatprep.subr.bf16.mxu0 %v5220
  %5689 = vmatpush1.bf16.msra.mxu0 %v5219
  %5690 = vmatprep.subr.bf16.mxu0 %v5212
  %5691 = vmatpush1.bf16.msra.mxu0 %v5211
  %5692 = vmatprep.subr.bf16.mxu0 %v5204
  %5693 = vmatpush1.bf16.msra.mxu0 %v5203
  %5694 = vmatprep.subr.bf16.mxu0 %v5196
  %5695 = vmatpush1.bf16.msra.mxu0 %v5195
  %5696 = vmatprep.subr.bf16.mxu0 %v5188
  %5697 = vmatpush1.bf16.msra.mxu0 %v5187
  %5698 = vmatprep.subr.bf16.mxu0 %v5180
  %5699 = vmatpush1.bf16.msra.mxu0 %v5179
  %5700 = vmatprep.subr.bf16.mxu0 %v5300
  %5701 = vmatpush2.bf16.msra.mxu0 %v5299
  %5702 = vmatprep.subr.bf16.mxu0 %v5292
  %5703 = vmatpush2.bf16.msra.mxu0 %v5291
  %5704 = vmatprep.subr.bf16.mxu0 %v5284
  %5705 = vmatpush2.bf16.msra.mxu0 %v5283
  %5706 = vmatprep.subr.bf16.mxu0 %v5276
  %5707 = vmatpush2.bf16.msra.mxu0 %v5275
  %5708 = vmatprep.subr.bf16.mxu0 %v5268
  %5709 = vmatpush2.bf16.msra.mxu0 %v5267
  %5710 = vmatprep.subr.bf16.mxu0 %v5260
  %5711 = vmatpush2.bf16.msra.mxu0 %v5259
  %5712 = vmatprep.subr.bf16.mxu0 %v5252
  %5713 = vmatpush2.bf16.msra.mxu0 %v5251
  %5714 = vmatprep.subr.bf16.mxu0 %v5244
  %5715 = vmatpush2.bf16.msra.mxu0 %v5243
  %5716 = vmatprep.mubr.bf16.mxu0 %v3982
  %5717 = vmatmul.mubr.bf16.gmra.mxu0 %v3981
  %v5718 = vpop.f32.mrf.mxu0
  %v5719 = vadd.f32 %v5678, %v5718
  %v5720 = vpop.f32.mrf.mxu0
  %v5721 = vadd.f32 %v5680, %v5720
  %v5722 = vpop.f32.mrf.mxu0
  %v5723 = vpop.f32.mrf.mxu0
  %5724 = vdwg.mxu0
  %5725 = vmatprep.subr.bf16.mxu0 %v5110
  %5726 = vmatpush1.bf16.msra.mxu0 %v5109
  %5727 = vmatprep.subr.bf16.mxu0 %v5102
  %5728 = vmatpush1.bf16.msra.mxu0 %v5101
  %5729 = vmatprep.subr.bf16.mxu0 %v5094
  %5730 = vmatpush1.bf16.msra.mxu0 %v5093
  %5731 = vmatprep.subr.bf16.mxu0 %v5086
  %5732 = vmatpush1.bf16.msra.mxu0 %v5085
  %5733 = vmatprep.subr.bf16.mxu0 %v5078
  %5734 = vmatpush1.bf16.msra.mxu0 %v5077
  %5735 = vmatprep.subr.bf16.mxu0 %v5070
  %5736 = vmatpush1.bf16.msra.mxu0 %v5069
  %5737 = vmatprep.subr.bf16.mxu0 %v5062
  %5738 = vmatpush1.bf16.msra.mxu0 %v5061
  %5739 = vmatprep.subr.bf16.mxu0 %v5054
  %5740 = vmatpush1.bf16.msra.mxu0 %v5053
  %5741 = vmatprep.subr.bf16.mxu0 %v5174
  %5742 = vmatpush2.bf16.msra.mxu0 %v5173
  %5743 = vmatprep.subr.bf16.mxu0 %v5166
  %5744 = vmatpush2.bf16.msra.mxu0 %v5165
  %5745 = vmatprep.subr.bf16.mxu0 %v5158
  %5746 = vmatpush2.bf16.msra.mxu0 %v5157
  %5747 = vmatprep.subr.bf16.mxu0 %v5150
  %5748 = vmatpush2.bf16.msra.mxu0 %v5149
  %5749 = vmatprep.subr.bf16.mxu0 %v5142
  %5750 = vmatpush2.bf16.msra.mxu0 %v5141
  %5751 = vmatprep.subr.bf16.mxu0 %v5134
  %5752 = vmatpush2.bf16.msra.mxu0 %v5133
  %5753 = vmatprep.subr.bf16.mxu0 %v5126
  %5754 = vmatpush2.bf16.msra.mxu0 %v5125
  %5755 = vmatprep.subr.bf16.mxu0 %v5118
  %5756 = vmatpush2.bf16.msra.mxu0 %v5117
  %5757 = vmatprep.mubr.bf16.mxu0 %v3980
  %5758 = vmatmul.mubr.bf16.gmra.mxu0 %v3979
  %v5759 = vpop.f32.mrf.mxu0
  %v5760 = vadd.f32 %v4260, %v5759
  %v5761 = vpop.f32.mrf.mxu0
  %v5762 = vadd.f32 %v4264, %v5761
  %v5763 = vpop.f32.mrf.mxu0
  %v5764 = vpop.f32.mrf.mxu0
  %5765 = vdwg.mxu0
  %5766 = vmatprep.subr.bf16.mxu0 %v5238
  %5767 = vmatpush1.bf16.msra.mxu0 %v5237
  %5768 = vmatprep.subr.bf16.mxu0 %v5230
  %5769 = vmatpush1.bf16.msra.mxu0 %v5229
  %5770 = vmatprep.subr.bf16.mxu0 %v5222
  %5771 = vmatpush1.bf16.msra.mxu0 %v5221
  %5772 = vmatprep.subr.bf16.mxu0 %v5214
  %5773 = vmatpush1.bf16.msra.mxu0 %v5213
  %5774 = vmatprep.subr.bf16.mxu0 %v5206
  %5775 = vmatpush1.bf16.msra.mxu0 %v5205
  %5776 = vmatprep.subr.bf16.mxu0 %v5198
  %5777 = vmatpush1.bf16.msra.mxu0 %v5197
  %5778 = vmatprep.subr.bf16.mxu0 %v5190
  %5779 = vmatpush1.bf16.msra.mxu0 %v5189
  %5780 = vmatprep.subr.bf16.mxu0 %v5182
  %5781 = vmatpush1.bf16.msra.mxu0 %v5181
  %5782 = vmatprep.subr.bf16.mxu0 %v5302
  %5783 = vmatpush2.bf16.msra.mxu0 %v5301
  %5784 = vmatprep.subr.bf16.mxu0 %v5294
  %5785 = vmatpush2.bf16.msra.mxu0 %v5293
  %5786 = vmatprep.subr.bf16.mxu0 %v5286
  %5787 = vmatpush2.bf16.msra.mxu0 %v5285
  %5788 = vmatprep.subr.bf16.mxu0 %v5278
  %5789 = vmatpush2.bf16.msra.mxu0 %v5277
  %5790 = vmatprep.subr.bf16.mxu0 %v5270
  %5791 = vmatpush2.bf16.msra.mxu0 %v5269
  %5792 = vmatprep.subr.bf16.mxu0 %v5262
  %5793 = vmatpush2.bf16.msra.mxu0 %v5261
  %5794 = vmatprep.subr.bf16.mxu0 %v5254
  %5795 = vmatpush2.bf16.msra.mxu0 %v5253
  %5796 = vmatprep.subr.bf16.mxu0 %v5246
  %5797 = vmatpush2.bf16.msra.mxu0 %v5245
  %5798 = vmatprep.mubr.bf16.mxu0 %v3982
  %5799 = vmatmul.mubr.bf16.gmra.mxu0 %v3981
  %v5800 = vpop.f32.mrf.mxu0
  %v5801 = vadd.f32 %v5760, %v5800
  %v5802 = vpop.f32.mrf.mxu0
  %v5803 = vadd.f32 %v5762, %v5802
  %v5804 = vpop.f32.mrf.mxu0
  %v5805 = vpop.f32.mrf.mxu0
  %5806 = vdwg.mxu0
  %5807 = vmatprep.subr.bf16.mxu0 %v5112
  %5808 = vmatpush1.bf16.msra.mxu0 %v5111
  %5809 = vmatprep.subr.bf16.mxu0 %v5104
  %5810 = vmatpush1.bf16.msra.mxu0 %v5103
  %5811 = vmatprep.subr.bf16.mxu0 %v5096
  %5812 = vmatpush1.bf16.msra.mxu0 %v5095
  %5813 = vmatprep.subr.bf16.mxu0 %v5088
  %5814 = vmatpush1.bf16.msra.mxu0 %v5087
  %5815 = vmatprep.subr.bf16.mxu0 %v5080
  %5816 = vmatpush1.bf16.msra.mxu0 %v5079
  %5817 = vmatprep.subr.bf16.mxu0 %v5072
  %5818 = vmatpush1.bf16.msra.mxu0 %v5071
  %5819 = vmatprep.subr.bf16.mxu0 %v5064
  %5820 = vmatpush1.bf16.msra.mxu0 %v5063
  %5821 = vmatprep.subr.bf16.mxu0 %v5056
  %5822 = vmatpush1.bf16.msra.mxu0 %v5055
  %5823 = vmatprep.subr.bf16.mxu0 %v5176
  %5824 = vmatpush2.bf16.msra.mxu0 %v5175
  %5825 = vmatprep.subr.bf16.mxu0 %v5168
  %5826 = vmatpush2.bf16.msra.mxu0 %v5167
  %5827 = vmatprep.subr.bf16.mxu0 %v5160
  %5828 = vmatpush2.bf16.msra.mxu0 %v5159
  %5829 = vmatprep.subr.bf16.mxu0 %v5152
  %5830 = vmatpush2.bf16.msra.mxu0 %v5151
  %5831 = vmatprep.subr.bf16.mxu0 %v5144
  %5832 = vmatpush2.bf16.msra.mxu0 %v5143
  %5833 = vmatprep.subr.bf16.mxu0 %v5136
  %5834 = vmatpush2.bf16.msra.mxu0 %v5135
  %5835 = vmatprep.subr.bf16.mxu0 %v5128
  %5836 = vmatpush2.bf16.msra.mxu0 %v5127
  %5837 = vmatprep.subr.bf16.mxu0 %v5120
  %5838 = vmatpush2.bf16.msra.mxu0 %v5119
  %5839 = vmatprep.mubr.bf16.mxu0 %v3980
  %5840 = vmatmul.mubr.bf16.gmra.mxu0 %v3979
  %v5841 = vpop.f32.mrf.mxu0
  %v5842 = vadd.f32 %v4268, %v5841
  %v5843 = vpop.f32.mrf.mxu0
  %v5844 = vadd.f32 %v4272, %v5843
  %v5845 = vpop.f32.mrf.mxu0
  %v5846 = vpop.f32.mrf.mxu0
  %5847 = vdwg.mxu0
  %5848 = vmatprep.subr.bf16.mxu0 %v5240
  %5849 = vmatpush1.bf16.msra.mxu0 %v5239
  %5850 = vmatprep.subr.bf16.mxu0 %v5232
  %5851 = vmatpush1.bf16.msra.mxu0 %v5231
  %5852 = vmatprep.subr.bf16.mxu0 %v5224
  %5853 = vmatpush1.bf16.msra.mxu0 %v5223
  %5854 = vmatprep.subr.bf16.mxu0 %v5216
  %5855 = vmatpush1.bf16.msra.mxu0 %v5215
  %5856 = vmatprep.subr.bf16.mxu0 %v5208
  %5857 = vmatpush1.bf16.msra.mxu0 %v5207
  %5858 = vmatprep.subr.bf16.mxu0 %v5200
  %5859 = vmatpush1.bf16.msra.mxu0 %v5199
  %5860 = vmatprep.subr.bf16.mxu0 %v5192
  %5861 = vmatpush1.bf16.msra.mxu0 %v5191
  %5862 = vmatprep.subr.bf16.mxu0 %v5184
  %5863 = vmatpush1.bf16.msra.mxu0 %v5183
  %5864 = vmatprep.subr.bf16.mxu0 %v5304
  %5865 = vmatpush2.bf16.msra.mxu0 %v5303
  %5866 = vmatprep.subr.bf16.mxu0 %v5296
  %5867 = vmatpush2.bf16.msra.mxu0 %v5295
  %5868 = vmatprep.subr.bf16.mxu0 %v5288
  %5869 = vmatpush2.bf16.msra.mxu0 %v5287
  %5870 = vmatprep.subr.bf16.mxu0 %v5280
  %5871 = vmatpush2.bf16.msra.mxu0 %v5279
  %5872 = vmatprep.subr.bf16.mxu0 %v5272
  %5873 = vmatpush2.bf16.msra.mxu0 %v5271
  %5874 = vmatprep.subr.bf16.mxu0 %v5264
  %5875 = vmatpush2.bf16.msra.mxu0 %v5263
  %5876 = vmatprep.subr.bf16.mxu0 %v5256
  %5877 = vmatpush2.bf16.msra.mxu0 %v5255
  %5878 = vmatprep.subr.bf16.mxu0 %v5248
  %5879 = vmatpush2.bf16.msra.mxu0 %v5247
  %5880 = vmatprep.mubr.bf16.mxu0 %v3982
  %5881 = vmatmul.mubr.bf16.gmra.mxu0 %v3981
  %v5882 = vpop.f32.mrf.mxu0
  %v5883 = vadd.f32 %v5842, %v5882
  %v5884 = vpop.f32.mrf.mxu0
  %v5885 = vadd.f32 %v5844, %v5884
  %v5886 = vpop.f32.mrf.mxu0
  %v5887 = vpop.f32.mrf.mxu0
  %5888 = vdwg.mxu0
  %v5889 = vmax.f32 %v5637, 0.0
  %v5890 = vmax.f32 %v5639, 0.0
  %v5891 = vmax.f32 %v5719, 0.0
  %v5892 = vmax.f32 %v5721, 0.0
  %v5893 = vmax.f32 %v5801, 0.0
  %v5894 = vmax.f32 %v5803, 0.0
  %v5895 = vmax.f32 %v5883, 0.0
  %v5896 = vmax.f32 %v5885, 0.0
  %v5897 = vpack.c.bf16 %v5889, %v5889
  %v5898 = vpack.c.bf16 %v5890, %v5890
  %v5899 = vpack.c.bf16 %v5891, %v5891
  %v5900 = vpack.c.bf16 %v5892, %v5892
  %v5901 = vpack.c.bf16 %v5893, %v5893
  %v5902 = vpack.c.bf16 %v5894, %v5894
  %v5903 = vpack.c.bf16 %v5895, %v5895
  %v5904 = vpack.c.bf16 %v5896, %v5896
  %v5905 = vld [vmem:[%s13] sm:$0xf]
  %v5906 = vld [vmem:[%s13 + $0x4] sm:$0xf]
  %v5907 = vld [vmem:[%s13 + $0x8] sm:$0xf]
  %v5908 = vld [vmem:[%s13 + $0xc] sm:$0xf]
  %v5909 = vld [vmem:[%s13 + $0x10] sm:$0xf]
  %v5910 = vld [vmem:[%s13 + $0x14] sm:$0xf]
  %v5911 = vld [vmem:[%s13 + $0x18] sm:$0xf]
  %v5912 = vld [vmem:[%s13 + $0x1c] sm:$0xf]
  %v5913 = vld [vmem:[%s13 + $0x20] sm:$0xf]
  %v5914 = vld [vmem:[%s13 + $0x24] sm:$0xf]
  %v5915 = vld [vmem:[%s13 + $0x28] sm:$0xf]
  %v5916 = vld [vmem:[%s13 + $0x2c] sm:$0xf]
  %v5917 = vld [vmem:[%s13 + $0x30] sm:$0xf]
  %v5918 = vld [vmem:[%s13 + $0x34] sm:$0xf]
  %v5919 = vld [vmem:[%s13 + $0x38] sm:$0xf]
  %v5920 = vld [vmem:[%s13 + $0x3c] sm:$0xf]
  %v5921 = vld [vmem:[%s13 + $0x40] sm:$0xf]
  %v5922 = vld [vmem:[%s13 + $0x44] sm:$0xf]
  %v5923 = vld [vmem:[%s13 + $0x48] sm:$0xf]
  %v5924 = vld [vmem:[%s13 + $0x4c] sm:$0xf]
  %v5925 = vld [vmem:[%s13 + $0x50] sm:$0xf]
  %v5926 = vld [vmem:[%s13 + $0x54] sm:$0xf]
  %v5927 = vld [vmem:[%s13 + $0x58] sm:$0xf]
  %v5928 = vld [vmem:[%s13 + $0x5c] sm:$0xf]
  %v5929 = vld [vmem:[%s13 + $0x60] sm:$0xf]
  %v5930 = vld [vmem:[%s13 + $0x64] sm:$0xf]
  %v5931 = vld [vmem:[%s13 + $0x68] sm:$0xf]
  %v5932 = vld [vmem:[%s13 + $0x6c] sm:$0xf]
  %v5933 = vld [vmem:[%s13 + $0x70] sm:$0xf]
  %v5934 = vld [vmem:[%s13 + $0x74] sm:$0xf]
  %v5935 = vld [vmem:[%s13 + $0x78] sm:$0xf]
  %v5936 = vld [vmem:[%s13 + $0x7c] sm:$0xf]
  %v5937 = vld [vmem:[%s13 + $0x80] sm:$0xf]
  %v5938 = vld [vmem:[%s13 + $0x84] sm:$0xf]
  %v5939 = vld [vmem:[%s13 + $0x88] sm:$0xf]
  %v5940 = vld [vmem:[%s13 + $0x8c] sm:$0xf]
  %v5941 = vld [vmem:[%s13 + $0x90] sm:$0xf]
  %v5942 = vld [vmem:[%s13 + $0x94] sm:$0xf]
  %v5943 = vld [vmem:[%s13 + $0x98] sm:$0xf]
  %v5944 = vld [vmem:[%s13 + $0x9c] sm:$0xf]
  %v5945 = vld [vmem:[%s13 + $0xa0] sm:$0xf]
  %v5946 = vld [vmem:[%s13 + $0xa4] sm:$0xf]
  %v5947 = vld [vmem:[%s13 + $0xa8] sm:$0xf]
  %v5948 = vld [vmem:[%s13 + $0xac] sm:$0xf]
  %v5949 = vld [vmem:[%s13 + $0xb0] sm:$0xf]
  %v5950 = vld [vmem:[%s13 + $0xb4] sm:$0xf]
  %v5951 = vld [vmem:[%s13 + $0xb8] sm:$0xf]
  %v5952 = vld [vmem:[%s13 + $0xbc] sm:$0xf]
  %v5953 = vld [vmem:[%s13 + $0xc0] sm:$0xf]
  %v5954 = vld [vmem:[%s13 + $0xc4] sm:$0xf]
  %v5955 = vld [vmem:[%s13 + $0xc8] sm:$0xf]
  %v5956 = vld [vmem:[%s13 + $0xcc] sm:$0xf]
  %v5957 = vld [vmem:[%s13 + $0xd0] sm:$0xf]
  %v5958 = vld [vmem:[%s13 + $0xd4] sm:$0xf]
  %v5959 = vld [vmem:[%s13 + $0xd8] sm:$0xf]
  %v5960 = vld [vmem:[%s13 + $0xdc] sm:$0xf]
  %v5961 = vld [vmem:[%s13 + $0xe0] sm:$0xf]
  %v5962 = vld [vmem:[%s13 + $0xe4] sm:$0xf]
  %v5963 = vld [vmem:[%s13 + $0xe8] sm:$0xf]
  %v5964 = vld [vmem:[%s13 + $0xec] sm:$0xf]
  %v5965 = vld [vmem:[%s13 + $0xf0] sm:$0xf]
  %v5966 = vld [vmem:[%s13 + $0xf4] sm:$0xf]
  %v5967 = vld [vmem:[%s13 + $0xf8] sm:$0xf]
  %v5968 = vld [vmem:[%s13 + $0xfc] sm:$0xf]
  %v5969 = vld [vmem:[%s13 + $0x100] sm:$0xf]
  %v5970 = vld [vmem:[%s13 + $0x104] sm:$0xf]
  %v5971 = vld [vmem:[%s13 + $0x108] sm:$0xf]
  %v5972 = vld [vmem:[%s13 + $0x10c] sm:$0xf]
  %v5973 = vld [vmem:[%s13 + $0x110] sm:$0xf]
  %v5974 = vld [vmem:[%s13 + $0x114] sm:$0xf]
  %v5975 = vld [vmem:[%s13 + $0x118] sm:$0xf]
  %v5976 = vld [vmem:[%s13 + $0x11c] sm:$0xf]
  %v5977 = vld [vmem:[%s13 + $0x120] sm:$0xf]
  %v5978 = vld [vmem:[%s13 + $0x124] sm:$0xf]
  %v5979 = vld [vmem:[%s13 + $0x128] sm:$0xf]
  %v5980 = vld [vmem:[%s13 + $0x12c] sm:$0xf]
  %v5981 = vld [vmem:[%s13 + $0x130] sm:$0xf]
  %v5982 = vld [vmem:[%s13 + $0x134] sm:$0xf]
  %v5983 = vld [vmem:[%s13 + $0x138] sm:$0xf]
  %v5984 = vld [vmem:[%s13 + $0x13c] sm:$0xf]
  %v5985 = vld [vmem:[%s13 + $0x140] sm:$0xf]
  %v5986 = vld [vmem:[%s13 + $0x144] sm:$0xf]
  %v5987 = vld [vmem:[%s13 + $0x148] sm:$0xf]
  %v5988 = vld [vmem:[%s13 + $0x14c] sm:$0xf]
  %v5989 = vld [vmem:[%s13 + $0x150] sm:$0xf]
  %v5990 = vld [vmem:[%s13 + $0x154] sm:$0xf]
  %v5991 = vld [vmem:[%s13 + $0x158] sm:$0xf]
  %v5992 = vld [vmem:[%s13 + $0x15c] sm:$0xf]
  %v5993 = vld [vmem:[%s13 + $0x160] sm:$0xf]
  %v5994 = vld [vmem:[%s13 + $0x164] sm:$0xf]
  %v5995 = vld [vmem:[%s13 + $0x168] sm:$0xf]
  %v5996 = vld [vmem:[%s13 + $0x16c] sm:$0xf]
  %v5997 = vld [vmem:[%s13 + $0x170] sm:$0xf]
  %v5998 = vld [vmem:[%s13 + $0x174] sm:$0xf]
  %v5999 = vld [vmem:[%s13 + $0x178] sm:$0xf]
  %v6000 = vld [vmem:[%s13 + $0x17c] sm:$0xf]
  %v6001 = vld [vmem:[%s13 + $0x180] sm:$0xf]
  %v6002 = vld [vmem:[%s13 + $0x184] sm:$0xf]
  %v6003 = vld [vmem:[%s13 + $0x188] sm:$0xf]
  %v6004 = vld [vmem:[%s13 + $0x18c] sm:$0xf]
  %v6005 = vld [vmem:[%s13 + $0x190] sm:$0xf]
  %v6006 = vld [vmem:[%s13 + $0x194] sm:$0xf]
  %v6007 = vld [vmem:[%s13 + $0x198] sm:$0xf]
  %v6008 = vld [vmem:[%s13 + $0x19c] sm:$0xf]
  %v6009 = vld [vmem:[%s13 + $0x1a0] sm:$0xf]
  %v6010 = vld [vmem:[%s13 + $0x1a4] sm:$0xf]
  %v6011 = vld [vmem:[%s13 + $0x1a8] sm:$0xf]
  %v6012 = vld [vmem:[%s13 + $0x1ac] sm:$0xf]
  %v6013 = vld [vmem:[%s13 + $0x1b0] sm:$0xf]
  %v6014 = vld [vmem:[%s13 + $0x1b4] sm:$0xf]
  %v6015 = vld [vmem:[%s13 + $0x1b8] sm:$0xf]
  %v6016 = vld [vmem:[%s13 + $0x1bc] sm:$0xf]
  %v6017 = vld [vmem:[%s13 + $0x1c0] sm:$0xf]
  %v6018 = vld [vmem:[%s13 + $0x1c4] sm:$0xf]
  %v6019 = vld [vmem:[%s13 + $0x1c8] sm:$0xf]
  %v6020 = vld [vmem:[%s13 + $0x1cc] sm:$0xf]
  %v6021 = vld [vmem:[%s13 + $0x1d0] sm:$0xf]
  %v6022 = vld [vmem:[%s13 + $0x1d4] sm:$0xf]
  %v6023 = vld [vmem:[%s13 + $0x1d8] sm:$0xf]
  %v6024 = vld [vmem:[%s13 + $0x1dc] sm:$0xf]
  %v6025 = vld [vmem:[%s13 + $0x1e0] sm:$0xf]
  %v6026 = vld [vmem:[%s13 + $0x1e4] sm:$0xf]
  %v6027 = vld [vmem:[%s13 + $0x1e8] sm:$0xf]
  %v6028 = vld [vmem:[%s13 + $0x1ec] sm:$0xf]
  %v6029 = vld [vmem:[%s13 + $0x1f0] sm:$0xf]
  %v6030 = vld [vmem:[%s13 + $0x1f4] sm:$0xf]
  %v6031 = vld [vmem:[%s13 + $0x1f8] sm:$0xf]
  %v6032 = vld [vmem:[%s13 + $0x1fc] sm:$0xf]
  %v6033 = vld [vmem:[%s14] sm:$0x1]
  %v6035 = vlaneseq
  %v6036 = vshrl.u32 %v6035, 7
  %v6037 = vsub.s32 0, %v6036
  %v6038 = vrot.slane %v6033, %v6037
  %v6168 = vunpack.c.l.b16 %v5905
  %v6169 = vunpack.c.l.b16 %v5906
  %v6170 = vunpack.c.l.b16 %v5907
  %v6171 = vunpack.c.l.b16 %v5908
  %v6172 = vunpack.c.l.b16 %v5909
  %v6173 = vunpack.c.l.b16 %v5910
  %v6174 = vunpack.c.l.b16 %v5911
  %v6175 = vunpack.c.l.b16 %v5912
  %v6176 = vunpack.c.l.b16 %v5913
  %v6177 = vunpack.c.l.b16 %v5914
  %v6178 = vunpack.c.l.b16 %v5915
  %v6179 = vunpack.c.l.b16 %v5916
  %v6180 = vunpack.c.l.b16 %v5917
  %v6181 = vunpack.c.l.b16 %v5918
  %v6182 = vunpack.c.l.b16 %v5919
  %v6183 = vunpack.c.l.b16 %v5920
  %v6184 = vunpack.c.l.b16 %v5921
  %v6185 = vunpack.c.l.b16 %v5922
  %v6186 = vunpack.c.l.b16 %v5923
  %v6187 = vunpack.c.l.b16 %v5924
  %v6188 = vunpack.c.l.b16 %v5925
  %v6189 = vunpack.c.l.b16 %v5926
  %v6190 = vunpack.c.l.b16 %v5927
  %v6191 = vunpack.c.l.b16 %v5928
  %v6192 = vunpack.c.l.b16 %v5929
  %v6193 = vunpack.c.l.b16 %v5930
  %v6194 = vunpack.c.l.b16 %v5931
  %v6195 = vunpack.c.l.b16 %v5932
  %v6196 = vunpack.c.l.b16 %v5933
  %v6197 = vunpack.c.l.b16 %v5934
  %v6198 = vunpack.c.l.b16 %v5935
  %v6199 = vunpack.c.l.b16 %v5936
  %v6200 = vunpack.c.l.b16 %v5937
  %v6201 = vunpack.c.l.b16 %v5938
  %v6202 = vunpack.c.l.b16 %v5939
  %v6203 = vunpack.c.l.b16 %v5940
  %v6204 = vunpack.c.l.b16 %v5941
  %v6205 = vunpack.c.l.b16 %v5942
  %v6206 = vunpack.c.l.b16 %v5943
  %v6207 = vunpack.c.l.b16 %v5944
  %v6208 = vunpack.c.l.b16 %v5945
  %v6209 = vunpack.c.l.b16 %v5946
  %v6210 = vunpack.c.l.b16 %v5947
  %v6211 = vunpack.c.l.b16 %v5948
  %v6212 = vunpack.c.l.b16 %v5949
  %v6213 = vunpack.c.l.b16 %v5950
  %v6214 = vunpack.c.l.b16 %v5951
  %v6215 = vunpack.c.l.b16 %v5952
  %v6216 = vunpack.c.l.b16 %v5953
  %v6217 = vunpack.c.l.b16 %v5954
  %v6218 = vunpack.c.l.b16 %v5955
  %v6219 = vunpack.c.l.b16 %v5956
  %v6220 = vunpack.c.l.b16 %v5957
  %v6221 = vunpack.c.l.b16 %v5958
  %v6222 = vunpack.c.l.b16 %v5959
  %v6223 = vunpack.c.l.b16 %v5960
  %v6224 = vunpack.c.l.b16 %v5961
  %v6225 = vunpack.c.l.b16 %v5962
  %v6226 = vunpack.c.l.b16 %v5963
  %v6227 = vunpack.c.l.b16 %v5964
  %v6228 = vunpack.c.l.b16 %v5965
  %v6229 = vunpack.c.l.b16 %v5966
  %v6230 = vunpack.c.l.b16 %v5967
  %v6231 = vunpack.c.l.b16 %v5968
  %v6232 = vunpack.c.l.b16 %v5969
  %v6233 = vunpack.c.l.b16 %v5970
  %v6234 = vunpack.c.l.b16 %v5971
  %v6235 = vunpack.c.l.b16 %v5972
  %v6236 = vunpack.c.l.b16 %v5973
  %v6237 = vunpack.c.l.b16 %v5974
  %v6238 = vunpack.c.l.b16 %v5975
  %v6239 = vunpack.c.l.b16 %v5976
  %v6240 = vunpack.c.l.b16 %v5977
  %v6241 = vunpack.c.l.b16 %v5978
  %v6242 = vunpack.c.l.b16 %v5979
  %v6243 = vunpack.c.l.b16 %v5980
  %v6244 = vunpack.c.l.b16 %v5981
  %v6245 = vunpack.c.l.b16 %v5982
  %v6246 = vunpack.c.l.b16 %v5983
  %v6247 = vunpack.c.l.b16 %v5984
  %v6248 = vunpack.c.l.b16 %v5985
  %v6249 = vunpack.c.l.b16 %v5986
  %v6250 = vunpack.c.l.b16 %v5987
  %v6251 = vunpack.c.l.b16 %v5988
  %v6252 = vunpack.c.l.b16 %v5989
  %v6253 = vunpack.c.l.b16 %v5990
  %v6254 = vunpack.c.l.b16 %v5991
  %v6255 = vunpack.c.l.b16 %v5992
  %v6256 = vunpack.c.l.b16 %v5993
  %v6257 = vunpack.c.l.b16 %v5994
  %v6258 = vunpack.c.l.b16 %v5995
  %v6259 = vunpack.c.l.b16 %v5996
  %v6260 = vunpack.c.l.b16 %v5997
  %v6261 = vunpack.c.l.b16 %v5998
  %v6262 = vunpack.c.l.b16 %v5999
  %v6263 = vunpack.c.l.b16 %v6000
  %v6264 = vunpack.c.l.b16 %v6001
  %v6265 = vunpack.c.l.b16 %v6002
  %v6266 = vunpack.c.l.b16 %v6003
  %v6267 = vunpack.c.l.b16 %v6004
  %v6268 = vunpack.c.l.b16 %v6005
  %v6269 = vunpack.c.l.b16 %v6006
  %v6270 = vunpack.c.l.b16 %v6007
  %v6271 = vunpack.c.l.b16 %v6008
  %v6272 = vunpack.c.l.b16 %v6009
  %v6273 = vunpack.c.l.b16 %v6010
  %v6274 = vunpack.c.l.b16 %v6011
  %v6275 = vunpack.c.l.b16 %v6012
  %v6276 = vunpack.c.l.b16 %v6013
  %v6277 = vunpack.c.l.b16 %v6014
  %v6278 = vunpack.c.l.b16 %v6015
  %v6279 = vunpack.c.l.b16 %v6016
  %v6280 = vunpack.c.l.b16 %v6017
  %v6281 = vunpack.c.l.b16 %v6018
  %v6282 = vunpack.c.l.b16 %v6019
  %v6283 = vunpack.c.l.b16 %v6020
  %v6284 = vunpack.c.l.b16 %v6021
  %v6285 = vunpack.c.l.b16 %v6022
  %v6286 = vunpack.c.l.b16 %v6023
  %v6287 = vunpack.c.l.b16 %v6024
  %v6288 = vunpack.c.l.b16 %v6025
  %v6289 = vunpack.c.l.b16 %v6026
  %v6290 = vunpack.c.l.b16 %v6027
  %v6291 = vunpack.c.l.b16 %v6028
  %v6292 = vunpack.c.l.b16 %v6029
  %v6293 = vunpack.c.l.b16 %v6030
  %v6294 = vunpack.c.l.b16 %v6031
  %v6295 = vunpack.c.l.b16 %v6032
  %v6296 = vpack.c.b16 %v6169, %v6168
  %v6297 = vpack.c.b16 %v6171, %v6170
  %v6298 = vpack.c.b16 %v6173, %v6172
  %v6299 = vpack.c.b16 %v6175, %v6174
  %v6300 = vpack.c.b16 %v6177, %v6176
  %v6301 = vpack.c.b16 %v6179, %v6178
  %v6302 = vpack.c.b16 %v6181, %v6180
  %v6303 = vpack.c.b16 %v6183, %v6182
  %v6304 = vpack.c.b16 %v6185, %v6184
  %v6305 = vpack.c.b16 %v6187, %v6186
  %v6306 = vpack.c.b16 %v6189, %v6188
  %v6307 = vpack.c.b16 %v6191, %v6190
  %v6308 = vpack.c.b16 %v6193, %v6192
  %v6309 = vpack.c.b16 %v6195, %v6194
  %v6310 = vpack.c.b16 %v6197, %v6196
  %v6311 = vpack.c.b16 %v6199, %v6198
  %v6312 = vpack.c.b16 %v6201, %v6200
  %v6313 = vpack.c.b16 %v6203, %v6202
  %v6314 = vpack.c.b16 %v6205, %v6204
  %v6315 = vpack.c.b16 %v6207, %v6206
  %v6316 = vpack.c.b16 %v6209, %v6208
  %v6317 = vpack.c.b16 %v6211, %v6210
  %v6318 = vpack.c.b16 %v6213, %v6212
  %v6319 = vpack.c.b16 %v6215, %v6214
  %v6320 = vpack.c.b16 %v6217, %v6216
  %v6321 = vpack.c.b16 %v6219, %v6218
  %v6322 = vpack.c.b16 %v6221, %v6220
  %v6323 = vpack.c.b16 %v6223, %v6222
  %v6324 = vpack.c.b16 %v6225, %v6224
  %v6325 = vpack.c.b16 %v6227, %v6226
  %v6326 = vpack.c.b16 %v6229, %v6228
  %v6327 = vpack.c.b16 %v6231, %v6230
  %v6328 = vpack.c.b16 %v6233, %v6232
  %v6329 = vpack.c.b16 %v6235, %v6234
  %v6330 = vpack.c.b16 %v6237, %v6236
  %v6331 = vpack.c.b16 %v6239, %v6238
  %v6332 = vpack.c.b16 %v6241, %v6240
  %v6333 = vpack.c.b16 %v6243, %v6242
  %v6334 = vpack.c.b16 %v6245, %v6244
  %v6335 = vpack.c.b16 %v6247, %v6246
  %v6336 = vpack.c.b16 %v6249, %v6248
  %v6337 = vpack.c.b16 %v6251, %v6250
  %v6338 = vpack.c.b16 %v6253, %v6252
  %v6339 = vpack.c.b16 %v6255, %v6254
  %v6340 = vpack.c.b16 %v6257, %v6256
  %v6341 = vpack.c.b16 %v6259, %v6258
  %v6342 = vpack.c.b16 %v6261, %v6260
  %v6343 = vpack.c.b16 %v6263, %v6262
  %v6344 = vpack.c.b16 %v6265, %v6264
  %v6345 = vpack.c.b16 %v6267, %v6266
  %v6346 = vpack.c.b16 %v6269, %v6268
  %v6347 = vpack.c.b16 %v6271, %v6270
  %v6348 = vpack.c.b16 %v6273, %v6272
  %v6349 = vpack.c.b16 %v6275, %v6274
  %v6350 = vpack.c.b16 %v6277, %v6276
  %v6351 = vpack.c.b16 %v6279, %v6278
  %v6352 = vpack.c.b16 %v6281, %v6280
  %v6353 = vpack.c.b16 %v6283, %v6282
  %v6354 = vpack.c.b16 %v6285, %v6284
  %v6355 = vpack.c.b16 %v6287, %v6286
  %v6356 = vpack.c.b16 %v6289, %v6288
  %v6357 = vpack.c.b16 %v6291, %v6290
  %v6358 = vpack.c.b16 %v6293, %v6292
  %v6359 = vpack.c.b16 %v6295, %v6294
  %6424 = vmatprep.subr.bf16.mxu0 0
  %6425 = vmatpush1.bf16.msra.mxu0 %v6303
  %6426 = vmatprep.subr.bf16.mxu0 0
  %6427 = vmatpush1.bf16.msra.mxu0 %v6302
  %6428 = vmatprep.subr.bf16.mxu0 0
  %6429 = vmatpush1.bf16.msra.mxu0 %v6301
  %6430 = vmatprep.subr.bf16.mxu0 0
  %6431 = vmatpush1.bf16.msra.mxu0 %v6300
  %6432 = vmatprep.subr.bf16.mxu0 0
  %6433 = vmatpush1.bf16.msra.mxu0 %v6299
  %6434 = vmatprep.subr.bf16.mxu0 0
  %6435 = vmatpush1.bf16.msra.mxu0 %v6298
  %6436 = vmatprep.subr.bf16.mxu0 0
  %6437 = vmatpush1.bf16.msra.mxu0 %v6297
  %6438 = vmatprep.subr.bf16.mxu0 0
  %6439 = vmatpush1.bf16.msra.mxu0 %v6296
  %6440 = vmatprep.subr.bf16.mxu0 0
  %6441 = vmatpush2.bf16.msra.mxu0 %v6311
  %6442 = vmatprep.subr.bf16.mxu0 0
  %6443 = vmatpush2.bf16.msra.mxu0 %v6310
  %6444 = vmatprep.subr.bf16.mxu0 0
  %6445 = vmatpush2.bf16.msra.mxu0 %v6309
  %6446 = vmatprep.subr.bf16.mxu0 0
  %6447 = vmatpush2.bf16.msra.mxu0 %v6308
  %6448 = vmatprep.subr.bf16.mxu0 0
  %6449 = vmatpush2.bf16.msra.mxu0 %v6307
  %6450 = vmatprep.subr.bf16.mxu0 0
  %6451 = vmatpush2.bf16.msra.mxu0 %v6306
  %6452 = vmatprep.subr.bf16.mxu0 0
  %6453 = vmatpush2.bf16.msra.mxu0 %v6305
  %6454 = vmatprep.subr.bf16.mxu0 0
  %6455 = vmatpush2.bf16.msra.mxu0 %v6304
  %6456 = vmatprep.mubr.bf16.mxu0 %v5898
  %6457 = vmatmul.mubr.bf16.gmra.mxu0 %v5897
  %v6458 = vpop.f32.mrf.mxu0
  %v6459 = vadd.f32 %v6038, %v6458
  %v6460 = vpop.f32.mrf.mxu0
  %v6461 = vpop.f32.mrf.mxu0
  %v6462 = vpop.f32.mrf.mxu0
  %6463 = vdwg.mxu0
  %6464 = vmatprep.subr.bf16.mxu0 0
  %6465 = vmatpush1.bf16.msra.mxu0 %v6319
  %6466 = vmatprep.subr.bf16.mxu0 0
  %6467 = vmatpush1.bf16.msra.mxu0 %v6318
  %6468 = vmatprep.subr.bf16.mxu0 0
  %6469 = vmatpush1.bf16.msra.mxu0 %v6317
  %6470 = vmatprep.subr.bf16.mxu0 0
  %6471 = vmatpush1.bf16.msra.mxu0 %v6316
  %6472 = vmatprep.subr.bf16.mxu0 0
  %6473 = vmatpush1.bf16.msra.mxu0 %v6315
  %6474 = vmatprep.subr.bf16.mxu0 0
  %6475 = vmatpush1.bf16.msra.mxu0 %v6314
  %6476 = vmatprep.subr.bf16.mxu0 0
  %6477 = vmatpush1.bf16.msra.mxu0 %v6313
  %6478 = vmatprep.subr.bf16.mxu0 0
  %6479 = vmatpush1.bf16.msra.mxu0 %v6312
  %6480 = vmatprep.subr.bf16.mxu0 0
  %6481 = vmatpush2.bf16.msra.mxu0 %v6327
  %6482 = vmatprep.subr.bf16.mxu0 0
  %6483 = vmatpush2.bf16.msra.mxu0 %v6326
  %6484 = vmatprep.subr.bf16.mxu0 0
  %6485 = vmatpush2.bf16.msra.mxu0 %v6325
  %6486 = vmatprep.subr.bf16.mxu0 0
  %6487 = vmatpush2.bf16.msra.mxu0 %v6324
  %6488 = vmatprep.subr.bf16.mxu0 0
  %6489 = vmatpush2.bf16.msra.mxu0 %v6323
  %6490 = vmatprep.subr.bf16.mxu0 0
  %6491 = vmatpush2.bf16.msra.mxu0 %v6322
  %6492 = vmatprep.subr.bf16.mxu0 0
  %6493 = vmatpush2.bf16.msra.mxu0 %v6321
  %6494 = vmatprep.subr.bf16.mxu0 0
  %6495 = vmatpush2.bf16.msra.mxu0 %v6320
  %6496 = vmatprep.mubr.bf16.mxu0 %v5900
  %6497 = vmatmul.mubr.bf16.gmra.mxu0 %v5899
  %v6498 = vpop.f32.mrf.mxu0
  %v6499 = vadd.f32 %v6459, %v6498
  %v6500 = vpop.f32.mrf.mxu0
  %v6501 = vpop.f32.mrf.mxu0
  %v6502 = vpop.f32.mrf.mxu0
  %6503 = vdwg.mxu0
  %6504 = vmatprep.subr.bf16.mxu0 0
  %6505 = vmatpush1.bf16.msra.mxu0 %v6335
  %6506 = vmatprep.subr.bf16.mxu0 0
  %6507 = vmatpush1.bf16.msra.mxu0 %v6334
  %6508 = vmatprep.subr.bf16.mxu0 0
  %6509 = vmatpush1.bf16.msra.mxu0 %v6333
  %6510 = vmatprep.subr.bf16.mxu0 0
  %6511 = vmatpush1.bf16.msra.mxu0 %v6332
  %6512 = vmatprep.subr.bf16.mxu0 0
  %6513 = vmatpush1.bf16.msra.mxu0 %v6331
  %6514 = vmatprep.subr.bf16.mxu0 0
  %6515 = vmatpush1.bf16.msra.mxu0 %v6330
  %6516 = vmatprep.subr.bf16.mxu0 0
  %6517 = vmatpush1.bf16.msra.mxu0 %v6329
  %6518 = vmatprep.subr.bf16.mxu0 0
  %6519 = vmatpush1.bf16.msra.mxu0 %v6328
  %6520 = vmatprep.subr.bf16.mxu0 0
  %6521 = vmatpush2.bf16.msra.mxu0 %v6343
  %6522 = vmatprep.subr.bf16.mxu0 0
  %6523 = vmatpush2.bf16.msra.mxu0 %v6342
  %6524 = vmatprep.subr.bf16.mxu0 0
  %6525 = vmatpush2.bf16.msra.mxu0 %v6341
  %6526 = vmatprep.subr.bf16.mxu0 0
  %6527 = vmatpush2.bf16.msra.mxu0 %v6340
  %6528 = vmatprep.subr.bf16.mxu0 0
  %6529 = vmatpush2.bf16.msra.mxu0 %v6339
  %6530 = vmatprep.subr.bf16.mxu0 0
  %6531 = vmatpush2.bf16.msra.mxu0 %v6338
  %6532 = vmatprep.subr.bf16.mxu0 0
  %6533 = vmatpush2.bf16.msra.mxu0 %v6337
  %6534 = vmatprep.subr.bf16.mxu0 0
  %6535 = vmatpush2.bf16.msra.mxu0 %v6336
  %6536 = vmatprep.mubr.bf16.mxu0 %v5902
  %6537 = vmatmul.mubr.bf16.gmra.mxu0 %v5901
  %v6538 = vpop.f32.mrf.mxu0
  %v6539 = vadd.f32 %v6499, %v6538
  %v6540 = vpop.f32.mrf.mxu0
  %v6541 = vpop.f32.mrf.mxu0
  %v6542 = vpop.f32.mrf.mxu0
  %6543 = vdwg.mxu0
  %6544 = vmatprep.subr.bf16.mxu0 0
  %6545 = vmatpush1.bf16.msra.mxu0 %v6351
  %6546 = vmatprep.subr.bf16.mxu0 0
  %6547 = vmatpush1.bf16.msra.mxu0 %v6350
  %6548 = vmatprep.subr.bf16.mxu0 0
  %6549 = vmatpush1.bf16.msra.mxu0 %v6349
  %6550 = vmatprep.subr.bf16.mxu0 0
  %6551 = vmatpush1.bf16.msra.mxu0 %v6348
  %6552 = vmatprep.subr.bf16.mxu0 0
  %6553 = vmatpush1.bf16.msra.mxu0 %v6347
  %6554 = vmatprep.subr.bf16.mxu0 0
  %6555 = vmatpush1.bf16.msra.mxu0 %v6346
  %6556 = vmatprep.subr.bf16.mxu0 0
  %6557 = vmatpush1.bf16.msra.mxu0 %v6345
  %6558 = vmatprep.subr.bf16.mxu0 0
  %6559 = vmatpush1.bf16.msra.mxu0 %v6344
  %6560 = vmatprep.subr.bf16.mxu0 0
  %6561 = vmatpush2.bf16.msra.mxu0 %v6359
  %6562 = vmatprep.subr.bf16.mxu0 0
  %6563 = vmatpush2.bf16.msra.mxu0 %v6358
  %6564 = vmatprep.subr.bf16.mxu0 0
  %6565 = vmatpush2.bf16.msra.mxu0 %v6357
  %6566 = vmatprep.subr.bf16.mxu0 0
  %6567 = vmatpush2.bf16.msra.mxu0 %v6356
  %6568 = vmatprep.subr.bf16.mxu0 0
  %6569 = vmatpush2.bf16.msra.mxu0 %v6355
  %6570 = vmatprep.subr.bf16.mxu0 0
  %6571 = vmatpush2.bf16.msra.mxu0 %v6354
  %6572 = vmatprep.subr.bf16.mxu0 0
  %6573 = vmatpush2.bf16.msra.mxu0 %v6353
  %6574 = vmatprep.subr.bf16.mxu0 0
  %6575 = vmatpush2.bf16.msra.mxu0 %v6352
  %6576 = vmatprep.mubr.bf16.mxu0 %v5904
  %6577 = vmatmul.mubr.bf16.gmra.mxu0 %v5903
  %v6578 = vpop.f32.mrf.mxu0
  %v6579 = vadd.f32 %v6539, %v6578
  %v6580 = vpop.f32.mrf.mxu0
  %v6581 = vpop.f32.mrf.mxu0
  %v6582 = vpop.f32.mrf.mxu0
  %6583 = vdwg.mxu0
  %6584 = vst [vmem:[%s15] sm:$0x3] %v6579
  // Predicated region
  $region62: #{compute_actor_critic.1} parent=0 // pred_check
    _
  $region63: #{compute_actor_critic.1} parent=0 // pred_check_branch
    %6586 = sbr.rel (0) target = $region65
  $region64: #{compute_actor_critic.1} parent=0 // pred_region
    _
  $region65: #{compute_actor_critic.1} parent=0 // pred_fallthru
    _
  // Predicated region
  $region66: #{compute_actor_critic.1} parent=0 // pred_check
    _
  $region67: #{compute_actor_critic.1} parent=0 // pred_check_branch
    %6588 = sbr.rel (0) target = $region69
  $region68: #{compute_actor_critic.1} parent=0 // pred_region
    _
  $region69: #{compute_actor_critic.1} parent=0 // pred_fallthru
    _

</llo_original>
